<compile_context>
chip_gen: v6e
topology: v6e:2x2x1
jax: 0.10.0
libtpu: 0.0.40
codegen_flags: <defaults>
</compile_context>

<pallas_src>
import functools

import jax
import jax.numpy as jnp
from jax.experimental import pallas as pl
from jax.experimental.pallas import tpu as pltpu


_K_PAD = 128  # class axis padded to one full lane width (MXU / lane-dense)


def _iw_maxsquare_kernel(prob_ref, out_ref, counts_acc, b_acc, *,
                         ratio, ignore_index, inv_denom):
    step = pl.program_id(0)

    @pl.when(step == 0)
    def _init():
        counts_acc[...] = jnp.zeros_like(counts_acc)
        b_acc[...] = jnp.zeros_like(b_acc)

    prob = prob_ref[...].astype(jnp.float32)            # (N, C, T)
    n, c_dim, t = prob.shape

    # ---- max / argmax over channels (static unrolled, first-max wins) ----
    maxpred = prob[:, 0, :]                              # (N, T)
    argpred = jnp.zeros((n, t), jnp.int32)
    for c in range(1, c_dim):
        cur = prob[:, c, :]
        better = cur > maxpred
        argpred = jnp.where(better, jnp.int32(c), argpred)
        maxpred = jnp.where(better, cur, maxpred)

    # faithful to PyTorch: mask compares a probability against ignore_index
    maskf = (maxpred != jnp.float32(ignore_index)).astype(jnp.float32)   # (N, T)

    # ---- one-hot of argmax class, (N, K, T) so T stays on lanes (no relayout) ----
    class_ids = jax.lax.broadcasted_iota(jnp.int32, (1, _K_PAD, 1), 1)
    onehot_t = (argpred[:, None, :] == class_ids).astype(jnp.float32)    # (N, K, T)

    # S[c, t] = sum_n prob[n, c, t]^2 * mask[n, t]
    # (channel-aligned broadcast -- exactly PyTorch's (N,C,H,W)*(N,H,W), N==C)
    s = jnp.sum(prob * prob * maskf[:, None, :], axis=0)                 # (C, T)

    # Single batched MXU contraction over the tile's pixels:
    #   row 0 -> per-class pixel counts, row 1 -> class-bucketed squared sums.
    lhs = jnp.concatenate([maskf[:, None, :], s[:, None, :]], axis=1)    # (N, 2, T)
    res = jnp.einsum('nrt,nkt->nrk', lhs, onehot_t,
                     preferred_element_type=jnp.float32)                 # (N, 2, K)

    counts_acc[...] += res[:, 0, :]
    b_acc[...] += res[:, 1, :]

    # ---- finalize on the last tile ----
    @pl.when(step == pl.num_programs(0) - 1)
    def _finalize():
        counts = counts_acc[...]                                         # (N, K)
        total = jnp.sum(counts, axis=-1, keepdims=True)                  # (N, 1)
        eps = jnp.float32(1e-30)
        r = jnp.float32(ratio)
        h_pow = jnp.where(counts > 0.0,
                          jnp.exp(r * jnp.log(jnp.maximum(counts, eps))),
                          jnp.float32(0.0))
        t_pow = jnp.where(total > 0.0,
                          jnp.exp((jnp.float32(1.0) - r) *
                                  jnp.log(jnp.maximum(total, eps))),
                          jnp.float32(0.0))
        # image-wise class weight: 1 / max(hist^r * hist.sum()^(1-r), 1)
        wvec = jnp.float32(1.0) / jnp.maximum(h_pow * t_pow, jnp.float32(1.0))
        loss = -jnp.sum(wvec * b_acc[...]) * jnp.float32(inv_denom)
        out_ref[...] = jnp.zeros_like(out_ref) + loss


def _pick_hw_tile(hw, max_lanes=1024):
    """Largest lane-aligned tile <= max_lanes that divides H*W (else full)."""
    if hw <= max_lanes:
        return hw
    t = (max_lanes // 128) * 128
    while t >= 128:
        if hw % t == 0:
            return t
        t -= 128
    return hw  # no aligned divisor -> single (untiled) block


def iw_max_square_loss(pred, prob, label=None, *,
                       ignore_index=-1, num_class=19, ratio=0.2,
                       max_lanes=1024):
    del pred  # never used by the PyTorch forward
    if label is not None:
        raise NotImplementedError("only the label=None path is implemented")
    N, C, H, W = prob.shape
    assert N == C, "PyTorch broadcast of (N,C,H,W)*(N,H,W) requires N == C"
    assert C <= num_class and C <= _K_PAD
    hw = H * W
    prob3 = prob.reshape(N, C, hw)          # keep native dtype; cast in-kernel

    tile = _pick_hw_tile(hw, max_lanes)
    grid = (hw // tile,)

    # Rough per-step VMEM budget: double-buffered input + in-kernel temporaries.
    itemsize = jnp.dtype(prob3.dtype).itemsize
    est = (2 * N * C * tile * itemsize      # pipelined input blocks
           + 2 * N * C * tile * 4           # f32 cast + squared temporaries
           + N * tile * _K_PAD * 4          # one-hot
           + 8 * N * tile * 4               # misc per-pixel temps
           + 4 * N * _K_PAD * 4)            # scratch accumulators / partials
    vmem_limit = int(min(max(2 * est, 32 * 1024 * 1024), 60 * 1024 * 1024))

    kernel = functools.partial(_iw_maxsquare_kernel,
                               ratio=float(ratio),
                               ignore_index=float(ignore_index),
                               inv_denom=1.0 / float(N * num_class))
    out = pl.pallas_call(
        kernel,
        out_shape=jax.ShapeDtypeStruct((1, _K_PAD), jnp.float32),
        grid_spec=pltpu.PrefetchScalarGridSpec(
            num_scalar_prefetch=0,
            grid=grid,
            in_specs=[pl.BlockSpec((N, C, tile), lambda i: (0, 0, i))],
            out_specs=pl.BlockSpec((1, _K_PAD), lambda i: (0, 0)),
            scratch_shapes=[pltpu.VMEM((N, _K_PAD), jnp.float32),
                            pltpu.VMEM((N, _K_PAD), jnp.float32)]),
        compiler_params=pltpu.CompilerParams(
            dimension_semantics=("arbitrary",),
            vmem_limit_bytes=vmem_limit),
    )(prob3)
    return out[0, 0]


def iw_max_square_loss_ref(prob, *, ignore_index=-1, num_class=19, ratio=0.2):
    """Pure-JAX reference mirroring the PyTorch forward (label=None)."""
    N, C, H, W = prob.shape
    maxpred = jnp.max(prob, axis=1)
    argpred = jnp.argmax(prob, axis=1).astype(jnp.int32)
    mask_arg = maxpred != ignore_index
    argpred = jnp.where(mask_arg, argpred, jnp.int32(ignore_index))
    onehot = jax.nn.one_hot(argpred, num_class, dtype=jnp.float32)      # -1 -> zeros
    counts = jnp.sum(onehot * mask_arg[..., None].astype(jnp.float32), axis=(1, 2))
    total = jnp.sum(counts, axis=-1, keepdims=True)
    denom = jnp.maximum(jnp.power(counts, ratio) * jnp.power(total, 1.0 - ratio), 1.0)
    wvec = 1.0 / denom                                                  # (N, num_class)
    widx = jnp.where(argpred < 0, num_class - 1, argpred)               # torch idx -1 == last
    weights = wvec[jnp.arange(N)[:, None, None], widx]                  # (N, H, W)
    term = (prob ** 2) * weights                                        # right-aligned broadcast
    mask = jnp.broadcast_to(mask_arg[:, None, :, :], prob.shape)
    return -jnp.sum(term * mask) / (N * num_class)


if __name__ == "__main__":
    key = jax.random.PRNGKey(0)
    k1, k2 = jax.random.split(key)
    N, C, H, W = 4, 4, 64, 64          # N == C (required by the PyTorch broadcast)
    num_class, ratio, ignore_index = 19, 0.2, -1   # module defaults

    pred = jax.random.uniform(k1, (N, C, H, W), dtype=jnp.float32)   # unused
    prob = jax.random.uniform(k2, (N, C, H, W), dtype=jnp.float32)

    loss = iw_max_square_loss(pred, prob, ignore_index=ignore_index,
                              num_class=num_class, ratio=ratio,
                              max_lanes=1024)                 # HW=4096 -> 4 grid steps
    loss = jax.block_until_ready(loss)

    ref = iw_max_square_loss_ref(prob, ignore_index=ignore_index,
                                 num_class=num_class, ratio=ratio)
    rel = abs(float(loss) - float(ref)) / max(1.0, abs(float(ref)))
    assert rel <= 1e-4, (float(loss), float(ref))
    print("KERNEL_OK")
</pallas_src>

<mosaic_0001>
module attributes {stable_mosaic.version = 11 : i64} {
  func.func @_iw_maxsquare_kernel(%arg0: i32, %arg1: memref<4x4x1024xf32, #tpu.memory_space<vmem>>, %arg2: memref<1x128xf32, #tpu.memory_space<vmem>>, %arg3: memref<4x128xf32, #tpu.memory_space<vmem>>, %arg4: memref<4x128xf32, #tpu.memory_space<vmem>>) attributes {dimension_semantics = [#tpu.dimension_semantics<arbitrary>], iteration_bounds = array<i64: 4>, scalar_prefetch = 0 : i64, scratch_operands = 2 : i64, tpu.core_type = #tpu.core_type<tc>, window_params = [{transform_indices = @transform_0, window_bounds = array<i64: 4, 4, 1024>}, {pipeline_mode = #tpu.pipeline_mode<synchronous>, transform_indices = @transform_1, window_bounds = array<i64: 1, 128>}]} {
    %c0_i32 = arith.constant 0 : i32
    %0 = arith.cmpi eq, %arg0, %c0_i32 : i32
    %1 = arith.extui %0 : i1 to i32
    %c0_i32_0 = arith.constant 0 : i32
    %2 = arith.cmpi ne, %1, %c0_i32_0 : i32
    scf.if %2 {
      %cst_16 = arith.constant 0.000000e+00 : f32
      %58 = vector.broadcast %cst_16 : f32 to vector<4x128xf32>
      %c0_17 = arith.constant 0 : index
      %c0_18 = arith.constant 0 : index
      %59 = vector.load %arg3[%c0_17, %c0_18] : memref<4x128xf32, #tpu.memory_space<vmem>>, vector<4x128xf32>
      tpu.vector_store %arg3[%c0_17, %c0_18], %58 {strides = array<i32>} : memref<4x128xf32, #tpu.memory_space<vmem>>, vector<4x128xf32>,
      %cst_19 = arith.constant 0.000000e+00 : f32
      %60 = vector.broadcast %cst_19 : f32 to vector<4x128xf32>
      %c0_20 = arith.constant 0 : index
      %c0_21 = arith.constant 0 : index
      %61 = vector.load %arg4[%c0_20, %c0_21] : memref<4x128xf32, #tpu.memory_space<vmem>>, vector<4x128xf32>
      tpu.vector_store %arg4[%c0_20, %c0_21], %60 {strides = array<i32>} : memref<4x128xf32, #tpu.memory_space<vmem>>, vector<4x128xf32>,
    } else {
    }
    %c0 = arith.constant 0 : index
    %c0_1 = arith.constant 0 : index
    %c0_2 = arith.constant 0 : index
    %3 = vector.load %arg1[%c0, %c0_1, %c0_2] : memref<4x4x1024xf32, #tpu.memory_space<vmem>>, vector<4x4x1024xf32>
    %4 = vector.extract_strided_slice %3 {offsets = [0, 0, 0], sizes = [4, 1, 1024], strides = [1, 1, 1]} : vector<4x4x1024xf32> to vector<4x1x1024xf32>
    %5 = vector.shape_cast %4 : vector<4x1x1024xf32> to vector<4x1024xf32>
    %c0_i32_3 = arith.constant 0 : i32
    %6 = vector.broadcast %c0_i32_3 : i32 to vector<4x1024xi32>
    %7 = vector.extract_strided_slice %3 {offsets = [0, 1, 0], sizes = [4, 1, 1024], strides = [1, 1, 1]} : vector<4x4x1024xf32> to vector<4x1x1024xf32>
    %8 = vector.shape_cast %7 : vector<4x1x1024xf32> to vector<4x1024xf32>
    %9 = arith.cmpf ogt, %8, %5 : vector<4x1024xf32>
    %c1_i32 = arith.constant 1 : i32
    %10 = vector.broadcast %c1_i32 : i32 to vector<4x1024xi32>
    %11 = arith.select %9, %10, %6 : vector<4x1024xi1>, vector<4x1024xi32>
    %12 = arith.select %9, %8, %5 : vector<4x1024xi1>, vector<4x1024xf32>
    %13 = vector.extract_strided_slice %3 {offsets = [0, 2, 0], sizes = [4, 1, 1024], strides = [1, 1, 1]} : vector<4x4x1024xf32> to vector<4x1x1024xf32>
    %14 = vector.shape_cast %13 : vector<4x1x1024xf32> to vector<4x1024xf32>
    %15 = arith.cmpf ogt, %14, %12 : vector<4x1024xf32>
    %c2_i32 = arith.constant 2 : i32
    %16 = vector.broadcast %c2_i32 : i32 to vector<4x1024xi32>
    %17 = arith.select %15, %16, %11 : vector<4x1024xi1>, vector<4x1024xi32>
    %18 = arith.select %15, %14, %12 : vector<4x1024xi1>, vector<4x1024xf32>
    %19 = vector.extract_strided_slice %3 {offsets = [0, 3, 0], sizes = [4, 1, 1024], strides = [1, 1, 1]} : vector<4x4x1024xf32> to vector<4x1x1024xf32>
    %20 = vector.shape_cast %19 : vector<4x1x1024xf32> to vector<4x1024xf32>
    %21 = arith.cmpf ogt, %20, %18 : vector<4x1024xf32>
    %c3_i32 = arith.constant 3 : i32
    %22 = vector.broadcast %c3_i32 : i32 to vector<4x1024xi32>
    %23 = arith.select %21, %22, %17 : vector<4x1024xi1>, vector<4x1024xi32>
    %24 = arith.select %21, %20, %18 : vector<4x1024xi1>, vector<4x1024xf32>
    %cst = arith.constant -1.000000e+00 : f32
    %25 = vector.broadcast %cst : f32 to vector<4x1024xf32>
    %26 = arith.cmpf one, %24, %25 : vector<4x1024xf32>
    %27 = arith.extui %26 : vector<4x1024xi1> to vector<4x1024xi32>
    %28 = arith.sitofp %27 : vector<4x1024xi32> to vector<4x1024xf32>
    %29 = tpu.iota {dimensions = array<i32: 1>} : vector<1x128x1xi32>
    %30 = vector.shape_cast %23 : vector<4x1024xi32> to vector<4x1x1024xi32>
    %31 = vector.broadcast %30 : vector<4x1x1024xi32> to vector<4x128x1024xi32>
    %32 = vector.broadcast %29 : vector<1x128x1xi32> to vector<4x128x1024xi32>
    %33 = arith.cmpi eq, %31, %32 : vector<4x128x1024xi32>
    %34 = arith.extui %33 : vector<4x128x1024xi1> to vector<4x128x1024xi32>
    %35 = arith.sitofp %34 : vector<4x128x1024xi32> to vector<4x128x1024xf32>
    %36 = arith.mulf %3, %3 : vector<4x4x1024xf32>
    %37 = vector.shape_cast %28 : vector<4x1024xf32> to vector<4x1x1024xf32>
    %38 = vector.broadcast %37 : vector<4x1x1024xf32> to vector<4x4x1024xf32>
    %39 = arith.mulf %36, %38 : vector<4x4x1024xf32>
    %cst_4 = arith.constant dense<0.000000e+00> : vector<4x1024xf32>
    %40 = vector.multi_reduction <add>, %39, %cst_4 [0] : vector<4x4x1024xf32> to vector<4x1024xf32>
    %41 = vector.shape_cast %28 : vector<4x1024xf32> to vector<4x1x1024xf32>
    %42 = vector.shape_cast %40 : vector<4x1024xf32> to vector<4x1x1024xf32>
    %43 = tpu.concatenate %41, %42 in 1 : vector<4x1x1024xf32>, vector<4x1x1024xf32> -> vector<4x2x1024xf32>
    "tpu.trace_start"() <{level = 10 : i32, message = "nrt,nkt->nrk"}> : () -> ()
    %cst_5 = arith.constant dense<0.000000e+00> : vector<4x2x128xf32>
    %44 = tpu.matmul %43, %35, %cst_5 {dimension_numbers = #tpu.dot_dimension_numbers<[2], [2], [1], [1], [0, 0, 0, 1, 1, 1], [0], [0]>} : vector<4x2x1024xf32>, vector<4x128x1024xf32>, vector<4x2x128xf32> -> vector<4x2x128xf32>
    "tpu.trace_stop"() : () -> ()
    %c0_6 = arith.constant 0 : index
    %c0_7 = arith.constant 0 : index
    %45 = vector.load %arg3[%c0_6, %c0_7] : memref<4x128xf32, #tpu.memory_space<vmem>>, vector<4x128xf32>
    %46 = vector.extract_strided_slice %44 {offsets = [0, 0, 0], sizes = [4, 1, 128], strides = [1, 1, 1]} : vector<4x2x128xf32> to vector<4x1x128xf32>
    %47 = vector.shape_cast %46 : vector<4x1x128xf32> to vector<4x128xf32>
    %48 = arith.addf %45, %47 : vector<4x128xf32>
    %c0_8 = arith.constant 0 : index
    %c0_9 = arith.constant 0 : index
    %49 = vector.load %arg3[%c0_8, %c0_9] : memref<4x128xf32, #tpu.memory_space<vmem>>, vector<4x128xf32>
    tpu.vector_store %arg3[%c0_8, %c0_9], %48 {strides = array<i32>} : memref<4x128xf32, #tpu.memory_space<vmem>>, vector<4x128xf32>,
    %c0_10 = arith.constant 0 : index
    %c0_11 = arith.constant 0 : index
    %50 = vector.load %arg4[%c0_10, %c0_11] : memref<4x128xf32, #tpu.memory_space<vmem>>, vector<4x128xf32>
    %51 = vector.extract_strided_slice %44 {offsets = [0, 1, 0], sizes = [4, 1, 128], strides = [1, 1, 1]} : vector<4x2x128xf32> to vector<4x1x128xf32>
    %52 = vector.shape_cast %51 : vector<4x1x128xf32> to vector<4x128xf32>
    %53 = arith.addf %50, %52 : vector<4x128xf32>
    %c0_12 = arith.constant 0 : index
    %c0_13 = arith.constant 0 : index
    %54 = vector.load %arg4[%c0_12, %c0_13] : memref<4x128xf32, #tpu.memory_space<vmem>>, vector<4x128xf32>
    tpu.vector_store %arg4[%c0_12, %c0_13], %53 {strides = array<i32>} : memref<4x128xf32, #tpu.memory_space<vmem>>, vector<4x128xf32>,
    %c3_i32_14 = arith.constant 3 : i32
    %55 = arith.cmpi eq, %arg0, %c3_i32_14 : i32
    %56 = arith.extui %55 : i1 to i32
    %c0_i32_15 = arith.constant 0 : i32
    %57 = arith.cmpi ne, %56, %c0_i32_15 : i32
    scf.if %57 {
      %c0_16 = arith.constant 0 : index
      %c0_17 = arith.constant 0 : index
      %58 = vector.load %arg3[%c0_16, %c0_17] : memref<4x128xf32, #tpu.memory_space<vmem>>, vector<4x128xf32>
      %cst_18 = arith.constant dense<0.000000e+00> : vector<4xf32>
      %59 = vector.multi_reduction <add>, %58, %cst_18 [1] : vector<4x128xf32> to vector<4xf32>
      %60 = vector.shape_cast %59 : vector<4xf32> to vector<4x1xf32>
      %cst_19 = arith.constant 0.000000e+00 : f32
      %61 = vector.broadcast %cst_19 : f32 to vector<4x128xf32>
      %62 = arith.cmpf ogt, %58, %61 : vector<4x128xf32>
      %cst_20 = arith.constant 1.000000e-30 : f32
      %63 = vector.broadcast %cst_20 : f32 to vector<4x128xf32>
      %64 = arith.maximumf %58, %63 : vector<4x128xf32>
      %65 = math.log %64 : vector<4x128xf32>
      %cst_21 = arith.constant 2.000000e-01 : f32
      %66 = vector.broadcast %cst_21 : f32 to vector<4x128xf32>
      %67 = arith.mulf %66, %65 : vector<4x128xf32>
      %68 = math.exp %67 : vector<4x128xf32>
      %cst_22 = arith.constant 0.000000e+00 : f32
      %69 = vector.broadcast %cst_22 : f32 to vector<4x128xf32>
      %70 = arith.select %62, %68, %69 : vector<4x128xi1>, vector<4x128xf32>
      %cst_23 = arith.constant 0.000000e+00 : f32
      %71 = vector.broadcast %cst_23 : f32 to vector<4x1xf32>
      %72 = arith.cmpf ogt, %60, %71 : vector<4x1xf32>
      %cst_24 = arith.constant 1.000000e+00 : f32
      %cst_25 = arith.constant 2.000000e-01 : f32
      %73 = arith.subf %cst_24, %cst_25 : f32
      %cst_26 = arith.constant 1.000000e-30 : f32
      %74 = vector.broadcast %cst_26 : f32 to vector<4x1xf32>
      %75 = arith.maximumf %60, %74 : vector<4x1xf32>
      %76 = math.log %75 : vector<4x1xf32>
      %77 = vector.broadcast %73 : f32 to vector<4x1xf32>
      %78 = arith.mulf %77, %76 : vector<4x1xf32>
      %79 = math.exp %78 : vector<4x1xf32>
      %cst_27 = arith.constant 0.000000e+00 : f32
      %80 = vector.broadcast %cst_27 : f32 to vector<4x1xf32>
      %81 = arith.select %72, %79, %80 : vector<4x1xi1>, vector<4x1xf32>
      %82 = vector.broadcast %81 : vector<4x1xf32> to vector<4x128xf32>
      %83 = arith.mulf %70, %82 : vector<4x128xf32>
      %cst_28 = arith.constant 1.000000e+00 : f32
      %84 = vector.broadcast %cst_28 : f32 to vector<4x128xf32>
      %85 = arith.maximumf %83, %84 : vector<4x128xf32>
      %cst_29 = arith.constant 1.000000e+00 : f32
      %86 = vector.broadcast %cst_29 : f32 to vector<4x128xf32>
      %87 = arith.divf %86, %85 : vector<4x128xf32>
      %c0_30 = arith.constant 0 : index
      %c0_31 = arith.constant 0 : index
      %88 = vector.load %arg4[%c0_30, %c0_31] : memref<4x128xf32, #tpu.memory_space<vmem>>, vector<4x128xf32>
      %89 = arith.mulf %87, %88 : vector<4x128xf32>
      %90 = vector.shape_cast %89 : vector<4x128xf32> to vector<1x4x128xf32>
      %cst_32 = arith.constant dense<0.000000e+00> : vector<1xf32>
      %91 = vector.multi_reduction <add>, %90, %cst_32 [1, 2] : vector<1x4x128xf32> to vector<1xf32>
      %92 = vector.shape_cast %91 : vector<1xf32> to vector<1x1x1xf32>
      %93 = vector.extract %92[0, 0, 0] : f32 from vector<1x1x1xf32>
      %cst_33 = arith.constant 0.000000e+00 : f32
      %94 = arith.subf %cst_33, %93 : f32
      %cst_34 = arith.constant 0.0131578948 : f32
      %95 = arith.mulf %94, %cst_34 : f32
      %cst_35 = arith.constant 0.000000e+00 : f32
      %96 = vector.broadcast %cst_35 : f32 to vector<1x128xf32>
      %97 = vector.broadcast %95 : f32 to vector<1x128xf32>
      %98 = arith.addf %96, %97 : vector<1x128xf32>
      %c0_36 = arith.constant 0 : index
      %c0_37 = arith.constant 0 : index
      %99 = vector.load %arg2[%c0_36, %c0_37] : memref<1x128xf32, #tpu.memory_space<vmem>>, vector<1x128xf32>
      tpu.vector_store %arg2[%c0_36, %c0_37], %98 {strides = array<i32>} : memref<1x128xf32, #tpu.memory_space<vmem>>, vector<1x128xf32>,
    } else {
    }
    return
  }
  func.func @transform_0(%arg0: i32) -> (i32, i32, i32) {
    %c0_i32 = arith.constant 0 : i32
    %c0_i32_0 = arith.constant 0 : i32
    %c0_i32_1 = arith.constant 0 : i32
    return %c0_i32, %c0_i32_0, %arg0 : i32, i32, i32
  }
  func.func @transform_1(%arg0: i32) -> (i32, i32) {
    %c0_i32 = arith.constant 0 : i32
    %c0_i32_0 = arith.constant 0 : i32
    %c0_i32_1 = arith.constant 0 : i32
    return %c0_i32, %c0_i32_0 : i32, i32
  }
}

</mosaic_0001>

<llo_original>
// kernel: tpu_custom_call.1
$region0: #{tpu_custom_call.1}
  #allocation0 [shape = 'u32[]', space=smem, size = 0x4, offset = 0x4, fixed_abs, tag = 'smem constant byte address 0x4 - core index']
  #allocation1 [shape = 'u32[144,128]{1,0:T(1,128)}', space=vmem, size = 0x12000, scoped, tag = 'internal scratch']
  #allocation2 [shape = 'f32[4,128]{1,0:T(4,128)}', space=vmem, size = 0x800, scoped, tag = 'scratch operand']
  #allocation3 [shape = 'f32[4,128]{1,0:T(4,128)}', space=vmem, size = 0x800, scoped, tag = 'scratch operand']
  %s0 = inlined_call_operand.hbm [shape: f32[4,4,4096], index: 0, kind: input, shape index: {}]
  %s1 = inlined_call_operand.hbm [shape: f32[1,128], index: 1, kind: output, shape index: {}]
  %s2 = sld [smem:[#allocation0]]
  $region49: #{tpu_custom_call.1} parent=0
    _
  %s4 = ssub.s32 1, %s2
  %s5 = scalar_select 0, %s4, %s2
  $region1: #{tpu_custom_call.1} parent=0
    #allocation4 [shape = 'u8[131072]{0}', space=vmem, size = 0x20000, scoped, tag = 'input window, operand 0']
    #allocation5 [shape = 's32[2]{0}', space=sflag, size = 0x8, scoped, tag = 'scoped memory for tpu_custom_call.1']
    #allocation6 [shape = 's32[2]{0}', space=sflag, size = 0x8, scoped, tag = 'scoped memory for tpu_custom_call.1']
    #allocation7 [shape = 'u8[512]{0}', space=vmem, size = 0x400, scoped, tag = 'output window, operand 0, single buffered']
    %6 = vsyncpa [#allocation5], 0
    %s7 = scalar_lea.sflag [#allocation5], 1
    %8 = vsyncpa %s7, 0
    %9 = vsyncpa [#allocation6], 0
    loop: start=0, step=1, limit=6
    $region2: #{tpu_custom_call.1} parent=1 // loop_pre_header
      _
    $region3: #{tpu_custom_call.1} parent=1 // loop_header
      %s11 = sphi 0, %s15
      %p12 = scmp.ge.s32.totalorder %s11, 6
      %s21 = sphi 0, %s23
      %s24 = sphi 0, %s21
      %s25 = sphi 0, %s24
      %s41 = sphi 0, %s25
      %s45 = sphi 0, %s45
      %s47 = sphi 0, %s45
      %s48 = sphi 0, %s47
      %s62 = sphi 0, %s48
    $region4: #{tpu_custom_call.1} parent=1 // loop_header_branch
      %14 = sbr.rel (%p12) target = $region8
    $region5: #{tpu_custom_call.1} parent=1 // loop_body
      %s16 = ssub.s32 %s11, 1
      %s17 = ssub.s32 %s11, 2
      %s18 = sadd.s32 %s11, 1
      %s19 = ssub.s32 %s11, %s18
      %p20 = scmp.eq.s32.totalorder %s19, 0
      %s22 = sadd.s32 %s21, 1
      %s23 = scalar_select %p20, %s21, %s22
      %p26 = pneg %p20
      %p27 = scmp.eq.s32.totalorder %s11, 3
      %p28 = por %p26, %p27
      %p29 = scmp.ne.s32.totalorder %s21, %s24
      %p30 = scmp.eq.s32.totalorder %s11, 0
      %p31 = por %p29, %p30
      %p32 = scmp.ne.s32.totalorder %s21, %s24
      %p33 = scmp.eq.s32.totalorder %s16, 3
      %p34 = por %p32, %p33
      %p35 = scmp.ne.s32.totalorder %s24, %s25
      %p36 = scmp.eq.s32.totalorder %s16, 0
      %p37 = por %p35, %p36
      %p38 = scmp.ne.s32.totalorder %s24, %s25
      %p39 = scmp.eq.s32.totalorder %s17, 3
      %p40 = por %p38, %p39
      %p42 = scmp.ne.s32.totalorder %s25, %s41
      %p43 = scmp.eq.s32.totalorder %s17, 0
      %p44 = por %p42, %p43
      %s46 = sadd.s32 %s45, 1
      %p49 = scmp.eq.s32.totalorder %s11, 3
      %p50 = scmp.ne.s32.totalorder %s45, %s47
      %p51 = scmp.eq.s32.totalorder %s11, 0
      %p52 = por %p50, %p51
      %p53 = scmp.ne.s32.totalorder %s45, %s47
      %p54 = scmp.eq.s32.totalorder %s16, 3
      %p55 = por %p53, %p54
      %p56 = scmp.ne.s32.totalorder %s47, %s48
      %p57 = scmp.eq.s32.totalorder %s16, 0
      %p58 = por %p56, %p57
      %p59 = scmp.ne.s32.totalorder %s47, %s48
      %p60 = scmp.eq.s32.totalorder %s17, 3
      %p61 = por %p59, %p60
      %p63 = scmp.ne.s32.totalorder %s48, %s62
      %p64 = scmp.eq.s32.totalorder %s17, 0
      %p65 = por %p63, %p64
      %p66 = scmp.le.s32.totalorder 1, %s11
      %p67 = scmp.lt.s32.totalorder %s11, 5
      %p68 = pnand %p66, %p67
      %p69 = pneg %p68
      // Predicated region
      $region9: #{tpu_custom_call.1} parent=5 // pred_check
        _
      $region10: #{tpu_custom_call.1} parent=5 // pred_check_branch
        %71 = sbr.rel (%p68) target = $region12
      $region11: #{tpu_custom_call.1} parent=5 // pred_region
        %s72 = ssub.s32 %s11, 1
      $region12: #{tpu_custom_call.1} parent=5 // pred_fallthru
        _
      %p73 = scmp.lt.s32.totalorder %s11, 4
      // Predicated region
      $region13: #{tpu_custom_call.1} parent=5 // pred_check
        %p74 = pneg %p73
      $region14: #{tpu_custom_call.1} parent=5 // pred_check_branch
        %76 = sbr.rel (%p74) target = $region16
      $region15: #{tpu_custom_call.1} parent=5 // pred_region
        // Predicated region
        $region17: #{tpu_custom_call.1} parent=15 // pred_check
          %p77 = pneg %p31
        $region18: #{tpu_custom_call.1} parent=15 // pred_check_branch
          %79 = sbr.rel (%p77) target = $region20
        $region19: #{tpu_custom_call.1} parent=15 // pred_region
          %s80 = sand.u32 %s21, 1
          %s81 = scalar_lea.sflag [#allocation5], %s80
          %s82 = sand.u32 %s21, 1
          %s83 = smul.addr %s82, 128
          %s84 = scalar_lea.vmem [#allocation4], %s83
          %s85 = smul.u32 8, %s11
          %s87 = ssub.s32 2048, 2048
          %88 = vsyncadd %s81, %s87
          %s89 = smul.addr %s85, 64
          %s90 = scalar_lea.hbm %s0, %s89
          %s91 = sshll.u32 %s84, 4
          %s92 = int_to_ptr.vmem [resolvable:$true] %s91
          %97 = dma.hbm_to_vmem [thread:$0]  %s90, 2048, %s92, %s81, 2048, 512, 32
        $region20: #{tpu_custom_call.1} parent=15 // pred_fallthru
          _
      $region16: #{tpu_custom_call.1} parent=5 // pred_fallthru
        _
      %p98 = scmp.le.s32.totalorder 1, %s11
      %p99 = scmp.lt.s32.totalorder %s11, 5
      %p100 = pnand %p98, %p99
      %p101 = pneg %p100
      // Predicated region
      $region21: #{tpu_custom_call.1} parent=5 // pred_check
        _
      $region22: #{tpu_custom_call.1} parent=5 // pred_check_branch
        %103 = sbr.rel (%p100) target = $region24
      $region23: #{tpu_custom_call.1} parent=5 // pred_region
        %s104 = ssub.s32 %s11, 1
        %s105 = sand.u32 %s24, 1
        %s106 = scalar_lea.sflag [#allocation5], %s105
        %s107 = sand.u32 %s24, 1
        %s108 = smul.addr %s107, 128
        %s109 = scalar_lea.vmem [#allocation4], %s108
        // Predicated region
        $region25: #{tpu_custom_call.1} parent=23 // pred_check
          %p110 = pneg %p37
        $region26: #{tpu_custom_call.1} parent=23 // pred_check_branch
          %112 = sbr.rel (%p110) target = $region28
        $region27: #{tpu_custom_call.1} parent=23 // pred_region
          %113 = dma.done %s106, 2048
        $region28: #{tpu_custom_call.1} parent=23 // pred_fallthru
          _
        %s114 = sand.u32 %s24, 1
        %s115 = scalar_lea.sflag [#allocation5], %s114
        %s116 = sand.u32 %s24, 1
        %s117 = smul.addr %s116, 128
        %s118 = scalar_lea.vmem [#allocation4], %s117
        %p119 = pneg %p37
        %p120 = pneg %p34
        %p121 = pneg %p58
        %p122 = pneg %p55
        %s123 = smul.u32 8, %s16
        %p124 = scmp.eq.s32.totalorder %s16, 0
        // Predicated region
        $region29: #{tpu_custom_call.1} parent=23 // pred_check
          %p125 = pneg %p124
        $region30: #{tpu_custom_call.1} parent=23 // pred_check_branch
          %127 = sbr.rel (%p125) target = $region32
        $region31: #{tpu_custom_call.1} parent=23 // pred_region
          %128 = vst [vmem:[#allocation2] sm:$0xf] 0.0
          %129 = vst [vmem:[#allocation3] sm:$0xf] 0.0
        $region32: #{tpu_custom_call.1} parent=23 // pred_fallthru
          _
        %v130 = vld [vmem:[%s109] sm:$0xff]
        %v131 = vld [vmem:[%s109 + $0x8] sm:$0xff]
        %v132 = vld [vmem:[%s109 + $0x10] sm:$0xff]
        %v133 = vld [vmem:[%s109 + $0x18] sm:$0xff]
        %v134 = vld [vmem:[%s109 + $0x20] sm:$0xff]
        %v135 = vld [vmem:[%s109 + $0x28] sm:$0xff]
        %v136 = vld [vmem:[%s109 + $0x30] sm:$0xff]
        %v137 = vld [vmem:[%s109 + $0x38] sm:$0xff]
        %v138 = vld [vmem:[%s109 + $0x40] sm:$0xff]
        %v139 = vld [vmem:[%s109 + $0x48] sm:$0xff]
        %v140 = vld [vmem:[%s109 + $0x50] sm:$0xff]
        %v141 = vld [vmem:[%s109 + $0x58] sm:$0xff]
        %v142 = vld [vmem:[%s109 + $0x60] sm:$0xff]
        %v143 = vld [vmem:[%s109 + $0x68] sm:$0xff]
        %v144 = vld [vmem:[%s109 + $0x70] sm:$0xff]
        %v145 = vld [vmem:[%s109 + $0x78] sm:$0xff]
        %v162 = vrot.slane %v130, 7
        %v163 = vrot.slane %v131, 7
        %v164 = vrot.slane %v132, 7
        %v165 = vrot.slane %v133, 7
        %v166 = vrot.slane %v134, 7
        %v167 = vrot.slane %v135, 7
        %v168 = vrot.slane %v136, 7
        %v169 = vrot.slane %v137, 7
        %v170 = vrot.slane %v138, 7
        %v171 = vrot.slane %v139, 7
        %v172 = vrot.slane %v140, 7
        %v173 = vrot.slane %v141, 7
        %v174 = vrot.slane %v142, 7
        %v175 = vrot.slane %v143, 7
        %v176 = vrot.slane %v144, 7
        %v177 = vrot.slane %v145, 7
        %vm194 = vcmp.gt.f32.partialorder %v130, %v162
        %vm195 = vcmp.gt.f32.partialorder %v131, %v163
        %vm196 = vcmp.gt.f32.partialorder %v132, %v164
        %vm197 = vcmp.gt.f32.partialorder %v133, %v165
        %vm198 = vcmp.gt.f32.partialorder %v134, %v166
        %vm199 = vcmp.gt.f32.partialorder %v135, %v167
        %vm200 = vcmp.gt.f32.partialorder %v136, %v168
        %vm201 = vcmp.gt.f32.partialorder %v137, %v169
        %vm202 = vcmp.gt.f32.partialorder %v138, %v170
        %vm203 = vcmp.gt.f32.partialorder %v139, %v171
        %vm204 = vcmp.gt.f32.partialorder %v140, %v172
        %vm205 = vcmp.gt.f32.partialorder %v141, %v173
        %vm206 = vcmp.gt.f32.partialorder %v142, %v174
        %vm207 = vcmp.gt.f32.partialorder %v143, %v175
        %vm208 = vcmp.gt.f32.partialorder %v144, %v176
        %vm209 = vcmp.gt.f32.partialorder %v145, %v177
        %v210 = vsel %vm194, 1, 0
        %v211 = vsel %vm195, 1, 0
        %v212 = vsel %vm196, 1, 0
        %v213 = vsel %vm197, 1, 0
        %v214 = vsel %vm198, 1, 0
        %v215 = vsel %vm199, 1, 0
        %v216 = vsel %vm200, 1, 0
        %v217 = vsel %vm201, 1, 0
        %v218 = vsel %vm202, 1, 0
        %v219 = vsel %vm203, 1, 0
        %v220 = vsel %vm204, 1, 0
        %v221 = vsel %vm205, 1, 0
        %v222 = vsel %vm206, 1, 0
        %v223 = vsel %vm207, 1, 0
        %v224 = vsel %vm208, 1, 0
        %v225 = vsel %vm209, 1, 0
        %v226 = vsel %vm194, %v130, %v162
        %v227 = vsel %vm195, %v131, %v163
        %v228 = vsel %vm196, %v132, %v164
        %v229 = vsel %vm197, %v133, %v165
        %v230 = vsel %vm198, %v134, %v166
        %v231 = vsel %vm199, %v135, %v167
        %v232 = vsel %vm200, %v136, %v168
        %v233 = vsel %vm201, %v137, %v169
        %v234 = vsel %vm202, %v138, %v170
        %v235 = vsel %vm203, %v139, %v171
        %v236 = vsel %vm204, %v140, %v172
        %v237 = vsel %vm205, %v141, %v173
        %v238 = vsel %vm206, %v142, %v174
        %v239 = vsel %vm207, %v143, %v175
        %v240 = vsel %vm208, %v144, %v176
        %v241 = vsel %vm209, %v145, %v177
        %v258 = vrot.slane %v226, 7
        %v259 = vrot.slane %v227, 7
        %v260 = vrot.slane %v228, 7
        %v261 = vrot.slane %v229, 7
        %v262 = vrot.slane %v230, 7
        %v263 = vrot.slane %v231, 7
        %v264 = vrot.slane %v232, 7
        %v265 = vrot.slane %v233, 7
        %v266 = vrot.slane %v234, 7
        %v267 = vrot.slane %v235, 7
        %v268 = vrot.slane %v236, 7
        %v269 = vrot.slane %v237, 7
        %v270 = vrot.slane %v238, 7
        %v271 = vrot.slane %v239, 7
        %v272 = vrot.slane %v240, 7
        %v273 = vrot.slane %v241, 7
        %vm290 = vcmp.gt.f32.partialorder %v130, %v258
        %vm291 = vcmp.gt.f32.partialorder %v131, %v259
        %vm292 = vcmp.gt.f32.partialorder %v132, %v260
        %vm293 = vcmp.gt.f32.partialorder %v133, %v261
        %vm294 = vcmp.gt.f32.partialorder %v134, %v262
        %vm295 = vcmp.gt.f32.partialorder %v135, %v263
        %vm296 = vcmp.gt.f32.partialorder %v136, %v264
        %vm297 = vcmp.gt.f32.partialorder %v137, %v265
        %vm298 = vcmp.gt.f32.partialorder %v138, %v266
        %vm299 = vcmp.gt.f32.partialorder %v139, %v267
        %vm300 = vcmp.gt.f32.partialorder %v140, %v268
        %vm301 = vcmp.gt.f32.partialorder %v141, %v269
        %vm302 = vcmp.gt.f32.partialorder %v142, %v270
        %vm303 = vcmp.gt.f32.partialorder %v143, %v271
        %vm304 = vcmp.gt.f32.partialorder %v144, %v272
        %vm305 = vcmp.gt.f32.partialorder %v145, %v273
        %v306 = vrot.slane %v210, 7
        %v307 = vrot.slane %v211, 7
        %v308 = vrot.slane %v212, 7
        %v309 = vrot.slane %v213, 7
        %v310 = vrot.slane %v214, 7
        %v311 = vrot.slane %v215, 7
        %v312 = vrot.slane %v216, 7
        %v313 = vrot.slane %v217, 7
        %v314 = vrot.slane %v218, 7
        %v315 = vrot.slane %v219, 7
        %v316 = vrot.slane %v220, 7
        %v317 = vrot.slane %v221, 7
        %v318 = vrot.slane %v222, 7
        %v319 = vrot.slane %v223, 7
        %v320 = vrot.slane %v224, 7
        %v321 = vrot.slane %v225, 7
        %v322 = vsel %vm290, 2, %v306
        %v323 = vsel %vm291, 2, %v307
        %v324 = vsel %vm292, 2, %v308
        %v325 = vsel %vm293, 2, %v309
        %v326 = vsel %vm294, 2, %v310
        %v327 = vsel %vm295, 2, %v311
        %v328 = vsel %vm296, 2, %v312
        %v329 = vsel %vm297, 2, %v313
        %v330 = vsel %vm298, 2, %v314
        %v331 = vsel %vm299, 2, %v315
        %v332 = vsel %vm300, 2, %v316
        %v333 = vsel %vm301, 2, %v317
        %v334 = vsel %vm302, 2, %v318
        %v335 = vsel %vm303, 2, %v319
        %v336 = vsel %vm304, 2, %v320
        %v337 = vsel %vm305, 2, %v321
        %v338 = vsel %vm290, %v130, %v258
        %v339 = vsel %vm291, %v131, %v259
        %v340 = vsel %vm292, %v132, %v260
        %v341 = vsel %vm293, %v133, %v261
        %v342 = vsel %vm294, %v134, %v262
        %v343 = vsel %vm295, %v135, %v263
        %v344 = vsel %vm296, %v136, %v264
        %v345 = vsel %vm297, %v137, %v265
        %v346 = vsel %vm298, %v138, %v266
        %v347 = vsel %vm299, %v139, %v267
        %v348 = vsel %vm300, %v140, %v268
        %v349 = vsel %vm301, %v141, %v269
        %v350 = vsel %vm302, %v142, %v270
        %v351 = vsel %vm303, %v143, %v271
        %v352 = vsel %vm304, %v144, %v272
        %v353 = vsel %vm305, %v145, %v273
        %v370 = vrot.slane %v338, 7
        %v371 = vrot.slane %v339, 7
        %v372 = vrot.slane %v340, 7
        %v373 = vrot.slane %v341, 7
        %v374 = vrot.slane %v342, 7
        %v375 = vrot.slane %v343, 7
        %v376 = vrot.slane %v344, 7
        %v377 = vrot.slane %v345, 7
        %v378 = vrot.slane %v346, 7
        %v379 = vrot.slane %v347, 7
        %v380 = vrot.slane %v348, 7
        %v381 = vrot.slane %v349, 7
        %v382 = vrot.slane %v350, 7
        %v383 = vrot.slane %v351, 7
        %v384 = vrot.slane %v352, 7
        %v385 = vrot.slane %v353, 7
        %vm402 = vcmp.gt.f32.partialorder %v130, %v370
        %vm403 = vcmp.gt.f32.partialorder %v131, %v371
        %vm404 = vcmp.gt.f32.partialorder %v132, %v372
        %vm405 = vcmp.gt.f32.partialorder %v133, %v373
        %vm406 = vcmp.gt.f32.partialorder %v134, %v374
        %vm407 = vcmp.gt.f32.partialorder %v135, %v375
        %vm408 = vcmp.gt.f32.partialorder %v136, %v376
        %vm409 = vcmp.gt.f32.partialorder %v137, %v377
        %vm410 = vcmp.gt.f32.partialorder %v138, %v378
        %vm411 = vcmp.gt.f32.partialorder %v139, %v379
        %vm412 = vcmp.gt.f32.partialorder %v140, %v380
        %vm413 = vcmp.gt.f32.partialorder %v141, %v381
        %vm414 = vcmp.gt.f32.partialorder %v142, %v382
        %vm415 = vcmp.gt.f32.partialorder %v143, %v383
        %vm416 = vcmp.gt.f32.partialorder %v144, %v384
        %vm417 = vcmp.gt.f32.partialorder %v145, %v385
        %v418 = vrot.slane %v322, 7
        %v419 = vrot.slane %v323, 7
        %v420 = vrot.slane %v324, 7
        %v421 = vrot.slane %v325, 7
        %v422 = vrot.slane %v326, 7
        %v423 = vrot.slane %v327, 7
        %v424 = vrot.slane %v328, 7
        %v425 = vrot.slane %v329, 7
        %v426 = vrot.slane %v330, 7
        %v427 = vrot.slane %v331, 7
        %v428 = vrot.slane %v332, 7
        %v429 = vrot.slane %v333, 7
        %v430 = vrot.slane %v334, 7
        %v431 = vrot.slane %v335, 7
        %v432 = vrot.slane %v336, 7
        %v433 = vrot.slane %v337, 7
        %v434 = vsel %vm402, 3, %v418
        %v435 = vsel %vm403, 3, %v419
        %v436 = vsel %vm404, 3, %v420
        %v437 = vsel %vm405, 3, %v421
        %v438 = vsel %vm406, 3, %v422
        %v439 = vsel %vm407, 3, %v423
        %v440 = vsel %vm408, 3, %v424
        %v441 = vsel %vm409, 3, %v425
        %v442 = vsel %vm410, 3, %v426
        %v443 = vsel %vm411, 3, %v427
        %v444 = vsel %vm412, 3, %v428
        %v445 = vsel %vm413, 3, %v429
        %v446 = vsel %vm414, 3, %v430
        %v447 = vsel %vm415, 3, %v431
        %v448 = vsel %vm416, 3, %v432
        %v449 = vsel %vm417, 3, %v433
        %v450 = vsel %vm402, %v130, %v370
        %v451 = vsel %vm403, %v131, %v371
        %v452 = vsel %vm404, %v132, %v372
        %v453 = vsel %vm405, %v133, %v373
        %v454 = vsel %vm406, %v134, %v374
        %v455 = vsel %vm407, %v135, %v375
        %v456 = vsel %vm408, %v136, %v376
        %v457 = vsel %vm409, %v137, %v377
        %v458 = vsel %vm410, %v138, %v378
        %v459 = vsel %vm411, %v139, %v379
        %v460 = vsel %vm412, %v140, %v380
        %v461 = vsel %vm413, %v141, %v381
        %v462 = vsel %vm414, %v142, %v382
        %v463 = vsel %vm415, %v143, %v383
        %v464 = vsel %vm416, %v144, %v384
        %v465 = vsel %vm417, %v145, %v385
        %vm466 = vcmp.ne.f32.partialorder %v450, -1.0
        %vm467 = vcmp.ne.f32.partialorder %v451, -1.0
        %vm468 = vcmp.ne.f32.partialorder %v452, -1.0
        %vm469 = vcmp.ne.f32.partialorder %v453, -1.0
        %vm470 = vcmp.ne.f32.partialorder %v454, -1.0
        %vm471 = vcmp.ne.f32.partialorder %v455, -1.0
        %vm472 = vcmp.ne.f32.partialorder %v456, -1.0
        %vm473 = vcmp.ne.f32.partialorder %v457, -1.0
        %vm474 = vcmp.ne.f32.partialorder %v458, -1.0
        %vm475 = vcmp.ne.f32.partialorder %v459, -1.0
        %vm476 = vcmp.ne.f32.partialorder %v460, -1.0
        %vm477 = vcmp.ne.f32.partialorder %v461, -1.0
        %vm478 = vcmp.ne.f32.partialorder %v462, -1.0
        %vm479 = vcmp.ne.f32.partialorder %v463, -1.0
        %vm480 = vcmp.ne.f32.partialorder %v464, -1.0
        %vm481 = vcmp.ne.f32.partialorder %v465, -1.0
        %v482 = vsel %vm466, 1, 0
        %v483 = vsel %vm467, 1, 0
        %v484 = vsel %vm468, 1, 0
        %v485 = vsel %vm469, 1, 0
        %v486 = vsel %vm470, 1, 0
        %v487 = vsel %vm471, 1, 0
        %v488 = vsel %vm472, 1, 0
        %v489 = vsel %vm473, 1, 0
        %v490 = vsel %vm474, 1, 0
        %v491 = vsel %vm475, 1, 0
        %v492 = vsel %vm476, 1, 0
        %v493 = vsel %vm477, 1, 0
        %v494 = vsel %vm478, 1, 0
        %v495 = vsel %vm479, 1, 0
        %v496 = vsel %vm480, 1, 0
        %v497 = vsel %vm481, 1, 0
        %v498 = vcvt.s32.f32 %v482
        %v499 = vcvt.s32.f32 %v483
        %v500 = vcvt.s32.f32 %v484
        %v501 = vcvt.s32.f32 %v485
        %v502 = vcvt.s32.f32 %v486
        %v503 = vcvt.s32.f32 %v487
        %v504 = vcvt.s32.f32 %v488
        %v505 = vcvt.s32.f32 %v489
        %v506 = vcvt.s32.f32 %v490
        %v507 = vcvt.s32.f32 %v491
        %v508 = vcvt.s32.f32 %v492
        %v509 = vcvt.s32.f32 %v493
        %v510 = vcvt.s32.f32 %v494
        %v511 = vcvt.s32.f32 %v495
        %v512 = vcvt.s32.f32 %v496
        %v513 = vcvt.s32.f32 %v497
        %v514 = vlaneseq
        %v515 = vshrl.u32 %v514, 7
        %v516 = vadd.s32 %v515, 8
        %v517 = vadd.s32 %v515, 16
        %v518 = vadd.s32 %v515, 24
        %v519 = vadd.s32 %v515, 32
        %v520 = vadd.s32 %v515, 40
        %v521 = vadd.s32 %v515, 48
        %v522 = vadd.s32 %v515, 56
        %v523 = vadd.s32 %v515, 64
        %v524 = vadd.s32 %v515, 72
        %v525 = vadd.s32 %v515, 80
        %v526 = vadd.s32 %v515, 88
        %v527 = vadd.s32 %v515, 96
        %v528 = vadd.s32 %v515, 104
        %v529 = vadd.s32 %v515, 112
        %v530 = vadd.s32 %v515, 120
        %v531 = vlaneseq
        %v532 = vshrl.u32 %v531, 7
        %v533 = vsub.s32 3, %v532
        %v534 = vrot.slane %v434, %v533
        %v535 = vlaneseq
        %v536 = vshrl.u32 %v535, 7
        %v537 = vsub.s32 7, %v536
        %v538 = vrot.slane %v434, %v537
        %v539 = vlaneseq
        %v540 = vshrl.u32 %v539, 7
        %v541 = vsub.s32 3, %v540
        %v542 = vrot.slane %v435, %v541
        %v543 = vlaneseq
        %v544 = vshrl.u32 %v543, 7
        %v545 = vsub.s32 7, %v544
        %v546 = vrot.slane %v435, %v545
        %v547 = vlaneseq
        %v548 = vshrl.u32 %v547, 7
        %v549 = vsub.s32 3, %v548
        %v550 = vrot.slane %v436, %v549
        %v551 = vlaneseq
        %v552 = vshrl.u32 %v551, 7
        %v553 = vsub.s32 7, %v552
        %v554 = vrot.slane %v436, %v553
        %v555 = vlaneseq
        %v556 = vshrl.u32 %v555, 7
        %v557 = vsub.s32 3, %v556
        %v558 = vrot.slane %v437, %v557
        %v559 = vlaneseq
        %v560 = vshrl.u32 %v559, 7
        %v561 = vsub.s32 7, %v560
        %v562 = vrot.slane %v437, %v561
        %v563 = vlaneseq
        %v564 = vshrl.u32 %v563, 7
        %v565 = vsub.s32 3, %v564
        %v566 = vrot.slane %v438, %v565
        %v567 = vlaneseq
        %v568 = vshrl.u32 %v567, 7
        %v569 = vsub.s32 7, %v568
        %v570 = vrot.slane %v438, %v569
        %v571 = vlaneseq
        %v572 = vshrl.u32 %v571, 7
        %v573 = vsub.s32 3, %v572
        %v574 = vrot.slane %v439, %v573
        %v575 = vlaneseq
        %v576 = vshrl.u32 %v575, 7
        %v577 = vsub.s32 7, %v576
        %v578 = vrot.slane %v439, %v577
        %v579 = vlaneseq
        %v580 = vshrl.u32 %v579, 7
        %v581 = vsub.s32 3, %v580
        %v582 = vrot.slane %v440, %v581
        %v583 = vlaneseq
        %v584 = vshrl.u32 %v583, 7
        %v585 = vsub.s32 7, %v584
        %v586 = vrot.slane %v440, %v585
        %v587 = vlaneseq
        %v588 = vshrl.u32 %v587, 7
        %v589 = vsub.s32 3, %v588
        %v590 = vrot.slane %v441, %v589
        %v591 = vlaneseq
        %v592 = vshrl.u32 %v591, 7
        %v593 = vsub.s32 7, %v592
        %v594 = vrot.slane %v441, %v593
        %v595 = vlaneseq
        %v596 = vshrl.u32 %v595, 7
        %v597 = vsub.s32 3, %v596
        %v598 = vrot.slane %v442, %v597
        %v599 = vlaneseq
        %v600 = vshrl.u32 %v599, 7
        %v601 = vsub.s32 7, %v600
        %v602 = vrot.slane %v442, %v601
        %v603 = vlaneseq
        %v604 = vshrl.u32 %v603, 7
        %v605 = vsub.s32 3, %v604
        %v606 = vrot.slane %v443, %v605
        %v607 = vlaneseq
        %v608 = vshrl.u32 %v607, 7
        %v609 = vsub.s32 7, %v608
        %v610 = vrot.slane %v443, %v609
        %v611 = vlaneseq
        %v612 = vshrl.u32 %v611, 7
        %v613 = vsub.s32 3, %v612
        %v614 = vrot.slane %v444, %v613
        %v615 = vlaneseq
        %v616 = vshrl.u32 %v615, 7
        %v617 = vsub.s32 7, %v616
        %v618 = vrot.slane %v444, %v617
        %v619 = vlaneseq
        %v620 = vshrl.u32 %v619, 7
        %v621 = vsub.s32 3, %v620
        %v622 = vrot.slane %v445, %v621
        %v623 = vlaneseq
        %v624 = vshrl.u32 %v623, 7
        %v625 = vsub.s32 7, %v624
        %v626 = vrot.slane %v445, %v625
        %v627 = vlaneseq
        %v628 = vshrl.u32 %v627, 7
        %v629 = vsub.s32 3, %v628
        %v630 = vrot.slane %v446, %v629
        %v631 = vlaneseq
        %v632 = vshrl.u32 %v631, 7
        %v633 = vsub.s32 7, %v632
        %v634 = vrot.slane %v446, %v633
        %v635 = vlaneseq
        %v636 = vshrl.u32 %v635, 7
        %v637 = vsub.s32 3, %v636
        %v638 = vrot.slane %v447, %v637
        %v639 = vlaneseq
        %v640 = vshrl.u32 %v639, 7
        %v641 = vsub.s32 7, %v640
        %v642 = vrot.slane %v447, %v641
        %v643 = vlaneseq
        %v644 = vshrl.u32 %v643, 7
        %v645 = vsub.s32 3, %v644
        %v646 = vrot.slane %v448, %v645
        %v647 = vlaneseq
        %v648 = vshrl.u32 %v647, 7
        %v649 = vsub.s32 7, %v648
        %v650 = vrot.slane %v448, %v649
        %v651 = vlaneseq
        %v652 = vshrl.u32 %v651, 7
        %v653 = vsub.s32 3, %v652
        %v654 = vrot.slane %v449, %v653
        %v655 = vlaneseq
        %v656 = vshrl.u32 %v655, 7
        %v657 = vsub.s32 7, %v656
        %v658 = vrot.slane %v449, %v657
        %v659 = vlaneseq
        %v660 = vshrl.u32 %v659, 7
        %v661 = vsub.s32 3, %v660
        %v662 = vrot.slane %v534, %v661
        %v663 = vlaneseq
        %v664 = vshrl.u32 %v663, 7
        %v665 = vsub.s32 3, %v664
        %v666 = vrot.slane %v538, %v665
        %v667 = vlaneseq
        %v668 = vshrl.u32 %v667, 7
        %v669 = vsub.s32 3, %v668
        %v670 = vrot.slane %v542, %v669
        %v671 = vlaneseq
        %v672 = vshrl.u32 %v671, 7
        %v673 = vsub.s32 3, %v672
        %v674 = vrot.slane %v546, %v673
        %v675 = vlaneseq
        %v676 = vshrl.u32 %v675, 7
        %v677 = vsub.s32 3, %v676
        %v678 = vrot.slane %v550, %v677
        %v679 = vlaneseq
        %v680 = vshrl.u32 %v679, 7
        %v681 = vsub.s32 3, %v680
        %v682 = vrot.slane %v554, %v681
        %v683 = vlaneseq
        %v684 = vshrl.u32 %v683, 7
        %v685 = vsub.s32 3, %v684
        %v686 = vrot.slane %v558, %v685
        %v687 = vlaneseq
        %v688 = vshrl.u32 %v687, 7
        %v689 = vsub.s32 3, %v688
        %v690 = vrot.slane %v562, %v689
        %v691 = vlaneseq
        %v692 = vshrl.u32 %v691, 7
        %v693 = vsub.s32 3, %v692
        %v694 = vrot.slane %v566, %v693
        %v695 = vlaneseq
        %v696 = vshrl.u32 %v695, 7
        %v697 = vsub.s32 3, %v696
        %v698 = vrot.slane %v570, %v697
        %v699 = vlaneseq
        %v700 = vshrl.u32 %v699, 7
        %v701 = vsub.s32 3, %v700
        %v702 = vrot.slane %v574, %v701
        %v703 = vlaneseq
        %v704 = vshrl.u32 %v703, 7
        %v705 = vsub.s32 3, %v704
        %v706 = vrot.slane %v578, %v705
        %v707 = vlaneseq
        %v708 = vshrl.u32 %v707, 7
        %v709 = vsub.s32 3, %v708
        %v710 = vrot.slane %v582, %v709
        %v711 = vlaneseq
        %v712 = vshrl.u32 %v711, 7
        %v713 = vsub.s32 3, %v712
        %v714 = vrot.slane %v586, %v713
        %v715 = vlaneseq
        %v716 = vshrl.u32 %v715, 7
        %v717 = vsub.s32 3, %v716
        %v718 = vrot.slane %v590, %v717
        %v719 = vlaneseq
        %v720 = vshrl.u32 %v719, 7
        %v721 = vsub.s32 3, %v720
        %v722 = vrot.slane %v594, %v721
        %v723 = vlaneseq
        %v724 = vshrl.u32 %v723, 7
        %v725 = vsub.s32 3, %v724
        %v726 = vrot.slane %v598, %v725
        %v727 = vlaneseq
        %v728 = vshrl.u32 %v727, 7
        %v729 = vsub.s32 3, %v728
        %v730 = vrot.slane %v602, %v729
        %v731 = vlaneseq
        %v732 = vshrl.u32 %v731, 7
        %v733 = vsub.s32 3, %v732
        %v734 = vrot.slane %v606, %v733
        %v735 = vlaneseq
        %v736 = vshrl.u32 %v735, 7
        %v737 = vsub.s32 3, %v736
        %v738 = vrot.slane %v610, %v737
        %v739 = vlaneseq
        %v740 = vshrl.u32 %v739, 7
        %v741 = vsub.s32 3, %v740
        %v742 = vrot.slane %v614, %v741
        %v743 = vlaneseq
        %v744 = vshrl.u32 %v743, 7
        %v745 = vsub.s32 3, %v744
        %v746 = vrot.slane %v618, %v745
        %v747 = vlaneseq
        %v748 = vshrl.u32 %v747, 7
        %v749 = vsub.s32 3, %v748
        %v750 = vrot.slane %v622, %v749
        %v751 = vlaneseq
        %v752 = vshrl.u32 %v751, 7
        %v753 = vsub.s32 3, %v752
        %v754 = vrot.slane %v626, %v753
        %v755 = vlaneseq
        %v756 = vshrl.u32 %v755, 7
        %v757 = vsub.s32 3, %v756
        %v758 = vrot.slane %v630, %v757
        %v759 = vlaneseq
        %v760 = vshrl.u32 %v759, 7
        %v761 = vsub.s32 3, %v760
        %v762 = vrot.slane %v634, %v761
        %v763 = vlaneseq
        %v764 = vshrl.u32 %v763, 7
        %v765 = vsub.s32 3, %v764
        %v766 = vrot.slane %v638, %v765
        %v767 = vlaneseq
        %v768 = vshrl.u32 %v767, 7
        %v769 = vsub.s32 3, %v768
        %v770 = vrot.slane %v642, %v769
        %v771 = vlaneseq
        %v772 = vshrl.u32 %v771, 7
        %v773 = vsub.s32 3, %v772
        %v774 = vrot.slane %v646, %v773
        %v775 = vlaneseq
        %v776 = vshrl.u32 %v775, 7
        %v777 = vsub.s32 3, %v776
        %v778 = vrot.slane %v650, %v777
        %v779 = vlaneseq
        %v780 = vshrl.u32 %v779, 7
        %v781 = vsub.s32 3, %v780
        %v782 = vrot.slane %v654, %v781
        %v783 = vlaneseq
        %v784 = vshrl.u32 %v783, 7
        %v785 = vsub.s32 3, %v784
        %v786 = vrot.slane %v658, %v785
        %vm787 = vcmp.eq.s32.totalorder %v662, %v515
        %vm788 = vcmp.eq.s32.totalorder %v666, %v515
        %vm789 = vcmp.eq.s32.totalorder %v670, %v515
        %vm790 = vcmp.eq.s32.totalorder %v674, %v515
        %vm791 = vcmp.eq.s32.totalorder %v678, %v515
        %vm792 = vcmp.eq.s32.totalorder %v682, %v515
        %vm793 = vcmp.eq.s32.totalorder %v686, %v515
        %vm794 = vcmp.eq.s32.totalorder %v690, %v515
        %vm795 = vcmp.eq.s32.totalorder %v662, %v516
        %vm796 = vcmp.eq.s32.totalorder %v666, %v516
        %vm797 = vcmp.eq.s32.totalorder %v670, %v516
        %vm798 = vcmp.eq.s32.totalorder %v674, %v516
        %vm799 = vcmp.eq.s32.totalorder %v678, %v516
        %vm800 = vcmp.eq.s32.totalorder %v682, %v516
        %vm801 = vcmp.eq.s32.totalorder %v686, %v516
        %vm802 = vcmp.eq.s32.totalorder %v690, %v516
        %vm803 = vcmp.eq.s32.totalorder %v662, %v517
        %vm804 = vcmp.eq.s32.totalorder %v666, %v517
        %vm805 = vcmp.eq.s32.totalorder %v670, %v517
        %vm806 = vcmp.eq.s32.totalorder %v674, %v517
        %vm807 = vcmp.eq.s32.totalorder %v678, %v517
        %vm808 = vcmp.eq.s32.totalorder %v682, %v517
        %vm809 = vcmp.eq.s32.totalorder %v686, %v517
        %vm810 = vcmp.eq.s32.totalorder %v690, %v517
        %vm811 = vcmp.eq.s32.totalorder %v662, %v518
        %vm812 = vcmp.eq.s32.totalorder %v666, %v518
        %vm813 = vcmp.eq.s32.totalorder %v670, %v518
        %vm814 = vcmp.eq.s32.totalorder %v674, %v518
        %vm815 = vcmp.eq.s32.totalorder %v678, %v518
        %vm816 = vcmp.eq.s32.totalorder %v682, %v518
        %vm817 = vcmp.eq.s32.totalorder %v686, %v518
        %vm818 = vcmp.eq.s32.totalorder %v690, %v518
        %vm819 = vcmp.eq.s32.totalorder %v662, %v519
        %vm820 = vcmp.eq.s32.totalorder %v666, %v519
        %vm821 = vcmp.eq.s32.totalorder %v670, %v519
        %vm822 = vcmp.eq.s32.totalorder %v674, %v519
        %vm823 = vcmp.eq.s32.totalorder %v678, %v519
        %vm824 = vcmp.eq.s32.totalorder %v682, %v519
        %vm825 = vcmp.eq.s32.totalorder %v686, %v519
        %vm826 = vcmp.eq.s32.totalorder %v690, %v519
        %vm827 = vcmp.eq.s32.totalorder %v662, %v520
        %vm828 = vcmp.eq.s32.totalorder %v666, %v520
        %vm829 = vcmp.eq.s32.totalorder %v670, %v520
        %vm830 = vcmp.eq.s32.totalorder %v674, %v520
        %vm831 = vcmp.eq.s32.totalorder %v678, %v520
        %vm832 = vcmp.eq.s32.totalorder %v682, %v520
        %vm833 = vcmp.eq.s32.totalorder %v686, %v520
        %vm834 = vcmp.eq.s32.totalorder %v690, %v520
        %vm835 = vcmp.eq.s32.totalorder %v662, %v521
        %vm836 = vcmp.eq.s32.totalorder %v666, %v521
        %vm837 = vcmp.eq.s32.totalorder %v670, %v521
        %vm838 = vcmp.eq.s32.totalorder %v674, %v521
        %vm839 = vcmp.eq.s32.totalorder %v678, %v521
        %vm840 = vcmp.eq.s32.totalorder %v682, %v521
        %vm841 = vcmp.eq.s32.totalorder %v686, %v521
        %vm842 = vcmp.eq.s32.totalorder %v690, %v521
        %vm843 = vcmp.eq.s32.totalorder %v662, %v522
        %vm844 = vcmp.eq.s32.totalorder %v666, %v522
        %vm845 = vcmp.eq.s32.totalorder %v670, %v522
        %vm846 = vcmp.eq.s32.totalorder %v674, %v522
        %vm847 = vcmp.eq.s32.totalorder %v678, %v522
        %vm848 = vcmp.eq.s32.totalorder %v682, %v522
        %vm849 = vcmp.eq.s32.totalorder %v686, %v522
        %vm850 = vcmp.eq.s32.totalorder %v690, %v522
        %vm851 = vcmp.eq.s32.totalorder %v662, %v523
        %vm852 = vcmp.eq.s32.totalorder %v666, %v523
        %vm853 = vcmp.eq.s32.totalorder %v670, %v523
        %vm854 = vcmp.eq.s32.totalorder %v674, %v523
        %vm855 = vcmp.eq.s32.totalorder %v678, %v523
        %vm856 = vcmp.eq.s32.totalorder %v682, %v523
        %vm857 = vcmp.eq.s32.totalorder %v686, %v523
        %vm858 = vcmp.eq.s32.totalorder %v690, %v523
        %vm859 = vcmp.eq.s32.totalorder %v662, %v524
        %vm860 = vcmp.eq.s32.totalorder %v666, %v524
        %vm861 = vcmp.eq.s32.totalorder %v670, %v524
        %vm862 = vcmp.eq.s32.totalorder %v674, %v524
        %vm863 = vcmp.eq.s32.totalorder %v678, %v524
        %vm864 = vcmp.eq.s32.totalorder %v682, %v524
        %vm865 = vcmp.eq.s32.totalorder %v686, %v524
        %vm866 = vcmp.eq.s32.totalorder %v690, %v524
        %vm867 = vcmp.eq.s32.totalorder %v662, %v525
        %vm868 = vcmp.eq.s32.totalorder %v666, %v525
        %vm869 = vcmp.eq.s32.totalorder %v670, %v525
        %vm870 = vcmp.eq.s32.totalorder %v674, %v525
        %vm871 = vcmp.eq.s32.totalorder %v678, %v525
        %vm872 = vcmp.eq.s32.totalorder %v682, %v525
        %vm873 = vcmp.eq.s32.totalorder %v686, %v525
        %vm874 = vcmp.eq.s32.totalorder %v690, %v525
        %vm875 = vcmp.eq.s32.totalorder %v662, %v526
        %vm876 = vcmp.eq.s32.totalorder %v666, %v526
        %vm877 = vcmp.eq.s32.totalorder %v670, %v526
        %vm878 = vcmp.eq.s32.totalorder %v674, %v526
        %vm879 = vcmp.eq.s32.totalorder %v678, %v526
        %vm880 = vcmp.eq.s32.totalorder %v682, %v526
        %vm881 = vcmp.eq.s32.totalorder %v686, %v526
        %vm882 = vcmp.eq.s32.totalorder %v690, %v526
        %vm883 = vcmp.eq.s32.totalorder %v662, %v527
        %vm884 = vcmp.eq.s32.totalorder %v666, %v527
        %vm885 = vcmp.eq.s32.totalorder %v670, %v527
        %vm886 = vcmp.eq.s32.totalorder %v674, %v527
        %vm887 = vcmp.eq.s32.totalorder %v678, %v527
        %vm888 = vcmp.eq.s32.totalorder %v682, %v527
        %vm889 = vcmp.eq.s32.totalorder %v686, %v527
        %vm890 = vcmp.eq.s32.totalorder %v690, %v527
        %vm891 = vcmp.eq.s32.totalorder %v662, %v528
        %vm892 = vcmp.eq.s32.totalorder %v666, %v528
        %vm893 = vcmp.eq.s32.totalorder %v670, %v528
        %vm894 = vcmp.eq.s32.totalorder %v674, %v528
        %vm895 = vcmp.eq.s32.totalorder %v678, %v528
        %vm896 = vcmp.eq.s32.totalorder %v682, %v528
        %vm897 = vcmp.eq.s32.totalorder %v686, %v528
        %vm898 = vcmp.eq.s32.totalorder %v690, %v528
        %vm899 = vcmp.eq.s32.totalorder %v662, %v529
        %vm900 = vcmp.eq.s32.totalorder %v666, %v529
        %vm901 = vcmp.eq.s32.totalorder %v670, %v529
        %vm902 = vcmp.eq.s32.totalorder %v674, %v529
        %vm903 = vcmp.eq.s32.totalorder %v678, %v529
        %vm904 = vcmp.eq.s32.totalorder %v682, %v529
        %vm905 = vcmp.eq.s32.totalorder %v686, %v529
        %vm906 = vcmp.eq.s32.totalorder %v690, %v529
        %vm907 = vcmp.eq.s32.totalorder %v662, %v530
        %vm908 = vcmp.eq.s32.totalorder %v666, %v530
        %vm909 = vcmp.eq.s32.totalorder %v670, %v530
        %vm910 = vcmp.eq.s32.totalorder %v674, %v530
        %vm911 = vcmp.eq.s32.totalorder %v678, %v530
        %vm912 = vcmp.eq.s32.totalorder %v682, %v530
        %vm913 = vcmp.eq.s32.totalorder %v686, %v530
        %vm914 = vcmp.eq.s32.totalorder %v690, %v530
        %vm915 = vcmp.eq.s32.totalorder %v694, %v515
        %vm916 = vcmp.eq.s32.totalorder %v698, %v515
        %vm917 = vcmp.eq.s32.totalorder %v702, %v515
        %vm918 = vcmp.eq.s32.totalorder %v706, %v515
        %vm919 = vcmp.eq.s32.totalorder %v710, %v515
        %vm920 = vcmp.eq.s32.totalorder %v714, %v515
        %vm921 = vcmp.eq.s32.totalorder %v718, %v515
        %vm922 = vcmp.eq.s32.totalorder %v722, %v515
        %vm923 = vcmp.eq.s32.totalorder %v694, %v516
        %vm924 = vcmp.eq.s32.totalorder %v698, %v516
        %vm925 = vcmp.eq.s32.totalorder %v702, %v516
        %vm926 = vcmp.eq.s32.totalorder %v706, %v516
        %vm927 = vcmp.eq.s32.totalorder %v710, %v516
        %vm928 = vcmp.eq.s32.totalorder %v714, %v516
        %vm929 = vcmp.eq.s32.totalorder %v718, %v516
        %vm930 = vcmp.eq.s32.totalorder %v722, %v516
        %vm931 = vcmp.eq.s32.totalorder %v694, %v517
        %vm932 = vcmp.eq.s32.totalorder %v698, %v517
        %vm933 = vcmp.eq.s32.totalorder %v702, %v517
        %vm934 = vcmp.eq.s32.totalorder %v706, %v517
        %vm935 = vcmp.eq.s32.totalorder %v710, %v517
        %vm936 = vcmp.eq.s32.totalorder %v714, %v517
        %vm937 = vcmp.eq.s32.totalorder %v718, %v517
        %vm938 = vcmp.eq.s32.totalorder %v722, %v517
        %vm939 = vcmp.eq.s32.totalorder %v694, %v518
        %vm940 = vcmp.eq.s32.totalorder %v698, %v518
        %vm941 = vcmp.eq.s32.totalorder %v702, %v518
        %vm942 = vcmp.eq.s32.totalorder %v706, %v518
        %vm943 = vcmp.eq.s32.totalorder %v710, %v518
        %vm944 = vcmp.eq.s32.totalorder %v714, %v518
        %vm945 = vcmp.eq.s32.totalorder %v718, %v518
        %vm946 = vcmp.eq.s32.totalorder %v722, %v518
        %vm947 = vcmp.eq.s32.totalorder %v694, %v519
        %vm948 = vcmp.eq.s32.totalorder %v698, %v519
        %vm949 = vcmp.eq.s32.totalorder %v702, %v519
        %vm950 = vcmp.eq.s32.totalorder %v706, %v519
        %vm951 = vcmp.eq.s32.totalorder %v710, %v519
        %vm952 = vcmp.eq.s32.totalorder %v714, %v519
        %vm953 = vcmp.eq.s32.totalorder %v718, %v519
        %vm954 = vcmp.eq.s32.totalorder %v722, %v519
        %vm955 = vcmp.eq.s32.totalorder %v694, %v520
        %vm956 = vcmp.eq.s32.totalorder %v698, %v520
        %vm957 = vcmp.eq.s32.totalorder %v702, %v520
        %vm958 = vcmp.eq.s32.totalorder %v706, %v520
        %vm959 = vcmp.eq.s32.totalorder %v710, %v520
        %vm960 = vcmp.eq.s32.totalorder %v714, %v520
        %vm961 = vcmp.eq.s32.totalorder %v718, %v520
        %vm962 = vcmp.eq.s32.totalorder %v722, %v520
        %vm963 = vcmp.eq.s32.totalorder %v694, %v521
        %vm964 = vcmp.eq.s32.totalorder %v698, %v521
        %vm965 = vcmp.eq.s32.totalorder %v702, %v521
        %vm966 = vcmp.eq.s32.totalorder %v706, %v521
        %vm967 = vcmp.eq.s32.totalorder %v710, %v521
        %vm968 = vcmp.eq.s32.totalorder %v714, %v521
        %vm969 = vcmp.eq.s32.totalorder %v718, %v521
        %vm970 = vcmp.eq.s32.totalorder %v722, %v521
        %vm971 = vcmp.eq.s32.totalorder %v694, %v522
        %vm972 = vcmp.eq.s32.totalorder %v698, %v522
        %vm973 = vcmp.eq.s32.totalorder %v702, %v522
        %vm974 = vcmp.eq.s32.totalorder %v706, %v522
        %vm975 = vcmp.eq.s32.totalorder %v710, %v522
        %vm976 = vcmp.eq.s32.totalorder %v714, %v522
        %vm977 = vcmp.eq.s32.totalorder %v718, %v522
        %vm978 = vcmp.eq.s32.totalorder %v722, %v522
        %vm979 = vcmp.eq.s32.totalorder %v694, %v523
        %vm980 = vcmp.eq.s32.totalorder %v698, %v523
        %vm981 = vcmp.eq.s32.totalorder %v702, %v523
        %vm982 = vcmp.eq.s32.totalorder %v706, %v523
        %vm983 = vcmp.eq.s32.totalorder %v710, %v523
        %vm984 = vcmp.eq.s32.totalorder %v714, %v523
        %vm985 = vcmp.eq.s32.totalorder %v718, %v523
        %vm986 = vcmp.eq.s32.totalorder %v722, %v523
        %vm987 = vcmp.eq.s32.totalorder %v694, %v524
        %vm988 = vcmp.eq.s32.totalorder %v698, %v524
        %vm989 = vcmp.eq.s32.totalorder %v702, %v524
        %vm990 = vcmp.eq.s32.totalorder %v706, %v524
        %vm991 = vcmp.eq.s32.totalorder %v710, %v524
        %vm992 = vcmp.eq.s32.totalorder %v714, %v524
        %vm993 = vcmp.eq.s32.totalorder %v718, %v524
        %vm994 = vcmp.eq.s32.totalorder %v722, %v524
        %vm995 = vcmp.eq.s32.totalorder %v694, %v525
        %vm996 = vcmp.eq.s32.totalorder %v698, %v525
        %vm997 = vcmp.eq.s32.totalorder %v702, %v525
        %vm998 = vcmp.eq.s32.totalorder %v706, %v525
        %vm999 = vcmp.eq.s32.totalorder %v710, %v525
        %vm1000 = vcmp.eq.s32.totalorder %v714, %v525
        %vm1001 = vcmp.eq.s32.totalorder %v718, %v525
        %vm1002 = vcmp.eq.s32.totalorder %v722, %v525
        %vm1003 = vcmp.eq.s32.totalorder %v694, %v526
        %vm1004 = vcmp.eq.s32.totalorder %v698, %v526
        %vm1005 = vcmp.eq.s32.totalorder %v702, %v526
        %vm1006 = vcmp.eq.s32.totalorder %v706, %v526
        %vm1007 = vcmp.eq.s32.totalorder %v710, %v526
        %vm1008 = vcmp.eq.s32.totalorder %v714, %v526
        %vm1009 = vcmp.eq.s32.totalorder %v718, %v526
        %vm1010 = vcmp.eq.s32.totalorder %v722, %v526
        %vm1011 = vcmp.eq.s32.totalorder %v694, %v527
        %vm1012 = vcmp.eq.s32.totalorder %v698, %v527
        %vm1013 = vcmp.eq.s32.totalorder %v702, %v527
        %vm1014 = vcmp.eq.s32.totalorder %v706, %v527
        %vm1015 = vcmp.eq.s32.totalorder %v710, %v527
        %vm1016 = vcmp.eq.s32.totalorder %v714, %v527
        %vm1017 = vcmp.eq.s32.totalorder %v718, %v527
        %vm1018 = vcmp.eq.s32.totalorder %v722, %v527
        %vm1019 = vcmp.eq.s32.totalorder %v694, %v528
        %vm1020 = vcmp.eq.s32.totalorder %v698, %v528
        %vm1021 = vcmp.eq.s32.totalorder %v702, %v528
        %vm1022 = vcmp.eq.s32.totalorder %v706, %v528
        %vm1023 = vcmp.eq.s32.totalorder %v710, %v528
        %vm1024 = vcmp.eq.s32.totalorder %v714, %v528
        %vm1025 = vcmp.eq.s32.totalorder %v718, %v528
        %vm1026 = vcmp.eq.s32.totalorder %v722, %v528
        %vm1027 = vcmp.eq.s32.totalorder %v694, %v529
        %vm1028 = vcmp.eq.s32.totalorder %v698, %v529
        %vm1029 = vcmp.eq.s32.totalorder %v702, %v529
        %vm1030 = vcmp.eq.s32.totalorder %v706, %v529
        %vm1031 = vcmp.eq.s32.totalorder %v710, %v529
        %vm1032 = vcmp.eq.s32.totalorder %v714, %v529
        %vm1033 = vcmp.eq.s32.totalorder %v718, %v529
        %vm1034 = vcmp.eq.s32.totalorder %v722, %v529
        %vm1035 = vcmp.eq.s32.totalorder %v694, %v530
        %vm1036 = vcmp.eq.s32.totalorder %v698, %v530
        %vm1037 = vcmp.eq.s32.totalorder %v702, %v530
        %vm1038 = vcmp.eq.s32.totalorder %v706, %v530
        %vm1039 = vcmp.eq.s32.totalorder %v710, %v530
        %vm1040 = vcmp.eq.s32.totalorder %v714, %v530
        %vm1041 = vcmp.eq.s32.totalorder %v718, %v530
        %vm1042 = vcmp.eq.s32.totalorder %v722, %v530
        %vm1043 = vcmp.eq.s32.totalorder %v726, %v515
        %vm1044 = vcmp.eq.s32.totalorder %v730, %v515
        %vm1045 = vcmp.eq.s32.totalorder %v734, %v515
        %vm1046 = vcmp.eq.s32.totalorder %v738, %v515
        %vm1047 = vcmp.eq.s32.totalorder %v742, %v515
        %vm1048 = vcmp.eq.s32.totalorder %v746, %v515
        %vm1049 = vcmp.eq.s32.totalorder %v750, %v515
        %vm1050 = vcmp.eq.s32.totalorder %v754, %v515
        %vm1051 = vcmp.eq.s32.totalorder %v726, %v516
        %vm1052 = vcmp.eq.s32.totalorder %v730, %v516
        %vm1053 = vcmp.eq.s32.totalorder %v734, %v516
        %vm1054 = vcmp.eq.s32.totalorder %v738, %v516
        %vm1055 = vcmp.eq.s32.totalorder %v742, %v516
        %vm1056 = vcmp.eq.s32.totalorder %v746, %v516
        %vm1057 = vcmp.eq.s32.totalorder %v750, %v516
        %vm1058 = vcmp.eq.s32.totalorder %v754, %v516
        %vm1059 = vcmp.eq.s32.totalorder %v726, %v517
        %vm1060 = vcmp.eq.s32.totalorder %v730, %v517
        %vm1061 = vcmp.eq.s32.totalorder %v734, %v517
        %vm1062 = vcmp.eq.s32.totalorder %v738, %v517
        %vm1063 = vcmp.eq.s32.totalorder %v742, %v517
        %vm1064 = vcmp.eq.s32.totalorder %v746, %v517
        %vm1065 = vcmp.eq.s32.totalorder %v750, %v517
        %vm1066 = vcmp.eq.s32.totalorder %v754, %v517
        %vm1067 = vcmp.eq.s32.totalorder %v726, %v518
        %vm1068 = vcmp.eq.s32.totalorder %v730, %v518
        %vm1069 = vcmp.eq.s32.totalorder %v734, %v518
        %vm1070 = vcmp.eq.s32.totalorder %v738, %v518
        %vm1071 = vcmp.eq.s32.totalorder %v742, %v518
        %vm1072 = vcmp.eq.s32.totalorder %v746, %v518
        %vm1073 = vcmp.eq.s32.totalorder %v750, %v518
        %vm1074 = vcmp.eq.s32.totalorder %v754, %v518
        %vm1075 = vcmp.eq.s32.totalorder %v726, %v519
        %vm1076 = vcmp.eq.s32.totalorder %v730, %v519
        %vm1077 = vcmp.eq.s32.totalorder %v734, %v519
        %vm1078 = vcmp.eq.s32.totalorder %v738, %v519
        %vm1079 = vcmp.eq.s32.totalorder %v742, %v519
        %vm1080 = vcmp.eq.s32.totalorder %v746, %v519
        %vm1081 = vcmp.eq.s32.totalorder %v750, %v519
        %vm1082 = vcmp.eq.s32.totalorder %v754, %v519
        %vm1083 = vcmp.eq.s32.totalorder %v726, %v520
        %vm1084 = vcmp.eq.s32.totalorder %v730, %v520
        %vm1085 = vcmp.eq.s32.totalorder %v734, %v520
        %vm1086 = vcmp.eq.s32.totalorder %v738, %v520
        %vm1087 = vcmp.eq.s32.totalorder %v742, %v520
        %vm1088 = vcmp.eq.s32.totalorder %v746, %v520
        %vm1089 = vcmp.eq.s32.totalorder %v750, %v520
        %vm1090 = vcmp.eq.s32.totalorder %v754, %v520
        %vm1091 = vcmp.eq.s32.totalorder %v726, %v521
        %vm1092 = vcmp.eq.s32.totalorder %v730, %v521
        %vm1093 = vcmp.eq.s32.totalorder %v734, %v521
        %vm1094 = vcmp.eq.s32.totalorder %v738, %v521
        %vm1095 = vcmp.eq.s32.totalorder %v742, %v521
        %vm1096 = vcmp.eq.s32.totalorder %v746, %v521
        %vm1097 = vcmp.eq.s32.totalorder %v750, %v521
        %vm1098 = vcmp.eq.s32.totalorder %v754, %v521
        %vm1099 = vcmp.eq.s32.totalorder %v726, %v522
        %vm1100 = vcmp.eq.s32.totalorder %v730, %v522
        %vm1101 = vcmp.eq.s32.totalorder %v734, %v522
        %vm1102 = vcmp.eq.s32.totalorder %v738, %v522
        %vm1103 = vcmp.eq.s32.totalorder %v742, %v522
        %vm1104 = vcmp.eq.s32.totalorder %v746, %v522
        %vm1105 = vcmp.eq.s32.totalorder %v750, %v522
        %vm1106 = vcmp.eq.s32.totalorder %v754, %v522
        %vm1107 = vcmp.eq.s32.totalorder %v726, %v523
        %vm1108 = vcmp.eq.s32.totalorder %v730, %v523
        %vm1109 = vcmp.eq.s32.totalorder %v734, %v523
        %vm1110 = vcmp.eq.s32.totalorder %v738, %v523
        %vm1111 = vcmp.eq.s32.totalorder %v742, %v523
        %vm1112 = vcmp.eq.s32.totalorder %v746, %v523
        %vm1113 = vcmp.eq.s32.totalorder %v750, %v523
        %vm1114 = vcmp.eq.s32.totalorder %v754, %v523
        %vm1115 = vcmp.eq.s32.totalorder %v726, %v524
        %vm1116 = vcmp.eq.s32.totalorder %v730, %v524
        %vm1117 = vcmp.eq.s32.totalorder %v734, %v524
        %vm1118 = vcmp.eq.s32.totalorder %v738, %v524
        %vm1119 = vcmp.eq.s32.totalorder %v742, %v524
        %vm1120 = vcmp.eq.s32.totalorder %v746, %v524
        %vm1121 = vcmp.eq.s32.totalorder %v750, %v524
        %vm1122 = vcmp.eq.s32.totalorder %v754, %v524
        %vm1123 = vcmp.eq.s32.totalorder %v726, %v525
        %vm1124 = vcmp.eq.s32.totalorder %v730, %v525
        %vm1125 = vcmp.eq.s32.totalorder %v734, %v525
        %vm1126 = vcmp.eq.s32.totalorder %v738, %v525
        %vm1127 = vcmp.eq.s32.totalorder %v742, %v525
        %vm1128 = vcmp.eq.s32.totalorder %v746, %v525
        %vm1129 = vcmp.eq.s32.totalorder %v750, %v525
        %vm1130 = vcmp.eq.s32.totalorder %v754, %v525
        %vm1131 = vcmp.eq.s32.totalorder %v726, %v526
        %vm1132 = vcmp.eq.s32.totalorder %v730, %v526
        %vm1133 = vcmp.eq.s32.totalorder %v734, %v526
        %vm1134 = vcmp.eq.s32.totalorder %v738, %v526
        %vm1135 = vcmp.eq.s32.totalorder %v742, %v526
        %vm1136 = vcmp.eq.s32.totalorder %v746, %v526
        %vm1137 = vcmp.eq.s32.totalorder %v750, %v526
        %vm1138 = vcmp.eq.s32.totalorder %v754, %v526
        %vm1139 = vcmp.eq.s32.totalorder %v726, %v527
        %vm1140 = vcmp.eq.s32.totalorder %v730, %v527
        %vm1141 = vcmp.eq.s32.totalorder %v734, %v527
        %vm1142 = vcmp.eq.s32.totalorder %v738, %v527
        %vm1143 = vcmp.eq.s32.totalorder %v742, %v527
        %vm1144 = vcmp.eq.s32.totalorder %v746, %v527
        %vm1145 = vcmp.eq.s32.totalorder %v750, %v527
        %vm1146 = vcmp.eq.s32.totalorder %v754, %v527
        %vm1147 = vcmp.eq.s32.totalorder %v726, %v528
        %vm1148 = vcmp.eq.s32.totalorder %v730, %v528
        %vm1149 = vcmp.eq.s32.totalorder %v734, %v528
        %vm1150 = vcmp.eq.s32.totalorder %v738, %v528
        %vm1151 = vcmp.eq.s32.totalorder %v742, %v528
        %vm1152 = vcmp.eq.s32.totalorder %v746, %v528
        %vm1153 = vcmp.eq.s32.totalorder %v750, %v528
        %vm1154 = vcmp.eq.s32.totalorder %v754, %v528
        %vm1155 = vcmp.eq.s32.totalorder %v726, %v529
        %vm1156 = vcmp.eq.s32.totalorder %v730, %v529
        %vm1157 = vcmp.eq.s32.totalorder %v734, %v529
        %vm1158 = vcmp.eq.s32.totalorder %v738, %v529
        %vm1159 = vcmp.eq.s32.totalorder %v742, %v529
        %vm1160 = vcmp.eq.s32.totalorder %v746, %v529
        %vm1161 = vcmp.eq.s32.totalorder %v750, %v529
        %vm1162 = vcmp.eq.s32.totalorder %v754, %v529
        %vm1163 = vcmp.eq.s32.totalorder %v726, %v530
        %vm1164 = vcmp.eq.s32.totalorder %v730, %v530
        %vm1165 = vcmp.eq.s32.totalorder %v734, %v530
        %vm1166 = vcmp.eq.s32.totalorder %v738, %v530
        %vm1167 = vcmp.eq.s32.totalorder %v742, %v530
        %vm1168 = vcmp.eq.s32.totalorder %v746, %v530
        %vm1169 = vcmp.eq.s32.totalorder %v750, %v530
        %vm1170 = vcmp.eq.s32.totalorder %v754, %v530
        %vm1171 = vcmp.eq.s32.totalorder %v758, %v515
        %vm1172 = vcmp.eq.s32.totalorder %v762, %v515
        %vm1173 = vcmp.eq.s32.totalorder %v766, %v515
        %vm1174 = vcmp.eq.s32.totalorder %v770, %v515
        %vm1175 = vcmp.eq.s32.totalorder %v774, %v515
        %vm1176 = vcmp.eq.s32.totalorder %v778, %v515
        %vm1177 = vcmp.eq.s32.totalorder %v782, %v515
        %vm1178 = vcmp.eq.s32.totalorder %v786, %v515
        %vm1179 = vcmp.eq.s32.totalorder %v758, %v516
        %vm1180 = vcmp.eq.s32.totalorder %v762, %v516
        %vm1181 = vcmp.eq.s32.totalorder %v766, %v516
        %vm1182 = vcmp.eq.s32.totalorder %v770, %v516
        %vm1183 = vcmp.eq.s32.totalorder %v774, %v516
        %vm1184 = vcmp.eq.s32.totalorder %v778, %v516
        %vm1185 = vcmp.eq.s32.totalorder %v782, %v516
        %vm1186 = vcmp.eq.s32.totalorder %v786, %v516
        %vm1187 = vcmp.eq.s32.totalorder %v758, %v517
        %vm1188 = vcmp.eq.s32.totalorder %v762, %v517
        %vm1189 = vcmp.eq.s32.totalorder %v766, %v517
        %vm1190 = vcmp.eq.s32.totalorder %v770, %v517
        %vm1191 = vcmp.eq.s32.totalorder %v774, %v517
        %vm1192 = vcmp.eq.s32.totalorder %v778, %v517
        %vm1193 = vcmp.eq.s32.totalorder %v782, %v517
        %vm1194 = vcmp.eq.s32.totalorder %v786, %v517
        %vm1195 = vcmp.eq.s32.totalorder %v758, %v518
        %vm1196 = vcmp.eq.s32.totalorder %v762, %v518
        %vm1197 = vcmp.eq.s32.totalorder %v766, %v518
        %vm1198 = vcmp.eq.s32.totalorder %v770, %v518
        %vm1199 = vcmp.eq.s32.totalorder %v774, %v518
        %vm1200 = vcmp.eq.s32.totalorder %v778, %v518
        %vm1201 = vcmp.eq.s32.totalorder %v782, %v518
        %vm1202 = vcmp.eq.s32.totalorder %v786, %v518
        %vm1203 = vcmp.eq.s32.totalorder %v758, %v519
        %vm1204 = vcmp.eq.s32.totalorder %v762, %v519
        %vm1205 = vcmp.eq.s32.totalorder %v766, %v519
        %vm1206 = vcmp.eq.s32.totalorder %v770, %v519
        %vm1207 = vcmp.eq.s32.totalorder %v774, %v519
        %vm1208 = vcmp.eq.s32.totalorder %v778, %v519
        %vm1209 = vcmp.eq.s32.totalorder %v782, %v519
        %vm1210 = vcmp.eq.s32.totalorder %v786, %v519
        %vm1211 = vcmp.eq.s32.totalorder %v758, %v520
        %vm1212 = vcmp.eq.s32.totalorder %v762, %v520
        %vm1213 = vcmp.eq.s32.totalorder %v766, %v520
        %vm1214 = vcmp.eq.s32.totalorder %v770, %v520
        %vm1215 = vcmp.eq.s32.totalorder %v774, %v520
        %vm1216 = vcmp.eq.s32.totalorder %v778, %v520
        %vm1217 = vcmp.eq.s32.totalorder %v782, %v520
        %vm1218 = vcmp.eq.s32.totalorder %v786, %v520
        %vm1219 = vcmp.eq.s32.totalorder %v758, %v521
        %vm1220 = vcmp.eq.s32.totalorder %v762, %v521
        %vm1221 = vcmp.eq.s32.totalorder %v766, %v521
        %vm1222 = vcmp.eq.s32.totalorder %v770, %v521
        %vm1223 = vcmp.eq.s32.totalorder %v774, %v521
        %vm1224 = vcmp.eq.s32.totalorder %v778, %v521
        %vm1225 = vcmp.eq.s32.totalorder %v782, %v521
        %vm1226 = vcmp.eq.s32.totalorder %v786, %v521
        %vm1227 = vcmp.eq.s32.totalorder %v758, %v522
        %vm1228 = vcmp.eq.s32.totalorder %v762, %v522
        %vm1229 = vcmp.eq.s32.totalorder %v766, %v522
        %vm1230 = vcmp.eq.s32.totalorder %v770, %v522
        %vm1231 = vcmp.eq.s32.totalorder %v774, %v522
        %vm1232 = vcmp.eq.s32.totalorder %v778, %v522
        %vm1233 = vcmp.eq.s32.totalorder %v782, %v522
        %vm1234 = vcmp.eq.s32.totalorder %v786, %v522
        %vm1235 = vcmp.eq.s32.totalorder %v758, %v523
        %vm1236 = vcmp.eq.s32.totalorder %v762, %v523
        %vm1237 = vcmp.eq.s32.totalorder %v766, %v523
        %vm1238 = vcmp.eq.s32.totalorder %v770, %v523
        %vm1239 = vcmp.eq.s32.totalorder %v774, %v523
        %vm1240 = vcmp.eq.s32.totalorder %v778, %v523
        %vm1241 = vcmp.eq.s32.totalorder %v782, %v523
        %vm1242 = vcmp.eq.s32.totalorder %v786, %v523
        %vm1243 = vcmp.eq.s32.totalorder %v758, %v524
        %vm1244 = vcmp.eq.s32.totalorder %v762, %v524
        %vm1245 = vcmp.eq.s32.totalorder %v766, %v524
        %vm1246 = vcmp.eq.s32.totalorder %v770, %v524
        %vm1247 = vcmp.eq.s32.totalorder %v774, %v524
        %vm1248 = vcmp.eq.s32.totalorder %v778, %v524
        %vm1249 = vcmp.eq.s32.totalorder %v782, %v524
        %vm1250 = vcmp.eq.s32.totalorder %v786, %v524
        %vm1251 = vcmp.eq.s32.totalorder %v758, %v525
        %vm1252 = vcmp.eq.s32.totalorder %v762, %v525
        %vm1253 = vcmp.eq.s32.totalorder %v766, %v525
        %vm1254 = vcmp.eq.s32.totalorder %v770, %v525
        %vm1255 = vcmp.eq.s32.totalorder %v774, %v525
        %vm1256 = vcmp.eq.s32.totalorder %v778, %v525
        %vm1257 = vcmp.eq.s32.totalorder %v782, %v525
        %vm1258 = vcmp.eq.s32.totalorder %v786, %v525
        %vm1259 = vcmp.eq.s32.totalorder %v758, %v526
        %vm1260 = vcmp.eq.s32.totalorder %v762, %v526
        %vm1261 = vcmp.eq.s32.totalorder %v766, %v526
        %vm1262 = vcmp.eq.s32.totalorder %v770, %v526
        %vm1263 = vcmp.eq.s32.totalorder %v774, %v526
        %vm1264 = vcmp.eq.s32.totalorder %v778, %v526
        %vm1265 = vcmp.eq.s32.totalorder %v782, %v526
        %vm1266 = vcmp.eq.s32.totalorder %v786, %v526
        %vm1267 = vcmp.eq.s32.totalorder %v758, %v527
        %vm1268 = vcmp.eq.s32.totalorder %v762, %v527
        %vm1269 = vcmp.eq.s32.totalorder %v766, %v527
        %vm1270 = vcmp.eq.s32.totalorder %v770, %v527
        %vm1271 = vcmp.eq.s32.totalorder %v774, %v527
        %vm1272 = vcmp.eq.s32.totalorder %v778, %v527
        %vm1273 = vcmp.eq.s32.totalorder %v782, %v527
        %vm1274 = vcmp.eq.s32.totalorder %v786, %v527
        %vm1275 = vcmp.eq.s32.totalorder %v758, %v528
        %vm1276 = vcmp.eq.s32.totalorder %v762, %v528
        %vm1277 = vcmp.eq.s32.totalorder %v766, %v528
        %vm1278 = vcmp.eq.s32.totalorder %v770, %v528
        %vm1279 = vcmp.eq.s32.totalorder %v774, %v528
        %vm1280 = vcmp.eq.s32.totalorder %v778, %v528
        %vm1281 = vcmp.eq.s32.totalorder %v782, %v528
        %vm1282 = vcmp.eq.s32.totalorder %v786, %v528
        %vm1283 = vcmp.eq.s32.totalorder %v758, %v529
        %vm1284 = vcmp.eq.s32.totalorder %v762, %v529
        %vm1285 = vcmp.eq.s32.totalorder %v766, %v529
        %vm1286 = vcmp.eq.s32.totalorder %v770, %v529
        %vm1287 = vcmp.eq.s32.totalorder %v774, %v529
        %vm1288 = vcmp.eq.s32.totalorder %v778, %v529
        %vm1289 = vcmp.eq.s32.totalorder %v782, %v529
        %vm1290 = vcmp.eq.s32.totalorder %v786, %v529
        %vm1291 = vcmp.eq.s32.totalorder %v758, %v530
        %vm1292 = vcmp.eq.s32.totalorder %v762, %v530
        %vm1293 = vcmp.eq.s32.totalorder %v766, %v530
        %vm1294 = vcmp.eq.s32.totalorder %v770, %v530
        %vm1295 = vcmp.eq.s32.totalorder %v774, %v530
        %vm1296 = vcmp.eq.s32.totalorder %v778, %v530
        %vm1297 = vcmp.eq.s32.totalorder %v782, %v530
        %vm1298 = vcmp.eq.s32.totalorder %v786, %v530
        %v1299 = vsel %vm787, 1, 0
        %v1300 = vsel %vm788, 1, 0
        %v1301 = vsel %vm789, 1, 0
        %v1302 = vsel %vm790, 1, 0
        %v1303 = vsel %vm791, 1, 0
        %v1304 = vsel %vm792, 1, 0
        %v1305 = vsel %vm793, 1, 0
        %v1306 = vsel %vm794, 1, 0
        %v1307 = vsel %vm795, 1, 0
        %v1308 = vsel %vm796, 1, 0
        %v1309 = vsel %vm797, 1, 0
        %v1310 = vsel %vm798, 1, 0
        %v1311 = vsel %vm799, 1, 0
        %v1312 = vsel %vm800, 1, 0
        %v1313 = vsel %vm801, 1, 0
        %v1314 = vsel %vm802, 1, 0
        %v1315 = vsel %vm803, 1, 0
        %v1316 = vsel %vm804, 1, 0
        %v1317 = vsel %vm805, 1, 0
        %v1318 = vsel %vm806, 1, 0
        %v1319 = vsel %vm807, 1, 0
        %v1320 = vsel %vm808, 1, 0
        %v1321 = vsel %vm809, 1, 0
        %v1322 = vsel %vm810, 1, 0
        %v1323 = vsel %vm811, 1, 0
        %v1324 = vsel %vm812, 1, 0
        %v1325 = vsel %vm813, 1, 0
        %v1326 = vsel %vm814, 1, 0
        %v1327 = vsel %vm815, 1, 0
        %v1328 = vsel %vm816, 1, 0
        %v1329 = vsel %vm817, 1, 0
        %v1330 = vsel %vm818, 1, 0
        %v1331 = vsel %vm819, 1, 0
        %v1332 = vsel %vm820, 1, 0
        %v1333 = vsel %vm821, 1, 0
        %v1334 = vsel %vm822, 1, 0
        %v1335 = vsel %vm823, 1, 0
        %v1336 = vsel %vm824, 1, 0
        %v1337 = vsel %vm825, 1, 0
        %v1338 = vsel %vm826, 1, 0
        %v1339 = vsel %vm827, 1, 0
        %v1340 = vsel %vm828, 1, 0
        %v1341 = vsel %vm829, 1, 0
        %v1342 = vsel %vm830, 1, 0
        %v1343 = vsel %vm831, 1, 0
        %v1344 = vsel %vm832, 1, 0
        %v1345 = vsel %vm833, 1, 0
        %v1346 = vsel %vm834, 1, 0
        %v1347 = vsel %vm835, 1, 0
        %v1348 = vsel %vm836, 1, 0
        %v1349 = vsel %vm837, 1, 0
        %v1350 = vsel %vm838, 1, 0
        %v1351 = vsel %vm839, 1, 0
        %v1352 = vsel %vm840, 1, 0
        %v1353 = vsel %vm841, 1, 0
        %v1354 = vsel %vm842, 1, 0
        %v1355 = vsel %vm843, 1, 0
        %v1356 = vsel %vm844, 1, 0
        %v1357 = vsel %vm845, 1, 0
        %v1358 = vsel %vm846, 1, 0
        %v1359 = vsel %vm847, 1, 0
        %v1360 = vsel %vm848, 1, 0
        %v1361 = vsel %vm849, 1, 0
        %v1362 = vsel %vm850, 1, 0
        %v1363 = vsel %vm851, 1, 0
        %v1364 = vsel %vm852, 1, 0
        %v1365 = vsel %vm853, 1, 0
        %v1366 = vsel %vm854, 1, 0
        %v1367 = vsel %vm855, 1, 0
        %v1368 = vsel %vm856, 1, 0
        %v1369 = vsel %vm857, 1, 0
        %v1370 = vsel %vm858, 1, 0
        %v1371 = vsel %vm859, 1, 0
        %v1372 = vsel %vm860, 1, 0
        %v1373 = vsel %vm861, 1, 0
        %v1374 = vsel %vm862, 1, 0
        %v1375 = vsel %vm863, 1, 0
        %v1376 = vsel %vm864, 1, 0
        %v1377 = vsel %vm865, 1, 0
        %v1378 = vsel %vm866, 1, 0
        %v1379 = vsel %vm867, 1, 0
        %v1380 = vsel %vm868, 1, 0
        %v1381 = vsel %vm869, 1, 0
        %v1382 = vsel %vm870, 1, 0
        %v1383 = vsel %vm871, 1, 0
        %v1384 = vsel %vm872, 1, 0
        %v1385 = vsel %vm873, 1, 0
        %v1386 = vsel %vm874, 1, 0
        %v1387 = vsel %vm875, 1, 0
        %v1388 = vsel %vm876, 1, 0
        %v1389 = vsel %vm877, 1, 0
        %v1390 = vsel %vm878, 1, 0
        %v1391 = vsel %vm879, 1, 0
        %v1392 = vsel %vm880, 1, 0
        %v1393 = vsel %vm881, 1, 0
        %v1394 = vsel %vm882, 1, 0
        %v1395 = vsel %vm883, 1, 0
        %v1396 = vsel %vm884, 1, 0
        %v1397 = vsel %vm885, 1, 0
        %v1398 = vsel %vm886, 1, 0
        %v1399 = vsel %vm887, 1, 0
        %v1400 = vsel %vm888, 1, 0
        %v1401 = vsel %vm889, 1, 0
        %v1402 = vsel %vm890, 1, 0
        %v1403 = vsel %vm891, 1, 0
        %v1404 = vsel %vm892, 1, 0
        %v1405 = vsel %vm893, 1, 0
        %v1406 = vsel %vm894, 1, 0
        %v1407 = vsel %vm895, 1, 0
        %v1408 = vsel %vm896, 1, 0
        %v1409 = vsel %vm897, 1, 0
        %v1410 = vsel %vm898, 1, 0
        %v1411 = vsel %vm899, 1, 0
        %v1412 = vsel %vm900, 1, 0
        %v1413 = vsel %vm901, 1, 0
        %v1414 = vsel %vm902, 1, 0
        %v1415 = vsel %vm903, 1, 0
        %v1416 = vsel %vm904, 1, 0
        %v1417 = vsel %vm905, 1, 0
        %v1418 = vsel %vm906, 1, 0
        %v1419 = vsel %vm907, 1, 0
        %v1420 = vsel %vm908, 1, 0
        %v1421 = vsel %vm909, 1, 0
        %v1422 = vsel %vm910, 1, 0
        %v1423 = vsel %vm911, 1, 0
        %v1424 = vsel %vm912, 1, 0
        %v1425 = vsel %vm913, 1, 0
        %v1426 = vsel %vm914, 1, 0
        %v1427 = vsel %vm915, 1, 0
        %v1428 = vsel %vm916, 1, 0
        %v1429 = vsel %vm917, 1, 0
        %v1430 = vsel %vm918, 1, 0
        %v1431 = vsel %vm919, 1, 0
        %v1432 = vsel %vm920, 1, 0
        %v1433 = vsel %vm921, 1, 0
        %v1434 = vsel %vm922, 1, 0
        %v1435 = vsel %vm923, 1, 0
        %v1436 = vsel %vm924, 1, 0
        %v1437 = vsel %vm925, 1, 0
        %v1438 = vsel %vm926, 1, 0
        %v1439 = vsel %vm927, 1, 0
        %v1440 = vsel %vm928, 1, 0
        %v1441 = vsel %vm929, 1, 0
        %v1442 = vsel %vm930, 1, 0
        %v1443 = vsel %vm931, 1, 0
        %v1444 = vsel %vm932, 1, 0
        %v1445 = vsel %vm933, 1, 0
        %v1446 = vsel %vm934, 1, 0
        %v1447 = vsel %vm935, 1, 0
        %v1448 = vsel %vm936, 1, 0
        %v1449 = vsel %vm937, 1, 0
        %v1450 = vsel %vm938, 1, 0
        %v1451 = vsel %vm939, 1, 0
        %v1452 = vsel %vm940, 1, 0
        %v1453 = vsel %vm941, 1, 0
        %v1454 = vsel %vm942, 1, 0
        %v1455 = vsel %vm943, 1, 0
        %v1456 = vsel %vm944, 1, 0
        %v1457 = vsel %vm945, 1, 0
        %v1458 = vsel %vm946, 1, 0
        %v1459 = vsel %vm947, 1, 0
        %v1460 = vsel %vm948, 1, 0
        %v1461 = vsel %vm949, 1, 0
        %v1462 = vsel %vm950, 1, 0
        %v1463 = vsel %vm951, 1, 0
        %v1464 = vsel %vm952, 1, 0
        %v1465 = vsel %vm953, 1, 0
        %v1466 = vsel %vm954, 1, 0
        %v1467 = vsel %vm955, 1, 0
        %v1468 = vsel %vm956, 1, 0
        %v1469 = vsel %vm957, 1, 0
        %v1470 = vsel %vm958, 1, 0
        %v1471 = vsel %vm959, 1, 0
        %v1472 = vsel %vm960, 1, 0
        %v1473 = vsel %vm961, 1, 0
        %v1474 = vsel %vm962, 1, 0
        %v1475 = vsel %vm963, 1, 0
        %v1476 = vsel %vm964, 1, 0
        %v1477 = vsel %vm965, 1, 0
        %v1478 = vsel %vm966, 1, 0
        %v1479 = vsel %vm967, 1, 0
        %v1480 = vsel %vm968, 1, 0
        %v1481 = vsel %vm969, 1, 0
        %v1482 = vsel %vm970, 1, 0
        %v1483 = vsel %vm971, 1, 0
        %v1484 = vsel %vm972, 1, 0
        %v1485 = vsel %vm973, 1, 0
        %v1486 = vsel %vm974, 1, 0
        %v1487 = vsel %vm975, 1, 0
        %v1488 = vsel %vm976, 1, 0
        %v1489 = vsel %vm977, 1, 0
        %v1490 = vsel %vm978, 1, 0
        %v1491 = vsel %vm979, 1, 0
        %v1492 = vsel %vm980, 1, 0
        %v1493 = vsel %vm981, 1, 0
        %v1494 = vsel %vm982, 1, 0
        %v1495 = vsel %vm983, 1, 0
        %v1496 = vsel %vm984, 1, 0
        %v1497 = vsel %vm985, 1, 0
        %v1498 = vsel %vm986, 1, 0
        %v1499 = vsel %vm987, 1, 0
        %v1500 = vsel %vm988, 1, 0
        %v1501 = vsel %vm989, 1, 0
        %v1502 = vsel %vm990, 1, 0
        %v1503 = vsel %vm991, 1, 0
        %v1504 = vsel %vm992, 1, 0
        %v1505 = vsel %vm993, 1, 0
        %v1506 = vsel %vm994, 1, 0
        %v1507 = vsel %vm995, 1, 0
        %v1508 = vsel %vm996, 1, 0
        %v1509 = vsel %vm997, 1, 0
        %v1510 = vsel %vm998, 1, 0
        %v1511 = vsel %vm999, 1, 0
        %v1512 = vsel %vm1000, 1, 0
        %v1513 = vsel %vm1001, 1, 0
        %v1514 = vsel %vm1002, 1, 0
        %v1515 = vsel %vm1003, 1, 0
        %v1516 = vsel %vm1004, 1, 0
        %v1517 = vsel %vm1005, 1, 0
        %v1518 = vsel %vm1006, 1, 0
        %v1519 = vsel %vm1007, 1, 0
        %v1520 = vsel %vm1008, 1, 0
        %v1521 = vsel %vm1009, 1, 0
        %v1522 = vsel %vm1010, 1, 0
        %v1523 = vsel %vm1011, 1, 0
        %v1524 = vsel %vm1012, 1, 0
        %v1525 = vsel %vm1013, 1, 0
        %v1526 = vsel %vm1014, 1, 0
        %v1527 = vsel %vm1015, 1, 0
        %v1528 = vsel %vm1016, 1, 0
        %v1529 = vsel %vm1017, 1, 0
        %v1530 = vsel %vm1018, 1, 0
        %v1531 = vsel %vm1019, 1, 0
        %v1532 = vsel %vm1020, 1, 0
        %v1533 = vsel %vm1021, 1, 0
        %v1534 = vsel %vm1022, 1, 0
        %v1535 = vsel %vm1023, 1, 0
        %v1536 = vsel %vm1024, 1, 0
        %v1537 = vsel %vm1025, 1, 0
        %v1538 = vsel %vm1026, 1, 0
        %v1539 = vsel %vm1027, 1, 0
        %v1540 = vsel %vm1028, 1, 0
        %v1541 = vsel %vm1029, 1, 0
        %v1542 = vsel %vm1030, 1, 0
        %v1543 = vsel %vm1031, 1, 0
        %v1544 = vsel %vm1032, 1, 0
        %v1545 = vsel %vm1033, 1, 0
        %v1546 = vsel %vm1034, 1, 0
        %v1547 = vsel %vm1035, 1, 0
        %v1548 = vsel %vm1036, 1, 0
        %v1549 = vsel %vm1037, 1, 0
        %v1550 = vsel %vm1038, 1, 0
        %v1551 = vsel %vm1039, 1, 0
        %v1552 = vsel %vm1040, 1, 0
        %v1553 = vsel %vm1041, 1, 0
        %v1554 = vsel %vm1042, 1, 0
        %v1555 = vsel %vm1043, 1, 0
        %v1556 = vsel %vm1044, 1, 0
        %v1557 = vsel %vm1045, 1, 0
        %v1558 = vsel %vm1046, 1, 0
        %v1559 = vsel %vm1047, 1, 0
        %v1560 = vsel %vm1048, 1, 0
        %v1561 = vsel %vm1049, 1, 0
        %v1562 = vsel %vm1050, 1, 0
        %v1563 = vsel %vm1051, 1, 0
        %v1564 = vsel %vm1052, 1, 0
        %v1565 = vsel %vm1053, 1, 0
        %v1566 = vsel %vm1054, 1, 0
        %v1567 = vsel %vm1055, 1, 0
        %v1568 = vsel %vm1056, 1, 0
        %v1569 = vsel %vm1057, 1, 0
        %v1570 = vsel %vm1058, 1, 0
        %v1571 = vsel %vm1059, 1, 0
        %v1572 = vsel %vm1060, 1, 0
        %v1573 = vsel %vm1061, 1, 0
        %v1574 = vsel %vm1062, 1, 0
        %v1575 = vsel %vm1063, 1, 0
        %v1576 = vsel %vm1064, 1, 0
        %v1577 = vsel %vm1065, 1, 0
        %v1578 = vsel %vm1066, 1, 0
        %v1579 = vsel %vm1067, 1, 0
        %v1580 = vsel %vm1068, 1, 0
        %v1581 = vsel %vm1069, 1, 0
        %v1582 = vsel %vm1070, 1, 0
        %v1583 = vsel %vm1071, 1, 0
        %v1584 = vsel %vm1072, 1, 0
        %v1585 = vsel %vm1073, 1, 0
        %v1586 = vsel %vm1074, 1, 0
        %v1587 = vsel %vm1075, 1, 0
        %v1588 = vsel %vm1076, 1, 0
        %v1589 = vsel %vm1077, 1, 0
        %v1590 = vsel %vm1078, 1, 0
        %v1591 = vsel %vm1079, 1, 0
        %v1592 = vsel %vm1080, 1, 0
        %v1593 = vsel %vm1081, 1, 0
        %v1594 = vsel %vm1082, 1, 0
        %v1595 = vsel %vm1083, 1, 0
        %v1596 = vsel %vm1084, 1, 0
        %v1597 = vsel %vm1085, 1, 0
        %v1598 = vsel %vm1086, 1, 0
        %v1599 = vsel %vm1087, 1, 0
        %v1600 = vsel %vm1088, 1, 0
        %v1601 = vsel %vm1089, 1, 0
        %v1602 = vsel %vm1090, 1, 0
        %v1603 = vsel %vm1091, 1, 0
        %v1604 = vsel %vm1092, 1, 0
        %v1605 = vsel %vm1093, 1, 0
        %v1606 = vsel %vm1094, 1, 0
        %v1607 = vsel %vm1095, 1, 0
        %v1608 = vsel %vm1096, 1, 0
        %v1609 = vsel %vm1097, 1, 0
        %v1610 = vsel %vm1098, 1, 0
        %v1611 = vsel %vm1099, 1, 0
        %v1612 = vsel %vm1100, 1, 0
        %v1613 = vsel %vm1101, 1, 0
        %v1614 = vsel %vm1102, 1, 0
        %v1615 = vsel %vm1103, 1, 0
        %v1616 = vsel %vm1104, 1, 0
        %v1617 = vsel %vm1105, 1, 0
        %v1618 = vsel %vm1106, 1, 0
        %v1619 = vsel %vm1107, 1, 0
        %v1620 = vsel %vm1108, 1, 0
        %v1621 = vsel %vm1109, 1, 0
        %v1622 = vsel %vm1110, 1, 0
        %v1623 = vsel %vm1111, 1, 0
        %v1624 = vsel %vm1112, 1, 0
        %v1625 = vsel %vm1113, 1, 0
        %v1626 = vsel %vm1114, 1, 0
        %v1627 = vsel %vm1115, 1, 0
        %v1628 = vsel %vm1116, 1, 0
        %v1629 = vsel %vm1117, 1, 0
        %v1630 = vsel %vm1118, 1, 0
        %v1631 = vsel %vm1119, 1, 0
        %v1632 = vsel %vm1120, 1, 0
        %v1633 = vsel %vm1121, 1, 0
        %v1634 = vsel %vm1122, 1, 0
        %v1635 = vsel %vm1123, 1, 0
        %v1636 = vsel %vm1124, 1, 0
        %v1637 = vsel %vm1125, 1, 0
        %v1638 = vsel %vm1126, 1, 0
        %v1639 = vsel %vm1127, 1, 0
        %v1640 = vsel %vm1128, 1, 0
        %v1641 = vsel %vm1129, 1, 0
        %v1642 = vsel %vm1130, 1, 0
        %v1643 = vsel %vm1131, 1, 0
        %v1644 = vsel %vm1132, 1, 0
        %v1645 = vsel %vm1133, 1, 0
        %v1646 = vsel %vm1134, 1, 0
        %v1647 = vsel %vm1135, 1, 0
        %v1648 = vsel %vm1136, 1, 0
        %v1649 = vsel %vm1137, 1, 0
        %v1650 = vsel %vm1138, 1, 0
        %v1651 = vsel %vm1139, 1, 0
        %v1652 = vsel %vm1140, 1, 0
        %v1653 = vsel %vm1141, 1, 0
        %v1654 = vsel %vm1142, 1, 0
        %v1655 = vsel %vm1143, 1, 0
        %v1656 = vsel %vm1144, 1, 0
        %v1657 = vsel %vm1145, 1, 0
        %v1658 = vsel %vm1146, 1, 0
        %v1659 = vsel %vm1147, 1, 0
        %v1660 = vsel %vm1148, 1, 0
        %v1661 = vsel %vm1149, 1, 0
        %v1662 = vsel %vm1150, 1, 0
        %v1663 = vsel %vm1151, 1, 0
        %v1664 = vsel %vm1152, 1, 0
        %v1665 = vsel %vm1153, 1, 0
        %v1666 = vsel %vm1154, 1, 0
        %v1667 = vsel %vm1155, 1, 0
        %v1668 = vsel %vm1156, 1, 0
        %v1669 = vsel %vm1157, 1, 0
        %v1670 = vsel %vm1158, 1, 0
        %v1671 = vsel %vm1159, 1, 0
        %v1672 = vsel %vm1160, 1, 0
        %v1673 = vsel %vm1161, 1, 0
        %v1674 = vsel %vm1162, 1, 0
        %v1675 = vsel %vm1163, 1, 0
        %v1676 = vsel %vm1164, 1, 0
        %v1677 = vsel %vm1165, 1, 0
        %v1678 = vsel %vm1166, 1, 0
        %v1679 = vsel %vm1167, 1, 0
        %v1680 = vsel %vm1168, 1, 0
        %v1681 = vsel %vm1169, 1, 0
        %v1682 = vsel %vm1170, 1, 0
        %v1683 = vsel %vm1171, 1, 0
        %v1684 = vsel %vm1172, 1, 0
        %v1685 = vsel %vm1173, 1, 0
        %v1686 = vsel %vm1174, 1, 0
        %v1687 = vsel %vm1175, 1, 0
        %v1688 = vsel %vm1176, 1, 0
        %v1689 = vsel %vm1177, 1, 0
        %v1690 = vsel %vm1178, 1, 0
        %v1691 = vsel %vm1179, 1, 0
        %v1692 = vsel %vm1180, 1, 0
        %v1693 = vsel %vm1181, 1, 0
        %v1694 = vsel %vm1182, 1, 0
        %v1695 = vsel %vm1183, 1, 0
        %v1696 = vsel %vm1184, 1, 0
        %v1697 = vsel %vm1185, 1, 0
        %v1698 = vsel %vm1186, 1, 0
        %v1699 = vsel %vm1187, 1, 0
        %v1700 = vsel %vm1188, 1, 0
        %v1701 = vsel %vm1189, 1, 0
        %v1702 = vsel %vm1190, 1, 0
        %v1703 = vsel %vm1191, 1, 0
        %v1704 = vsel %vm1192, 1, 0
        %v1705 = vsel %vm1193, 1, 0
        %v1706 = vsel %vm1194, 1, 0
        %v1707 = vsel %vm1195, 1, 0
        %v1708 = vsel %vm1196, 1, 0
        %v1709 = vsel %vm1197, 1, 0
        %v1710 = vsel %vm1198, 1, 0
        %v1711 = vsel %vm1199, 1, 0
        %v1712 = vsel %vm1200, 1, 0
        %v1713 = vsel %vm1201, 1, 0
        %v1714 = vsel %vm1202, 1, 0
        %v1715 = vsel %vm1203, 1, 0
        %v1716 = vsel %vm1204, 1, 0
        %v1717 = vsel %vm1205, 1, 0
        %v1718 = vsel %vm1206, 1, 0
        %v1719 = vsel %vm1207, 1, 0
        %v1720 = vsel %vm1208, 1, 0
        %v1721 = vsel %vm1209, 1, 0
        %v1722 = vsel %vm1210, 1, 0
        %v1723 = vsel %vm1211, 1, 0
        %v1724 = vsel %vm1212, 1, 0
        %v1725 = vsel %vm1213, 1, 0
        %v1726 = vsel %vm1214, 1, 0
        %v1727 = vsel %vm1215, 1, 0
        %v1728 = vsel %vm1216, 1, 0
        %v1729 = vsel %vm1217, 1, 0
        %v1730 = vsel %vm1218, 1, 0
        %v1731 = vsel %vm1219, 1, 0
        %v1732 = vsel %vm1220, 1, 0
        %v1733 = vsel %vm1221, 1, 0
        %v1734 = vsel %vm1222, 1, 0
        %v1735 = vsel %vm1223, 1, 0
        %v1736 = vsel %vm1224, 1, 0
        %v1737 = vsel %vm1225, 1, 0
        %v1738 = vsel %vm1226, 1, 0
        %v1739 = vsel %vm1227, 1, 0
        %v1740 = vsel %vm1228, 1, 0
        %v1741 = vsel %vm1229, 1, 0
        %v1742 = vsel %vm1230, 1, 0
        %v1743 = vsel %vm1231, 1, 0
        %v1744 = vsel %vm1232, 1, 0
        %v1745 = vsel %vm1233, 1, 0
        %v1746 = vsel %vm1234, 1, 0
        %v1747 = vsel %vm1235, 1, 0
        %v1748 = vsel %vm1236, 1, 0
        %v1749 = vsel %vm1237, 1, 0
        %v1750 = vsel %vm1238, 1, 0
        %v1751 = vsel %vm1239, 1, 0
        %v1752 = vsel %vm1240, 1, 0
        %v1753 = vsel %vm1241, 1, 0
        %v1754 = vsel %vm1242, 1, 0
        %v1755 = vsel %vm1243, 1, 0
        %v1756 = vsel %vm1244, 1, 0
        %v1757 = vsel %vm1245, 1, 0
        %v1758 = vsel %vm1246, 1, 0
        %v1759 = vsel %vm1247, 1, 0
        %v1760 = vsel %vm1248, 1, 0
        %v1761 = vsel %vm1249, 1, 0
        %v1762 = vsel %vm1250, 1, 0
        %v1763 = vsel %vm1251, 1, 0
        %v1764 = vsel %vm1252, 1, 0
        %v1765 = vsel %vm1253, 1, 0
        %v1766 = vsel %vm1254, 1, 0
        %v1767 = vsel %vm1255, 1, 0
        %v1768 = vsel %vm1256, 1, 0
        %v1769 = vsel %vm1257, 1, 0
        %v1770 = vsel %vm1258, 1, 0
        %v1771 = vsel %vm1259, 1, 0
        %v1772 = vsel %vm1260, 1, 0
        %v1773 = vsel %vm1261, 1, 0
        %v1774 = vsel %vm1262, 1, 0
        %v1775 = vsel %vm1263, 1, 0
        %v1776 = vsel %vm1264, 1, 0
        %v1777 = vsel %vm1265, 1, 0
        %v1778 = vsel %vm1266, 1, 0
        %v1779 = vsel %vm1267, 1, 0
        %v1780 = vsel %vm1268, 1, 0
        %v1781 = vsel %vm1269, 1, 0
        %v1782 = vsel %vm1270, 1, 0
        %v1783 = vsel %vm1271, 1, 0
        %v1784 = vsel %vm1272, 1, 0
        %v1785 = vsel %vm1273, 1, 0
        %v1786 = vsel %vm1274, 1, 0
        %v1787 = vsel %vm1275, 1, 0
        %v1788 = vsel %vm1276, 1, 0
        %v1789 = vsel %vm1277, 1, 0
        %v1790 = vsel %vm1278, 1, 0
        %v1791 = vsel %vm1279, 1, 0
        %v1792 = vsel %vm1280, 1, 0
        %v1793 = vsel %vm1281, 1, 0
        %v1794 = vsel %vm1282, 1, 0
        %v1795 = vsel %vm1283, 1, 0
        %v1796 = vsel %vm1284, 1, 0
        %v1797 = vsel %vm1285, 1, 0
        %v1798 = vsel %vm1286, 1, 0
        %v1799 = vsel %vm1287, 1, 0
        %v1800 = vsel %vm1288, 1, 0
        %v1801 = vsel %vm1289, 1, 0
        %v1802 = vsel %vm1290, 1, 0
        %v1803 = vsel %vm1291, 1, 0
        %v1804 = vsel %vm1292, 1, 0
        %v1805 = vsel %vm1293, 1, 0
        %v1806 = vsel %vm1294, 1, 0
        %v1807 = vsel %vm1295, 1, 0
        %v1808 = vsel %vm1296, 1, 0
        %v1809 = vsel %vm1297, 1, 0
        %v1810 = vsel %vm1298, 1, 0
        %v1811 = vcvt.s32.f32 %v1299
        %v1812 = vcvt.s32.f32 %v1300
        %v1813 = vcvt.s32.f32 %v1301
        %v1814 = vcvt.s32.f32 %v1302
        %v1815 = vcvt.s32.f32 %v1303
        %v1816 = vcvt.s32.f32 %v1304
        %v1817 = vcvt.s32.f32 %v1305
        %v1818 = vcvt.s32.f32 %v1306
        %v1819 = vcvt.s32.f32 %v1307
        %v1820 = vcvt.s32.f32 %v1308
        %v1821 = vcvt.s32.f32 %v1309
        %v1822 = vcvt.s32.f32 %v1310
        %v1823 = vcvt.s32.f32 %v1311
        %v1824 = vcvt.s32.f32 %v1312
        %v1825 = vcvt.s32.f32 %v1313
        %v1826 = vcvt.s32.f32 %v1314
        %v1827 = vcvt.s32.f32 %v1315
        %v1828 = vcvt.s32.f32 %v1316
        %v1829 = vcvt.s32.f32 %v1317
        %v1830 = vcvt.s32.f32 %v1318
        %v1831 = vcvt.s32.f32 %v1319
        %v1832 = vcvt.s32.f32 %v1320
        %v1833 = vcvt.s32.f32 %v1321
        %v1834 = vcvt.s32.f32 %v1322
        %v1835 = vcvt.s32.f32 %v1323
        %v1836 = vcvt.s32.f32 %v1324
        %v1837 = vcvt.s32.f32 %v1325
        %v1838 = vcvt.s32.f32 %v1326
        %v1839 = vcvt.s32.f32 %v1327
        %v1840 = vcvt.s32.f32 %v1328
        %v1841 = vcvt.s32.f32 %v1329
        %v1842 = vcvt.s32.f32 %v1330
        %v1843 = vcvt.s32.f32 %v1331
        %v1844 = vcvt.s32.f32 %v1332
        %v1845 = vcvt.s32.f32 %v1333
        %v1846 = vcvt.s32.f32 %v1334
        %v1847 = vcvt.s32.f32 %v1335
        %v1848 = vcvt.s32.f32 %v1336
        %v1849 = vcvt.s32.f32 %v1337
        %v1850 = vcvt.s32.f32 %v1338
        %v1851 = vcvt.s32.f32 %v1339
        %v1852 = vcvt.s32.f32 %v1340
        %v1853 = vcvt.s32.f32 %v1341
        %v1854 = vcvt.s32.f32 %v1342
        %v1855 = vcvt.s32.f32 %v1343
        %v1856 = vcvt.s32.f32 %v1344
        %v1857 = vcvt.s32.f32 %v1345
        %v1858 = vcvt.s32.f32 %v1346
        %v1859 = vcvt.s32.f32 %v1347
        %v1860 = vcvt.s32.f32 %v1348
        %v1861 = vcvt.s32.f32 %v1349
        %v1862 = vcvt.s32.f32 %v1350
        %v1863 = vcvt.s32.f32 %v1351
        %v1864 = vcvt.s32.f32 %v1352
        %v1865 = vcvt.s32.f32 %v1353
        %v1866 = vcvt.s32.f32 %v1354
        %v1867 = vcvt.s32.f32 %v1355
        %v1868 = vcvt.s32.f32 %v1356
        %v1869 = vcvt.s32.f32 %v1357
        %v1870 = vcvt.s32.f32 %v1358
        %v1871 = vcvt.s32.f32 %v1359
        %v1872 = vcvt.s32.f32 %v1360
        %v1873 = vcvt.s32.f32 %v1361
        %v1874 = vcvt.s32.f32 %v1362
        %v1875 = vcvt.s32.f32 %v1363
        %v1876 = vcvt.s32.f32 %v1364
        %v1877 = vcvt.s32.f32 %v1365
        %v1878 = vcvt.s32.f32 %v1366
        %v1879 = vcvt.s32.f32 %v1367
        %v1880 = vcvt.s32.f32 %v1368
        %v1881 = vcvt.s32.f32 %v1369
        %v1882 = vcvt.s32.f32 %v1370
        %v1883 = vcvt.s32.f32 %v1371
        %v1884 = vcvt.s32.f32 %v1372
        %v1885 = vcvt.s32.f32 %v1373
        %v1886 = vcvt.s32.f32 %v1374
        %v1887 = vcvt.s32.f32 %v1375
        %v1888 = vcvt.s32.f32 %v1376
        %v1889 = vcvt.s32.f32 %v1377
        %v1890 = vcvt.s32.f32 %v1378
        %v1891 = vcvt.s32.f32 %v1379
        %v1892 = vcvt.s32.f32 %v1380
        %v1893 = vcvt.s32.f32 %v1381
        %v1894 = vcvt.s32.f32 %v1382
        %v1895 = vcvt.s32.f32 %v1383
        %v1896 = vcvt.s32.f32 %v1384
        %v1897 = vcvt.s32.f32 %v1385
        %v1898 = vcvt.s32.f32 %v1386
        %v1899 = vcvt.s32.f32 %v1387
        %v1900 = vcvt.s32.f32 %v1388
        %v1901 = vcvt.s32.f32 %v1389
        %v1902 = vcvt.s32.f32 %v1390
        %v1903 = vcvt.s32.f32 %v1391
        %v1904 = vcvt.s32.f32 %v1392
        %v1905 = vcvt.s32.f32 %v1393
        %v1906 = vcvt.s32.f32 %v1394
        %v1907 = vcvt.s32.f32 %v1395
        %v1908 = vcvt.s32.f32 %v1396
        %v1909 = vcvt.s32.f32 %v1397
        %v1910 = vcvt.s32.f32 %v1398
        %v1911 = vcvt.s32.f32 %v1399
        %v1912 = vcvt.s32.f32 %v1400
        %v1913 = vcvt.s32.f32 %v1401
        %v1914 = vcvt.s32.f32 %v1402
        %v1915 = vcvt.s32.f32 %v1403
        %v1916 = vcvt.s32.f32 %v1404
        %v1917 = vcvt.s32.f32 %v1405
        %v1918 = vcvt.s32.f32 %v1406
        %v1919 = vcvt.s32.f32 %v1407
        %v1920 = vcvt.s32.f32 %v1408
        %v1921 = vcvt.s32.f32 %v1409
        %v1922 = vcvt.s32.f32 %v1410
        %v1923 = vcvt.s32.f32 %v1411
        %v1924 = vcvt.s32.f32 %v1412
        %v1925 = vcvt.s32.f32 %v1413
        %v1926 = vcvt.s32.f32 %v1414
        %v1927 = vcvt.s32.f32 %v1415
        %v1928 = vcvt.s32.f32 %v1416
        %v1929 = vcvt.s32.f32 %v1417
        %v1930 = vcvt.s32.f32 %v1418
        %v1931 = vcvt.s32.f32 %v1419
        %v1932 = vcvt.s32.f32 %v1420
        %v1933 = vcvt.s32.f32 %v1421
        %v1934 = vcvt.s32.f32 %v1422
        %v1935 = vcvt.s32.f32 %v1423
        %v1936 = vcvt.s32.f32 %v1424
        %v1937 = vcvt.s32.f32 %v1425
        %v1938 = vcvt.s32.f32 %v1426
        %v1939 = vcvt.s32.f32 %v1427
        %v1940 = vcvt.s32.f32 %v1428
        %v1941 = vcvt.s32.f32 %v1429
        %v1942 = vcvt.s32.f32 %v1430
        %v1943 = vcvt.s32.f32 %v1431
        %v1944 = vcvt.s32.f32 %v1432
        %v1945 = vcvt.s32.f32 %v1433
        %v1946 = vcvt.s32.f32 %v1434
        %v1947 = vcvt.s32.f32 %v1435
        %v1948 = vcvt.s32.f32 %v1436
        %v1949 = vcvt.s32.f32 %v1437
        %v1950 = vcvt.s32.f32 %v1438
        %v1951 = vcvt.s32.f32 %v1439
        %v1952 = vcvt.s32.f32 %v1440
        %v1953 = vcvt.s32.f32 %v1441
        %v1954 = vcvt.s32.f32 %v1442
        %v1955 = vcvt.s32.f32 %v1443
        %v1956 = vcvt.s32.f32 %v1444
        %v1957 = vcvt.s32.f32 %v1445
        %v1958 = vcvt.s32.f32 %v1446
        %v1959 = vcvt.s32.f32 %v1447
        %v1960 = vcvt.s32.f32 %v1448
        %v1961 = vcvt.s32.f32 %v1449
        %v1962 = vcvt.s32.f32 %v1450
        %v1963 = vcvt.s32.f32 %v1451
        %v1964 = vcvt.s32.f32 %v1452
        %v1965 = vcvt.s32.f32 %v1453
        %v1966 = vcvt.s32.f32 %v1454
        %v1967 = vcvt.s32.f32 %v1455
        %v1968 = vcvt.s32.f32 %v1456
        %v1969 = vcvt.s32.f32 %v1457
        %v1970 = vcvt.s32.f32 %v1458
        %v1971 = vcvt.s32.f32 %v1459
        %v1972 = vcvt.s32.f32 %v1460
        %v1973 = vcvt.s32.f32 %v1461
        %v1974 = vcvt.s32.f32 %v1462
        %v1975 = vcvt.s32.f32 %v1463
        %v1976 = vcvt.s32.f32 %v1464
        %v1977 = vcvt.s32.f32 %v1465
        %v1978 = vcvt.s32.f32 %v1466
        %v1979 = vcvt.s32.f32 %v1467
        %v1980 = vcvt.s32.f32 %v1468
        %v1981 = vcvt.s32.f32 %v1469
        %v1982 = vcvt.s32.f32 %v1470
        %v1983 = vcvt.s32.f32 %v1471
        %v1984 = vcvt.s32.f32 %v1472
        %v1985 = vcvt.s32.f32 %v1473
        %v1986 = vcvt.s32.f32 %v1474
        %v1987 = vcvt.s32.f32 %v1475
        %v1988 = vcvt.s32.f32 %v1476
        %v1989 = vcvt.s32.f32 %v1477
        %v1990 = vcvt.s32.f32 %v1478
        %v1991 = vcvt.s32.f32 %v1479
        %v1992 = vcvt.s32.f32 %v1480
        %v1993 = vcvt.s32.f32 %v1481
        %v1994 = vcvt.s32.f32 %v1482
        %v1995 = vcvt.s32.f32 %v1483
        %v1996 = vcvt.s32.f32 %v1484
        %v1997 = vcvt.s32.f32 %v1485
        %v1998 = vcvt.s32.f32 %v1486
        %v1999 = vcvt.s32.f32 %v1487
        %v2000 = vcvt.s32.f32 %v1488
        %v2001 = vcvt.s32.f32 %v1489
        %v2002 = vcvt.s32.f32 %v1490
        %v2003 = vcvt.s32.f32 %v1491
        %v2004 = vcvt.s32.f32 %v1492
        %v2005 = vcvt.s32.f32 %v1493
        %v2006 = vcvt.s32.f32 %v1494
        %v2007 = vcvt.s32.f32 %v1495
        %v2008 = vcvt.s32.f32 %v1496
        %v2009 = vcvt.s32.f32 %v1497
        %v2010 = vcvt.s32.f32 %v1498
        %v2011 = vcvt.s32.f32 %v1499
        %v2012 = vcvt.s32.f32 %v1500
        %v2013 = vcvt.s32.f32 %v1501
        %v2014 = vcvt.s32.f32 %v1502
        %v2015 = vcvt.s32.f32 %v1503
        %v2016 = vcvt.s32.f32 %v1504
        %v2017 = vcvt.s32.f32 %v1505
        %v2018 = vcvt.s32.f32 %v1506
        %v2019 = vcvt.s32.f32 %v1507
        %v2020 = vcvt.s32.f32 %v1508
        %v2021 = vcvt.s32.f32 %v1509
        %v2022 = vcvt.s32.f32 %v1510
        %v2023 = vcvt.s32.f32 %v1511
        %v2024 = vcvt.s32.f32 %v1512
        %v2025 = vcvt.s32.f32 %v1513
        %v2026 = vcvt.s32.f32 %v1514
        %v2027 = vcvt.s32.f32 %v1515
        %v2028 = vcvt.s32.f32 %v1516
        %v2029 = vcvt.s32.f32 %v1517
        %v2030 = vcvt.s32.f32 %v1518
        %v2031 = vcvt.s32.f32 %v1519
        %v2032 = vcvt.s32.f32 %v1520
        %v2033 = vcvt.s32.f32 %v1521
        %v2034 = vcvt.s32.f32 %v1522
        %v2035 = vcvt.s32.f32 %v1523
        %v2036 = vcvt.s32.f32 %v1524
        %v2037 = vcvt.s32.f32 %v1525
        %v2038 = vcvt.s32.f32 %v1526
        %v2039 = vcvt.s32.f32 %v1527
        %v2040 = vcvt.s32.f32 %v1528
        %v2041 = vcvt.s32.f32 %v1529
        %v2042 = vcvt.s32.f32 %v1530
        %v2043 = vcvt.s32.f32 %v1531
        %v2044 = vcvt.s32.f32 %v1532
        %v2045 = vcvt.s32.f32 %v1533
        %v2046 = vcvt.s32.f32 %v1534
        %v2047 = vcvt.s32.f32 %v1535
        %v2048 = vcvt.s32.f32 %v1536
        %v2049 = vcvt.s32.f32 %v1537
        %v2050 = vcvt.s32.f32 %v1538
        %v2051 = vcvt.s32.f32 %v1539
        %v2052 = vcvt.s32.f32 %v1540
        %v2053 = vcvt.s32.f32 %v1541
        %v2054 = vcvt.s32.f32 %v1542
        %v2055 = vcvt.s32.f32 %v1543
        %v2056 = vcvt.s32.f32 %v1544
        %v2057 = vcvt.s32.f32 %v1545
        %v2058 = vcvt.s32.f32 %v1546
        %v2059 = vcvt.s32.f32 %v1547
        %v2060 = vcvt.s32.f32 %v1548
        %v2061 = vcvt.s32.f32 %v1549
        %v2062 = vcvt.s32.f32 %v1550
        %v2063 = vcvt.s32.f32 %v1551
        %v2064 = vcvt.s32.f32 %v1552
        %v2065 = vcvt.s32.f32 %v1553
        %v2066 = vcvt.s32.f32 %v1554
        %v2067 = vcvt.s32.f32 %v1555
        %v2068 = vcvt.s32.f32 %v1556
        %v2069 = vcvt.s32.f32 %v1557
        %v2070 = vcvt.s32.f32 %v1558
        %v2071 = vcvt.s32.f32 %v1559
        %v2072 = vcvt.s32.f32 %v1560
        %v2073 = vcvt.s32.f32 %v1561
        %v2074 = vcvt.s32.f32 %v1562
        %v2075 = vcvt.s32.f32 %v1563
        %v2076 = vcvt.s32.f32 %v1564
        %v2077 = vcvt.s32.f32 %v1565
        %v2078 = vcvt.s32.f32 %v1566
        %v2079 = vcvt.s32.f32 %v1567
        %v2080 = vcvt.s32.f32 %v1568
        %v2081 = vcvt.s32.f32 %v1569
        %v2082 = vcvt.s32.f32 %v1570
        %v2083 = vcvt.s32.f32 %v1571
        %v2084 = vcvt.s32.f32 %v1572
        %v2085 = vcvt.s32.f32 %v1573
        %v2086 = vcvt.s32.f32 %v1574
        %v2087 = vcvt.s32.f32 %v1575
        %v2088 = vcvt.s32.f32 %v1576
        %v2089 = vcvt.s32.f32 %v1577
        %v2090 = vcvt.s32.f32 %v1578
        %v2091 = vcvt.s32.f32 %v1579
        %v2092 = vcvt.s32.f32 %v1580
        %v2093 = vcvt.s32.f32 %v1581
        %v2094 = vcvt.s32.f32 %v1582
        %v2095 = vcvt.s32.f32 %v1583
        %v2096 = vcvt.s32.f32 %v1584
        %v2097 = vcvt.s32.f32 %v1585
        %v2098 = vcvt.s32.f32 %v1586
        %v2099 = vcvt.s32.f32 %v1587
        %v2100 = vcvt.s32.f32 %v1588
        %v2101 = vcvt.s32.f32 %v1589
        %v2102 = vcvt.s32.f32 %v1590
        %v2103 = vcvt.s32.f32 %v1591
        %v2104 = vcvt.s32.f32 %v1592
        %v2105 = vcvt.s32.f32 %v1593
        %v2106 = vcvt.s32.f32 %v1594
        %v2107 = vcvt.s32.f32 %v1595
        %v2108 = vcvt.s32.f32 %v1596
        %v2109 = vcvt.s32.f32 %v1597
        %v2110 = vcvt.s32.f32 %v1598
        %v2111 = vcvt.s32.f32 %v1599
        %v2112 = vcvt.s32.f32 %v1600
        %v2113 = vcvt.s32.f32 %v1601
        %v2114 = vcvt.s32.f32 %v1602
        %v2115 = vcvt.s32.f32 %v1603
        %v2116 = vcvt.s32.f32 %v1604
        %v2117 = vcvt.s32.f32 %v1605
        %v2118 = vcvt.s32.f32 %v1606
        %v2119 = vcvt.s32.f32 %v1607
        %v2120 = vcvt.s32.f32 %v1608
        %v2121 = vcvt.s32.f32 %v1609
        %v2122 = vcvt.s32.f32 %v1610
        %v2123 = vcvt.s32.f32 %v1611
        %v2124 = vcvt.s32.f32 %v1612
        %v2125 = vcvt.s32.f32 %v1613
        %v2126 = vcvt.s32.f32 %v1614
        %v2127 = vcvt.s32.f32 %v1615
        %v2128 = vcvt.s32.f32 %v1616
        %v2129 = vcvt.s32.f32 %v1617
        %v2130 = vcvt.s32.f32 %v1618
        %v2131 = vcvt.s32.f32 %v1619
        %v2132 = vcvt.s32.f32 %v1620
        %v2133 = vcvt.s32.f32 %v1621
        %v2134 = vcvt.s32.f32 %v1622
        %v2135 = vcvt.s32.f32 %v1623
        %v2136 = vcvt.s32.f32 %v1624
        %v2137 = vcvt.s32.f32 %v1625
        %v2138 = vcvt.s32.f32 %v1626
        %v2139 = vcvt.s32.f32 %v1627
        %v2140 = vcvt.s32.f32 %v1628
        %v2141 = vcvt.s32.f32 %v1629
        %v2142 = vcvt.s32.f32 %v1630
        %v2143 = vcvt.s32.f32 %v1631
        %v2144 = vcvt.s32.f32 %v1632
        %v2145 = vcvt.s32.f32 %v1633
        %v2146 = vcvt.s32.f32 %v1634
        %v2147 = vcvt.s32.f32 %v1635
        %v2148 = vcvt.s32.f32 %v1636
        %v2149 = vcvt.s32.f32 %v1637
        %v2150 = vcvt.s32.f32 %v1638
        %v2151 = vcvt.s32.f32 %v1639
        %v2152 = vcvt.s32.f32 %v1640
        %v2153 = vcvt.s32.f32 %v1641
        %v2154 = vcvt.s32.f32 %v1642
        %v2155 = vcvt.s32.f32 %v1643
        %v2156 = vcvt.s32.f32 %v1644
        %v2157 = vcvt.s32.f32 %v1645
        %v2158 = vcvt.s32.f32 %v1646
        %v2159 = vcvt.s32.f32 %v1647
        %v2160 = vcvt.s32.f32 %v1648
        %v2161 = vcvt.s32.f32 %v1649
        %v2162 = vcvt.s32.f32 %v1650
        %v2163 = vcvt.s32.f32 %v1651
        %v2164 = vcvt.s32.f32 %v1652
        %v2165 = vcvt.s32.f32 %v1653
        %v2166 = vcvt.s32.f32 %v1654
        %v2167 = vcvt.s32.f32 %v1655
        %v2168 = vcvt.s32.f32 %v1656
        %v2169 = vcvt.s32.f32 %v1657
        %v2170 = vcvt.s32.f32 %v1658
        %v2171 = vcvt.s32.f32 %v1659
        %v2172 = vcvt.s32.f32 %v1660
        %v2173 = vcvt.s32.f32 %v1661
        %v2174 = vcvt.s32.f32 %v1662
        %v2175 = vcvt.s32.f32 %v1663
        %v2176 = vcvt.s32.f32 %v1664
        %v2177 = vcvt.s32.f32 %v1665
        %v2178 = vcvt.s32.f32 %v1666
        %v2179 = vcvt.s32.f32 %v1667
        %v2180 = vcvt.s32.f32 %v1668
        %v2181 = vcvt.s32.f32 %v1669
        %v2182 = vcvt.s32.f32 %v1670
        %v2183 = vcvt.s32.f32 %v1671
        %v2184 = vcvt.s32.f32 %v1672
        %v2185 = vcvt.s32.f32 %v1673
        %v2186 = vcvt.s32.f32 %v1674
        %v2187 = vcvt.s32.f32 %v1675
        %v2188 = vcvt.s32.f32 %v1676
        %v2189 = vcvt.s32.f32 %v1677
        %v2190 = vcvt.s32.f32 %v1678
        %v2191 = vcvt.s32.f32 %v1679
        %v2192 = vcvt.s32.f32 %v1680
        %v2193 = vcvt.s32.f32 %v1681
        %v2194 = vcvt.s32.f32 %v1682
        %v2195 = vcvt.s32.f32 %v1683
        %v2196 = vcvt.s32.f32 %v1684
        %v2197 = vcvt.s32.f32 %v1685
        %v2198 = vcvt.s32.f32 %v1686
        %v2199 = vcvt.s32.f32 %v1687
        %v2200 = vcvt.s32.f32 %v1688
        %v2201 = vcvt.s32.f32 %v1689
        %v2202 = vcvt.s32.f32 %v1690
        %v2203 = vcvt.s32.f32 %v1691
        %v2204 = vcvt.s32.f32 %v1692
        %v2205 = vcvt.s32.f32 %v1693
        %v2206 = vcvt.s32.f32 %v1694
        %v2207 = vcvt.s32.f32 %v1695
        %v2208 = vcvt.s32.f32 %v1696
        %v2209 = vcvt.s32.f32 %v1697
        %v2210 = vcvt.s32.f32 %v1698
        %v2211 = vcvt.s32.f32 %v1699
        %v2212 = vcvt.s32.f32 %v1700
        %v2213 = vcvt.s32.f32 %v1701
        %v2214 = vcvt.s32.f32 %v1702
        %v2215 = vcvt.s32.f32 %v1703
        %v2216 = vcvt.s32.f32 %v1704
        %v2217 = vcvt.s32.f32 %v1705
        %v2218 = vcvt.s32.f32 %v1706
        %v2219 = vcvt.s32.f32 %v1707
        %v2220 = vcvt.s32.f32 %v1708
        %v2221 = vcvt.s32.f32 %v1709
        %v2222 = vcvt.s32.f32 %v1710
        %v2223 = vcvt.s32.f32 %v1711
        %v2224 = vcvt.s32.f32 %v1712
        %v2225 = vcvt.s32.f32 %v1713
        %v2226 = vcvt.s32.f32 %v1714
        %v2227 = vcvt.s32.f32 %v1715
        %v2228 = vcvt.s32.f32 %v1716
        %v2229 = vcvt.s32.f32 %v1717
        %v2230 = vcvt.s32.f32 %v1718
        %v2231 = vcvt.s32.f32 %v1719
        %v2232 = vcvt.s32.f32 %v1720
        %v2233 = vcvt.s32.f32 %v1721
        %v2234 = vcvt.s32.f32 %v1722
        %v2235 = vcvt.s32.f32 %v1723
        %v2236 = vcvt.s32.f32 %v1724
        %v2237 = vcvt.s32.f32 %v1725
        %v2238 = vcvt.s32.f32 %v1726
        %v2239 = vcvt.s32.f32 %v1727
        %v2240 = vcvt.s32.f32 %v1728
        %v2241 = vcvt.s32.f32 %v1729
        %v2242 = vcvt.s32.f32 %v1730
        %v2243 = vcvt.s32.f32 %v1731
        %v2244 = vcvt.s32.f32 %v1732
        %v2245 = vcvt.s32.f32 %v1733
        %v2246 = vcvt.s32.f32 %v1734
        %v2247 = vcvt.s32.f32 %v1735
        %v2248 = vcvt.s32.f32 %v1736
        %v2249 = vcvt.s32.f32 %v1737
        %v2250 = vcvt.s32.f32 %v1738
        %v2251 = vcvt.s32.f32 %v1739
        %v2252 = vcvt.s32.f32 %v1740
        %v2253 = vcvt.s32.f32 %v1741
        %v2254 = vcvt.s32.f32 %v1742
        %v2255 = vcvt.s32.f32 %v1743
        %v2256 = vcvt.s32.f32 %v1744
        %v2257 = vcvt.s32.f32 %v1745
        %v2258 = vcvt.s32.f32 %v1746
        %v2259 = vcvt.s32.f32 %v1747
        %v2260 = vcvt.s32.f32 %v1748
        %v2261 = vcvt.s32.f32 %v1749
        %v2262 = vcvt.s32.f32 %v1750
        %v2263 = vcvt.s32.f32 %v1751
        %v2264 = vcvt.s32.f32 %v1752
        %v2265 = vcvt.s32.f32 %v1753
        %v2266 = vcvt.s32.f32 %v1754
        %v2267 = vcvt.s32.f32 %v1755
        %v2268 = vcvt.s32.f32 %v1756
        %v2269 = vcvt.s32.f32 %v1757
        %v2270 = vcvt.s32.f32 %v1758
        %v2271 = vcvt.s32.f32 %v1759
        %v2272 = vcvt.s32.f32 %v1760
        %v2273 = vcvt.s32.f32 %v1761
        %v2274 = vcvt.s32.f32 %v1762
        %v2275 = vcvt.s32.f32 %v1763
        %v2276 = vcvt.s32.f32 %v1764
        %v2277 = vcvt.s32.f32 %v1765
        %v2278 = vcvt.s32.f32 %v1766
        %v2279 = vcvt.s32.f32 %v1767
        %v2280 = vcvt.s32.f32 %v1768
        %v2281 = vcvt.s32.f32 %v1769
        %v2282 = vcvt.s32.f32 %v1770
        %v2283 = vcvt.s32.f32 %v1771
        %v2284 = vcvt.s32.f32 %v1772
        %v2285 = vcvt.s32.f32 %v1773
        %v2286 = vcvt.s32.f32 %v1774
        %v2287 = vcvt.s32.f32 %v1775
        %v2288 = vcvt.s32.f32 %v1776
        %v2289 = vcvt.s32.f32 %v1777
        %v2290 = vcvt.s32.f32 %v1778
        %v2291 = vcvt.s32.f32 %v1779
        %v2292 = vcvt.s32.f32 %v1780
        %v2293 = vcvt.s32.f32 %v1781
        %v2294 = vcvt.s32.f32 %v1782
        %v2295 = vcvt.s32.f32 %v1783
        %v2296 = vcvt.s32.f32 %v1784
        %v2297 = vcvt.s32.f32 %v1785
        %v2298 = vcvt.s32.f32 %v1786
        %v2299 = vcvt.s32.f32 %v1787
        %v2300 = vcvt.s32.f32 %v1788
        %v2301 = vcvt.s32.f32 %v1789
        %v2302 = vcvt.s32.f32 %v1790
        %v2303 = vcvt.s32.f32 %v1791
        %v2304 = vcvt.s32.f32 %v1792
        %v2305 = vcvt.s32.f32 %v1793
        %v2306 = vcvt.s32.f32 %v1794
        %v2307 = vcvt.s32.f32 %v1795
        %v2308 = vcvt.s32.f32 %v1796
        %v2309 = vcvt.s32.f32 %v1797
        %v2310 = vcvt.s32.f32 %v1798
        %v2311 = vcvt.s32.f32 %v1799
        %v2312 = vcvt.s32.f32 %v1800
        %v2313 = vcvt.s32.f32 %v1801
        %v2314 = vcvt.s32.f32 %v1802
        %v2315 = vcvt.s32.f32 %v1803
        %v2316 = vcvt.s32.f32 %v1804
        %v2317 = vcvt.s32.f32 %v1805
        %v2318 = vcvt.s32.f32 %v1806
        %v2319 = vcvt.s32.f32 %v1807
        %v2320 = vcvt.s32.f32 %v1808
        %v2321 = vcvt.s32.f32 %v1809
        %v2322 = vcvt.s32.f32 %v1810
        %v2323 = vmul.f32 %v130, %v130
        %v2324 = vmul.f32 %v131, %v131
        %v2325 = vmul.f32 %v132, %v132
        %v2326 = vmul.f32 %v133, %v133
        %v2327 = vmul.f32 %v134, %v134
        %v2328 = vmul.f32 %v135, %v135
        %v2329 = vmul.f32 %v136, %v136
        %v2330 = vmul.f32 %v137, %v137
        %v2331 = vmul.f32 %v138, %v138
        %v2332 = vmul.f32 %v139, %v139
        %v2333 = vmul.f32 %v140, %v140
        %v2334 = vmul.f32 %v141, %v141
        %v2335 = vmul.f32 %v142, %v142
        %v2336 = vmul.f32 %v143, %v143
        %v2337 = vmul.f32 %v144, %v144
        %v2338 = vmul.f32 %v145, %v145
        %v2355 = vlaneseq
        %v2356 = vshrl.u32 %v2355, 7
        %v2357 = vsub.s32 3, %v2356
        %v2358 = vrot.slane %v498, %v2357
        %v2359 = vlaneseq
        %v2360 = vshrl.u32 %v2359, 7
        %v2361 = vsub.s32 7, %v2360
        %v2362 = vrot.slane %v498, %v2361
        %v2363 = vlaneseq
        %v2364 = vshrl.u32 %v2363, 7
        %v2365 = vsub.s32 3, %v2364
        %v2366 = vrot.slane %v499, %v2365
        %v2367 = vlaneseq
        %v2368 = vshrl.u32 %v2367, 7
        %v2369 = vsub.s32 7, %v2368
        %v2370 = vrot.slane %v499, %v2369
        %v2371 = vlaneseq
        %v2372 = vshrl.u32 %v2371, 7
        %v2373 = vsub.s32 3, %v2372
        %v2374 = vrot.slane %v500, %v2373
        %v2375 = vlaneseq
        %v2376 = vshrl.u32 %v2375, 7
        %v2377 = vsub.s32 7, %v2376
        %v2378 = vrot.slane %v500, %v2377
        %v2379 = vlaneseq
        %v2380 = vshrl.u32 %v2379, 7
        %v2381 = vsub.s32 3, %v2380
        %v2382 = vrot.slane %v501, %v2381
        %v2383 = vlaneseq
        %v2384 = vshrl.u32 %v2383, 7
        %v2385 = vsub.s32 7, %v2384
        %v2386 = vrot.slane %v501, %v2385
        %v2387 = vlaneseq
        %v2388 = vshrl.u32 %v2387, 7
        %v2389 = vsub.s32 3, %v2388
        %v2390 = vrot.slane %v502, %v2389
        %v2391 = vlaneseq
        %v2392 = vshrl.u32 %v2391, 7
        %v2393 = vsub.s32 7, %v2392
        %v2394 = vrot.slane %v502, %v2393
        %v2395 = vlaneseq
        %v2396 = vshrl.u32 %v2395, 7
        %v2397 = vsub.s32 3, %v2396
        %v2398 = vrot.slane %v503, %v2397
        %v2399 = vlaneseq
        %v2400 = vshrl.u32 %v2399, 7
        %v2401 = vsub.s32 7, %v2400
        %v2402 = vrot.slane %v503, %v2401
        %v2403 = vlaneseq
        %v2404 = vshrl.u32 %v2403, 7
        %v2405 = vsub.s32 3, %v2404
        %v2406 = vrot.slane %v504, %v2405
        %v2407 = vlaneseq
        %v2408 = vshrl.u32 %v2407, 7
        %v2409 = vsub.s32 7, %v2408
        %v2410 = vrot.slane %v504, %v2409
        %v2411 = vlaneseq
        %v2412 = vshrl.u32 %v2411, 7
        %v2413 = vsub.s32 3, %v2412
        %v2414 = vrot.slane %v505, %v2413
        %v2415 = vlaneseq
        %v2416 = vshrl.u32 %v2415, 7
        %v2417 = vsub.s32 7, %v2416
        %v2418 = vrot.slane %v505, %v2417
        %v2419 = vlaneseq
        %v2420 = vshrl.u32 %v2419, 7
        %v2421 = vsub.s32 3, %v2420
        %v2422 = vrot.slane %v506, %v2421
        %v2423 = vlaneseq
        %v2424 = vshrl.u32 %v2423, 7
        %v2425 = vsub.s32 7, %v2424
        %v2426 = vrot.slane %v506, %v2425
        %v2427 = vlaneseq
        %v2428 = vshrl.u32 %v2427, 7
        %v2429 = vsub.s32 3, %v2428
        %v2430 = vrot.slane %v507, %v2429
        %v2431 = vlaneseq
        %v2432 = vshrl.u32 %v2431, 7
        %v2433 = vsub.s32 7, %v2432
        %v2434 = vrot.slane %v507, %v2433
        %v2435 = vlaneseq
        %v2436 = vshrl.u32 %v2435, 7
        %v2437 = vsub.s32 3, %v2436
        %v2438 = vrot.slane %v508, %v2437
        %v2439 = vlaneseq
        %v2440 = vshrl.u32 %v2439, 7
        %v2441 = vsub.s32 7, %v2440
        %v2442 = vrot.slane %v508, %v2441
        %v2443 = vlaneseq
        %v2444 = vshrl.u32 %v2443, 7
        %v2445 = vsub.s32 3, %v2444
        %v2446 = vrot.slane %v509, %v2445
        %v2447 = vlaneseq
        %v2448 = vshrl.u32 %v2447, 7
        %v2449 = vsub.s32 7, %v2448
        %v2450 = vrot.slane %v509, %v2449
        %v2451 = vlaneseq
        %v2452 = vshrl.u32 %v2451, 7
        %v2453 = vsub.s32 3, %v2452
        %v2454 = vrot.slane %v510, %v2453
        %v2455 = vlaneseq
        %v2456 = vshrl.u32 %v2455, 7
        %v2457 = vsub.s32 7, %v2456
        %v2458 = vrot.slane %v510, %v2457
        %v2459 = vlaneseq
        %v2460 = vshrl.u32 %v2459, 7
        %v2461 = vsub.s32 3, %v2460
        %v2462 = vrot.slane %v511, %v2461
        %v2463 = vlaneseq
        %v2464 = vshrl.u32 %v2463, 7
        %v2465 = vsub.s32 7, %v2464
        %v2466 = vrot.slane %v511, %v2465
        %v2467 = vlaneseq
        %v2468 = vshrl.u32 %v2467, 7
        %v2469 = vsub.s32 3, %v2468
        %v2470 = vrot.slane %v512, %v2469
        %v2471 = vlaneseq
        %v2472 = vshrl.u32 %v2471, 7
        %v2473 = vsub.s32 7, %v2472
        %v2474 = vrot.slane %v512, %v2473
        %v2475 = vlaneseq
        %v2476 = vshrl.u32 %v2475, 7
        %v2477 = vsub.s32 3, %v2476
        %v2478 = vrot.slane %v513, %v2477
        %v2479 = vlaneseq
        %v2480 = vshrl.u32 %v2479, 7
        %v2481 = vsub.s32 7, %v2480
        %v2482 = vrot.slane %v513, %v2481
        %v2515 = vlaneseq
        %v2516 = vshrl.u32 %v2515, 7
        %v2517 = vsub.s32 3, %v2516
        %v2518 = vrot.slane %v2358, %v2517
        %v2519 = vlaneseq
        %v2520 = vshrl.u32 %v2519, 7
        %v2521 = vsub.s32 3, %v2520
        %v2522 = vrot.slane %v2362, %v2521
        %v2523 = vlaneseq
        %v2524 = vshrl.u32 %v2523, 7
        %v2525 = vsub.s32 3, %v2524
        %v2526 = vrot.slane %v2366, %v2525
        %v2527 = vlaneseq
        %v2528 = vshrl.u32 %v2527, 7
        %v2529 = vsub.s32 3, %v2528
        %v2530 = vrot.slane %v2370, %v2529
        %v2531 = vlaneseq
        %v2532 = vshrl.u32 %v2531, 7
        %v2533 = vsub.s32 3, %v2532
        %v2534 = vrot.slane %v2374, %v2533
        %v2535 = vlaneseq
        %v2536 = vshrl.u32 %v2535, 7
        %v2537 = vsub.s32 3, %v2536
        %v2538 = vrot.slane %v2378, %v2537
        %v2539 = vlaneseq
        %v2540 = vshrl.u32 %v2539, 7
        %v2541 = vsub.s32 3, %v2540
        %v2542 = vrot.slane %v2382, %v2541
        %v2543 = vlaneseq
        %v2544 = vshrl.u32 %v2543, 7
        %v2545 = vsub.s32 3, %v2544
        %v2546 = vrot.slane %v2386, %v2545
        %v2547 = vlaneseq
        %v2548 = vshrl.u32 %v2547, 7
        %v2549 = vsub.s32 3, %v2548
        %v2550 = vrot.slane %v2390, %v2549
        %v2551 = vlaneseq
        %v2552 = vshrl.u32 %v2551, 7
        %v2553 = vsub.s32 3, %v2552
        %v2554 = vrot.slane %v2394, %v2553
        %v2555 = vlaneseq
        %v2556 = vshrl.u32 %v2555, 7
        %v2557 = vsub.s32 3, %v2556
        %v2558 = vrot.slane %v2398, %v2557
        %v2559 = vlaneseq
        %v2560 = vshrl.u32 %v2559, 7
        %v2561 = vsub.s32 3, %v2560
        %v2562 = vrot.slane %v2402, %v2561
        %v2563 = vlaneseq
        %v2564 = vshrl.u32 %v2563, 7
        %v2565 = vsub.s32 3, %v2564
        %v2566 = vrot.slane %v2406, %v2565
        %v2567 = vlaneseq
        %v2568 = vshrl.u32 %v2567, 7
        %v2569 = vsub.s32 3, %v2568
        %v2570 = vrot.slane %v2410, %v2569
        %v2571 = vlaneseq
        %v2572 = vshrl.u32 %v2571, 7
        %v2573 = vsub.s32 3, %v2572
        %v2574 = vrot.slane %v2414, %v2573
        %v2575 = vlaneseq
        %v2576 = vshrl.u32 %v2575, 7
        %v2577 = vsub.s32 3, %v2576
        %v2578 = vrot.slane %v2418, %v2577
        %v2579 = vlaneseq
        %v2580 = vshrl.u32 %v2579, 7
        %v2581 = vsub.s32 3, %v2580
        %v2582 = vrot.slane %v2422, %v2581
        %v2583 = vlaneseq
        %v2584 = vshrl.u32 %v2583, 7
        %v2585 = vsub.s32 3, %v2584
        %v2586 = vrot.slane %v2426, %v2585
        %v2587 = vlaneseq
        %v2588 = vshrl.u32 %v2587, 7
        %v2589 = vsub.s32 3, %v2588
        %v2590 = vrot.slane %v2430, %v2589
        %v2591 = vlaneseq
        %v2592 = vshrl.u32 %v2591, 7
        %v2593 = vsub.s32 3, %v2592
        %v2594 = vrot.slane %v2434, %v2593
        %v2595 = vlaneseq
        %v2596 = vshrl.u32 %v2595, 7
        %v2597 = vsub.s32 3, %v2596
        %v2598 = vrot.slane %v2438, %v2597
        %v2599 = vlaneseq
        %v2600 = vshrl.u32 %v2599, 7
        %v2601 = vsub.s32 3, %v2600
        %v2602 = vrot.slane %v2442, %v2601
        %v2603 = vlaneseq
        %v2604 = vshrl.u32 %v2603, 7
        %v2605 = vsub.s32 3, %v2604
        %v2606 = vrot.slane %v2446, %v2605
        %v2607 = vlaneseq
        %v2608 = vshrl.u32 %v2607, 7
        %v2609 = vsub.s32 3, %v2608
        %v2610 = vrot.slane %v2450, %v2609
        %v2611 = vlaneseq
        %v2612 = vshrl.u32 %v2611, 7
        %v2613 = vsub.s32 3, %v2612
        %v2614 = vrot.slane %v2454, %v2613
        %v2615 = vlaneseq
        %v2616 = vshrl.u32 %v2615, 7
        %v2617 = vsub.s32 3, %v2616
        %v2618 = vrot.slane %v2458, %v2617
        %v2619 = vlaneseq
        %v2620 = vshrl.u32 %v2619, 7
        %v2621 = vsub.s32 3, %v2620
        %v2622 = vrot.slane %v2462, %v2621
        %v2623 = vlaneseq
        %v2624 = vshrl.u32 %v2623, 7
        %v2625 = vsub.s32 3, %v2624
        %v2626 = vrot.slane %v2466, %v2625
        %v2627 = vlaneseq
        %v2628 = vshrl.u32 %v2627, 7
        %v2629 = vsub.s32 3, %v2628
        %v2630 = vrot.slane %v2470, %v2629
        %v2631 = vlaneseq
        %v2632 = vshrl.u32 %v2631, 7
        %v2633 = vsub.s32 3, %v2632
        %v2634 = vrot.slane %v2474, %v2633
        %v2635 = vlaneseq
        %v2636 = vshrl.u32 %v2635, 7
        %v2637 = vsub.s32 3, %v2636
        %v2638 = vrot.slane %v2478, %v2637
        %v2639 = vlaneseq
        %v2640 = vshrl.u32 %v2639, 7
        %v2641 = vsub.s32 3, %v2640
        %v2642 = vrot.slane %v2482, %v2641
        %v2675 = vcombine.low %v2518, %v2522
        %v2676 = vcombine.low %v2526, %v2530
        %v2677 = vcombine.low %v2534, %v2538
        %v2678 = vcombine.low %v2542, %v2546
        %v2679 = vcombine.low %v2550, %v2554
        %v2680 = vcombine.low %v2558, %v2562
        %v2681 = vcombine.low %v2566, %v2570
        %v2682 = vcombine.low %v2574, %v2578
        %v2683 = vcombine.low %v2582, %v2586
        %v2684 = vcombine.low %v2590, %v2594
        %v2685 = vcombine.low %v2598, %v2602
        %v2686 = vcombine.low %v2606, %v2610
        %v2687 = vcombine.low %v2614, %v2618
        %v2688 = vcombine.low %v2622, %v2626
        %v2689 = vcombine.low %v2630, %v2634
        %v2690 = vcombine.low %v2638, %v2642
        %v2707 = vmul.f32 %v2323, %v2675
        %v2708 = vmul.f32 %v2324, %v2676
        %v2709 = vmul.f32 %v2325, %v2677
        %v2710 = vmul.f32 %v2326, %v2678
        %v2711 = vmul.f32 %v2327, %v2679
        %v2712 = vmul.f32 %v2328, %v2680
        %v2713 = vmul.f32 %v2329, %v2681
        %v2714 = vmul.f32 %v2330, %v2682
        %v2715 = vmul.f32 %v2331, %v2683
        %v2716 = vmul.f32 %v2332, %v2684
        %v2717 = vmul.f32 %v2333, %v2685
        %v2718 = vmul.f32 %v2334, %v2686
        %v2719 = vmul.f32 %v2335, %v2687
        %v2720 = vmul.f32 %v2336, %v2688
        %v2721 = vmul.f32 %v2337, %v2689
        %v2722 = vmul.f32 %v2338, %v2690
        %v2739 = vcombine.high %v2707, %v2707
        %v2740 = vcombine.high %v2708, %v2708
        %v2741 = vcombine.high %v2709, %v2709
        %v2742 = vcombine.high %v2710, %v2710
        %v2743 = vcombine.high %v2711, %v2711
        %v2744 = vcombine.high %v2712, %v2712
        %v2745 = vcombine.high %v2713, %v2713
        %v2746 = vcombine.high %v2714, %v2714
        %v2747 = vcombine.high %v2715, %v2715
        %v2748 = vcombine.high %v2716, %v2716
        %v2749 = vcombine.high %v2717, %v2717
        %v2750 = vcombine.high %v2718, %v2718
        %v2751 = vcombine.high %v2719, %v2719
        %v2752 = vcombine.high %v2720, %v2720
        %v2753 = vcombine.high %v2721, %v2721
        %v2754 = vcombine.high %v2722, %v2722
        %vm2771 = vcmask 1043456
        %v2772 = vsel %vm2771, %v2707, 0.0
        %v2773 = vsel %vm2771, %v2711, 0.0
        %v2774 = vadd.f32 %v2772, %v2773
        %v2775 = vsel %vm2771, %v2715, 0.0
        %v2776 = vadd.f32 %v2774, %v2775
        %v2777 = vsel %vm2771, %v2719, 0.0
        %v2778 = vadd.f32 %v2776, %v2777
        %v2779 = vsel %vm2771, %v2739, 0.0
        %v2780 = vsel %vm2771, %v2743, 0.0
        %v2781 = vadd.f32 %v2779, %v2780
        %v2782 = vsel %vm2771, %v2747, 0.0
        %v2783 = vadd.f32 %v2781, %v2782
        %v2784 = vsel %vm2771, %v2751, 0.0
        %v2785 = vadd.f32 %v2783, %v2784
        %v2786 = vsel %vm2771, %v2708, 0.0
        %v2787 = vsel %vm2771, %v2712, 0.0
        %v2788 = vadd.f32 %v2786, %v2787
        %v2789 = vsel %vm2771, %v2716, 0.0
        %v2790 = vadd.f32 %v2788, %v2789
        %v2791 = vsel %vm2771, %v2720, 0.0
        %v2792 = vadd.f32 %v2790, %v2791
        %v2793 = vsel %vm2771, %v2740, 0.0
        %v2794 = vsel %vm2771, %v2744, 0.0
        %v2795 = vadd.f32 %v2793, %v2794
        %v2796 = vsel %vm2771, %v2748, 0.0
        %v2797 = vadd.f32 %v2795, %v2796
        %v2798 = vsel %vm2771, %v2752, 0.0
        %v2799 = vadd.f32 %v2797, %v2798
        %v2800 = vsel %vm2771, %v2709, 0.0
        %v2801 = vsel %vm2771, %v2713, 0.0
        %v2802 = vadd.f32 %v2800, %v2801
        %v2803 = vsel %vm2771, %v2717, 0.0
        %v2804 = vadd.f32 %v2802, %v2803
        %v2805 = vsel %vm2771, %v2721, 0.0
        %v2806 = vadd.f32 %v2804, %v2805
        %v2807 = vsel %vm2771, %v2741, 0.0
        %v2808 = vsel %vm2771, %v2745, 0.0
        %v2809 = vadd.f32 %v2807, %v2808
        %v2810 = vsel %vm2771, %v2749, 0.0
        %v2811 = vadd.f32 %v2809, %v2810
        %v2812 = vsel %vm2771, %v2753, 0.0
        %v2813 = vadd.f32 %v2811, %v2812
        %v2814 = vsel %vm2771, %v2710, 0.0
        %v2815 = vsel %vm2771, %v2714, 0.0
        %v2816 = vadd.f32 %v2814, %v2815
        %v2817 = vsel %vm2771, %v2718, 0.0
        %v2818 = vadd.f32 %v2816, %v2817
        %v2819 = vsel %vm2771, %v2722, 0.0
        %v2820 = vadd.f32 %v2818, %v2819
        %v2821 = vsel %vm2771, %v2742, 0.0
        %v2822 = vsel %vm2771, %v2746, 0.0
        %v2823 = vadd.f32 %v2821, %v2822
        %v2824 = vsel %vm2771, %v2750, 0.0
        %v2825 = vadd.f32 %v2823, %v2824
        %v2826 = vsel %vm2771, %v2754, 0.0
        %v2827 = vadd.f32 %v2825, %v2826
        %v2836 = vcombine.low %v2778, %v2785
        %v2837 = vcombine.low %v2792, %v2799
        %v2838 = vcombine.low %v2806, %v2813
        %v2839 = vcombine.low %v2820, %v2827
        %v2841 = vunpack.c.l.s4 1966171168
        %v2842 = vunpack.c.0.s8 %v2841
        %v2843 = vlaneseq
        %v2844 = vshrl.u32 %v2843, 7
        %v2845 = vsub.s32 %v2842, %v2844
        %v2846 = vrot.slane %v2836, %v2845
        %v2848 = vunpack.c.l.s4 1966171168
        %v2849 = vunpack.c.0.s8 %v2848
        %v2850 = vlaneseq
        %v2851 = vshrl.u32 %v2850, 7
        %v2852 = vsub.s32 %v2849, %v2851
        %v2853 = vrot.slane %v2837, %v2852
        %v2855 = vunpack.c.l.s4 1966171168
        %v2856 = vunpack.c.0.s8 %v2855
        %v2857 = vlaneseq
        %v2858 = vshrl.u32 %v2857, 7
        %v2859 = vsub.s32 %v2856, %v2858
        %v2860 = vrot.slane %v2838, %v2859
        %v2862 = vunpack.c.l.s4 1966171168
        %v2863 = vunpack.c.0.s8 %v2862
        %v2864 = vlaneseq
        %v2865 = vshrl.u32 %v2864, 7
        %v2866 = vsub.s32 %v2863, %v2865
        %v2867 = vrot.slane %v2839, %v2866
        %v2868 = vcombine.low %v2846, %v2853
        %v2869 = vcombine.high %v2846, %v2853
        %v2870 = vcombine.low %v2860, %v2867
        %v2871 = vcombine.high %v2860, %v2867
        %v2873 = vunpack.c.l.s4 1966171168
        %v2874 = vunpack.c.0.s8 %v2873
        %v2875 = vlaneseq
        %v2876 = vshrl.u32 %v2875, 7
        %v2877 = vsub.s32 %v2874, %v2876
        %v2878 = vrot.slane %v2868, %v2877
        %v2880 = vunpack.c.l.s4 1966171168
        %v2881 = vunpack.c.0.s8 %v2880
        %v2882 = vlaneseq
        %v2883 = vshrl.u32 %v2882, 7
        %v2884 = vsub.s32 %v2881, %v2883
        %v2885 = vrot.slane %v2869, %v2884
        %v2887 = vunpack.c.l.s4 1966171168
        %v2888 = vunpack.c.0.s8 %v2887
        %v2889 = vlaneseq
        %v2890 = vshrl.u32 %v2889, 7
        %v2891 = vsub.s32 %v2888, %v2890
        %v2892 = vrot.slane %v2870, %v2891
        %v2894 = vunpack.c.l.s4 1966171168
        %v2895 = vunpack.c.0.s8 %v2894
        %v2896 = vlaneseq
        %v2897 = vshrl.u32 %v2896, 7
        %v2898 = vsub.s32 %v2895, %v2897
        %v2899 = vrot.slane %v2871, %v2898
        %v2900 = vcombine.low %v2878, %v2892
        %v2901 = vcombine.high %v2878, %v2892
        %v2902 = vcombine.low %v2885, %v2899
        %v2903 = vcombine.high %v2885, %v2899
        %v2904 = vlaneseq
        %v2905 = vshrl.u32 %v2904, 7
        %v2906 = vsub.s32 0, %v2905
        %v2907 = vrot.slane %v2900, %v2906
        %v2908 = vlaneseq
        %v2909 = vshrl.u32 %v2908, 7
        %v2910 = vsub.s32 1, %v2909
        %v2911 = vrot.slane %v2900, %v2910
        %v2912 = vlaneseq
        %v2913 = vshrl.u32 %v2912, 7
        %v2914 = vsub.s32 2, %v2913
        %v2915 = vrot.slane %v2900, %v2914
        %v2916 = vlaneseq
        %v2917 = vshrl.u32 %v2916, 7
        %v2918 = vsub.s32 3, %v2917
        %v2919 = vrot.slane %v2900, %v2918
        %v2920 = vlaneseq
        %v2921 = vshrl.u32 %v2920, 7
        %v2922 = vsub.s32 4, %v2921
        %v2923 = vrot.slane %v2900, %v2922
        %v2924 = vlaneseq
        %v2925 = vshrl.u32 %v2924, 7
        %v2926 = vsub.s32 5, %v2925
        %v2927 = vrot.slane %v2900, %v2926
        %v2928 = vlaneseq
        %v2929 = vshrl.u32 %v2928, 7
        %v2930 = vsub.s32 6, %v2929
        %v2931 = vrot.slane %v2900, %v2930
        %v2932 = vlaneseq
        %v2933 = vshrl.u32 %v2932, 7
        %v2934 = vsub.s32 7, %v2933
        %v2935 = vrot.slane %v2900, %v2934
        %v2936 = vlaneseq
        %v2937 = vshrl.u32 %v2936, 7
        %v2938 = vsub.s32 0, %v2937
        %v2939 = vrot.slane %v2902, %v2938
        %v2940 = vlaneseq
        %v2941 = vshrl.u32 %v2940, 7
        %v2942 = vsub.s32 1, %v2941
        %v2943 = vrot.slane %v2902, %v2942
        %v2944 = vlaneseq
        %v2945 = vshrl.u32 %v2944, 7
        %v2946 = vsub.s32 2, %v2945
        %v2947 = vrot.slane %v2902, %v2946
        %v2948 = vlaneseq
        %v2949 = vshrl.u32 %v2948, 7
        %v2950 = vsub.s32 3, %v2949
        %v2951 = vrot.slane %v2902, %v2950
        %v2952 = vlaneseq
        %v2953 = vshrl.u32 %v2952, 7
        %v2954 = vsub.s32 4, %v2953
        %v2955 = vrot.slane %v2902, %v2954
        %v2956 = vlaneseq
        %v2957 = vshrl.u32 %v2956, 7
        %v2958 = vsub.s32 5, %v2957
        %v2959 = vrot.slane %v2902, %v2958
        %v2960 = vlaneseq
        %v2961 = vshrl.u32 %v2960, 7
        %v2962 = vsub.s32 6, %v2961
        %v2963 = vrot.slane %v2902, %v2962
        %v2964 = vlaneseq
        %v2965 = vshrl.u32 %v2964, 7
        %v2966 = vsub.s32 7, %v2965
        %v2967 = vrot.slane %v2902, %v2966
        %v2968 = vlaneseq
        %v2969 = vshrl.u32 %v2968, 7
        %v2970 = vsub.s32 0, %v2969
        %v2971 = vrot.slane %v2901, %v2970
        %v2972 = vlaneseq
        %v2973 = vshrl.u32 %v2972, 7
        %v2974 = vsub.s32 1, %v2973
        %v2975 = vrot.slane %v2901, %v2974
        %v2976 = vlaneseq
        %v2977 = vshrl.u32 %v2976, 7
        %v2978 = vsub.s32 2, %v2977
        %v2979 = vrot.slane %v2901, %v2978
        %v2980 = vlaneseq
        %v2981 = vshrl.u32 %v2980, 7
        %v2982 = vsub.s32 3, %v2981
        %v2983 = vrot.slane %v2901, %v2982
        %v2984 = vlaneseq
        %v2985 = vshrl.u32 %v2984, 7
        %v2986 = vsub.s32 4, %v2985
        %v2987 = vrot.slane %v2901, %v2986
        %v2988 = vlaneseq
        %v2989 = vshrl.u32 %v2988, 7
        %v2990 = vsub.s32 5, %v2989
        %v2991 = vrot.slane %v2901, %v2990
        %v2992 = vlaneseq
        %v2993 = vshrl.u32 %v2992, 7
        %v2994 = vsub.s32 6, %v2993
        %v2995 = vrot.slane %v2901, %v2994
        %v2996 = vlaneseq
        %v2997 = vshrl.u32 %v2996, 7
        %v2998 = vsub.s32 7, %v2997
        %v2999 = vrot.slane %v2901, %v2998
        %v3000 = vlaneseq
        %v3001 = vshrl.u32 %v3000, 7
        %v3002 = vsub.s32 0, %v3001
        %v3003 = vrot.slane %v2903, %v3002
        %v3004 = vlaneseq
        %v3005 = vshrl.u32 %v3004, 7
        %v3006 = vsub.s32 1, %v3005
        %v3007 = vrot.slane %v2903, %v3006
        %v3008 = vlaneseq
        %v3009 = vshrl.u32 %v3008, 7
        %v3010 = vsub.s32 2, %v3009
        %v3011 = vrot.slane %v2903, %v3010
        %v3012 = vlaneseq
        %v3013 = vshrl.u32 %v3012, 7
        %v3014 = vsub.s32 3, %v3013
        %v3015 = vrot.slane %v2903, %v3014
        %v3016 = vlaneseq
        %v3017 = vshrl.u32 %v3016, 7
        %v3018 = vsub.s32 4, %v3017
        %v3019 = vrot.slane %v2903, %v3018
        %v3020 = vlaneseq
        %v3021 = vshrl.u32 %v3020, 7
        %v3022 = vsub.s32 5, %v3021
        %v3023 = vrot.slane %v2903, %v3022
        %v3024 = vlaneseq
        %v3025 = vshrl.u32 %v3024, 7
        %v3026 = vsub.s32 6, %v3025
        %v3027 = vrot.slane %v2903, %v3026
        %v3028 = vlaneseq
        %v3029 = vshrl.u32 %v3028, 7
        %v3030 = vsub.s32 7, %v3029
        %v3031 = vrot.slane %v2903, %v3030
        %vm3064 = vcmask 1040384
        %v3065 = vsel %vm3064, %v2358, %v2907
        %v3066 = vsel %vm3064, %v2362, %v2911
        %v3067 = vsel %vm3064, %v2366, %v2915
        %v3068 = vsel %vm3064, %v2370, %v2919
        %v3069 = vsel %vm3064, %v2374, %v2923
        %v3070 = vsel %vm3064, %v2378, %v2927
        %v3071 = vsel %vm3064, %v2382, %v2931
        %v3072 = vsel %vm3064, %v2386, %v2935
        %v3073 = vsel %vm3064, %v2390, %v2939
        %v3074 = vsel %vm3064, %v2394, %v2943
        %v3075 = vsel %vm3064, %v2398, %v2947
        %v3076 = vsel %vm3064, %v2402, %v2951
        %v3077 = vsel %vm3064, %v2406, %v2955
        %v3078 = vsel %vm3064, %v2410, %v2959
        %v3079 = vsel %vm3064, %v2414, %v2963
        %v3080 = vsel %vm3064, %v2418, %v2967
        %v3081 = vsel %vm3064, %v2422, %v2971
        %v3082 = vsel %vm3064, %v2426, %v2975
        %v3083 = vsel %vm3064, %v2430, %v2979
        %v3084 = vsel %vm3064, %v2434, %v2983
        %v3085 = vsel %vm3064, %v2438, %v2987
        %v3086 = vsel %vm3064, %v2442, %v2991
        %v3087 = vsel %vm3064, %v2446, %v2995
        %v3088 = vsel %vm3064, %v2450, %v2999
        %v3089 = vsel %vm3064, %v2454, %v3003
        %v3090 = vsel %vm3064, %v2458, %v3007
        %v3091 = vsel %vm3064, %v2462, %v3011
        %v3092 = vsel %vm3064, %v2466, %v3015
        %v3093 = vsel %vm3064, %v2470, %v3019
        %v3094 = vsel %vm3064, %v2474, %v3023
        %v3095 = vsel %vm3064, %v2478, %v3027
        %v3096 = vsel %vm3064, %v2482, %v3031
        %3097 = vmatprep.subr.mxu0 %v1932
        %3098 = vmatpush1.xpose.msra.mxu0 %v1931
        %3099 = vmatprep.subr.mxu0 %v1924
        %3100 = vmatpush1.xpose.msra.mxu0 %v1923
        %3101 = vmatprep.subr.mxu0 %v1916
        %3102 = vmatpush1.xpose.msra.mxu0 %v1915
        %3103 = vmatprep.subr.mxu0 %v1908
        %3104 = vmatpush1.xpose.msra.mxu0 %v1907
        %3105 = vmatprep.subr.mxu0 %v1900
        %3106 = vmatpush1.xpose.msra.mxu0 %v1899
        %3107 = vmatprep.subr.mxu0 %v1892
        %3108 = vmatpush1.xpose.msra.mxu0 %v1891
        %3109 = vmatprep.subr.mxu0 %v1884
        %3110 = vmatpush1.xpose.msra.mxu0 %v1883
        %3111 = vmatprep.subr.mxu0 %v1876
        %3112 = vmatpush1.xpose.msra.mxu0 %v1875
        %3113 = vmatprep.subr.mxu0 %v1868
        %3114 = vmatpush1.xpose.msra.mxu0 %v1867
        %3115 = vmatprep.subr.mxu0 %v1860
        %3116 = vmatpush1.xpose.msra.mxu0 %v1859
        %3117 = vmatprep.subr.mxu0 %v1852
        %3118 = vmatpush1.xpose.msra.mxu0 %v1851
        %3119 = vmatprep.subr.mxu0 %v1844
        %3120 = vmatpush1.xpose.msra.mxu0 %v1843
        %3121 = vmatprep.subr.mxu0 %v1836
        %3122 = vmatpush1.xpose.msra.mxu0 %v1835
        %3123 = vmatprep.subr.mxu0 %v1828
        %3124 = vmatpush1.xpose.msra.mxu0 %v1827
        %3125 = vmatprep.subr.mxu0 %v1820
        %3126 = vmatpush1.xpose.msra.mxu0 %v1819
        %3127 = vmatprep.subr.mxu0 %v1812
        %3128 = vmatpush1.xpose.msra.mxu0 %v1811
        %3129 = vmatprep.subr.mxu0 0.0
        %3130 = vmatpush2.xpose.msra.mxu0 0.0
        %3131 = vmatprep.subr.mxu0 0.0
        %3132 = vmatpush2.xpose.msra.mxu0 0.0
        %3133 = vmatprep.subr.mxu0 0.0
        %3134 = vmatpush2.xpose.msra.mxu0 0.0
        %3135 = vmatprep.subr.mxu0 0.0
        %3136 = vmatpush2.xpose.msra.mxu0 0.0
        %3137 = vmatprep.subr.mxu0 0.0
        %3138 = vmatpush2.xpose.msra.mxu0 0.0
        %3139 = vmatprep.subr.mxu0 0.0
        %3140 = vmatpush2.xpose.msra.mxu0 0.0
        %3141 = vmatprep.subr.mxu0 0.0
        %3142 = vmatpush2.xpose.msra.mxu0 0.0
        %3143 = vmatprep.subr.mxu0 0.0
        %3144 = vmatpush2.xpose.msra.mxu0 0.0
        %3145 = vmatprep.subr.mxu0 0.0
        %3146 = vmatpush2.xpose.msra.mxu0 0.0
        %3147 = vmatprep.subr.mxu0 0.0
        %3148 = vmatpush2.xpose.msra.mxu0 0.0
        %3149 = vmatprep.subr.mxu0 0.0
        %3150 = vmatpush2.xpose.msra.mxu0 0.0
        %3151 = vmatprep.subr.mxu0 0.0
        %3152 = vmatpush2.xpose.msra.mxu0 0.0
        %3153 = vmatprep.subr.mxu0 0.0
        %3154 = vmatpush2.xpose.msra.mxu0 0.0
        %3155 = vmatprep.subr.mxu0 0.0
        %3156 = vmatpush2.xpose.msra.mxu0 0.0
        %3157 = vmatprep.subr.mxu0 0.0
        %3158 = vmatpush2.xpose.msra.mxu0 0.0
        %3159 = vmatprep.subr.mxu0 0.0
        %3160 = vmatpush2.xpose.msra.mxu0 0.0
        %3161 = vmatprep.mubr.f32.mxu0 %v3066
        %3162 = vmatmul.mubr.f32.gmra.mxu0 %v3065
        %v3163 = vpop.f32.mrf.mxu0
        %v3164 = vadd.f32 0.0, %v3163
        %v3165 = vpop.f32.mrf.mxu0
        %3166 = vdwg.mxu0
        %3167 = vmatprep.subr.mxu0 %v1934
        %3168 = vmatpush1.xpose.msra.mxu0 %v1933
        %3169 = vmatprep.subr.mxu0 %v1926
        %3170 = vmatpush1.xpose.msra.mxu0 %v1925
        %3171 = vmatprep.subr.mxu0 %v1918
        %3172 = vmatpush1.xpose.msra.mxu0 %v1917
        %3173 = vmatprep.subr.mxu0 %v1910
        %3174 = vmatpush1.xpose.msra.mxu0 %v1909
        %3175 = vmatprep.subr.mxu0 %v1902
        %3176 = vmatpush1.xpose.msra.mxu0 %v1901
        %3177 = vmatprep.subr.mxu0 %v1894
        %3178 = vmatpush1.xpose.msra.mxu0 %v1893
        %3179 = vmatprep.subr.mxu0 %v1886
        %3180 = vmatpush1.xpose.msra.mxu0 %v1885
        %3181 = vmatprep.subr.mxu0 %v1878
        %3182 = vmatpush1.xpose.msra.mxu0 %v1877
        %3183 = vmatprep.subr.mxu0 %v1870
        %3184 = vmatpush1.xpose.msra.mxu0 %v1869
        %3185 = vmatprep.subr.mxu0 %v1862
        %3186 = vmatpush1.xpose.msra.mxu0 %v1861
        %3187 = vmatprep.subr.mxu0 %v1854
        %3188 = vmatpush1.xpose.msra.mxu0 %v1853
        %3189 = vmatprep.subr.mxu0 %v1846
        %3190 = vmatpush1.xpose.msra.mxu0 %v1845
        %3191 = vmatprep.subr.mxu0 %v1838
        %3192 = vmatpush1.xpose.msra.mxu0 %v1837
        %3193 = vmatprep.subr.mxu0 %v1830
        %3194 = vmatpush1.xpose.msra.mxu0 %v1829
        %3195 = vmatprep.subr.mxu0 %v1822
        %3196 = vmatpush1.xpose.msra.mxu0 %v1821
        %3197 = vmatprep.subr.mxu0 %v1814
        %3198 = vmatpush1.xpose.msra.mxu0 %v1813
        %3199 = vmatprep.subr.mxu0 0.0
        %3200 = vmatpush2.xpose.msra.mxu0 0.0
        %3201 = vmatprep.subr.mxu0 0.0
        %3202 = vmatpush2.xpose.msra.mxu0 0.0
        %3203 = vmatprep.subr.mxu0 0.0
        %3204 = vmatpush2.xpose.msra.mxu0 0.0
        %3205 = vmatprep.subr.mxu0 0.0
        %3206 = vmatpush2.xpose.msra.mxu0 0.0
        %3207 = vmatprep.subr.mxu0 0.0
        %3208 = vmatpush2.xpose.msra.mxu0 0.0
        %3209 = vmatprep.subr.mxu0 0.0
        %3210 = vmatpush2.xpose.msra.mxu0 0.0
        %3211 = vmatprep.subr.mxu0 0.0
        %3212 = vmatpush2.xpose.msra.mxu0 0.0
        %3213 = vmatprep.subr.mxu0 0.0
        %3214 = vmatpush2.xpose.msra.mxu0 0.0
        %3215 = vmatprep.subr.mxu0 0.0
        %3216 = vmatpush2.xpose.msra.mxu0 0.0
        %3217 = vmatprep.subr.mxu0 0.0
        %3218 = vmatpush2.xpose.msra.mxu0 0.0
        %3219 = vmatprep.subr.mxu0 0.0
        %3220 = vmatpush2.xpose.msra.mxu0 0.0
        %3221 = vmatprep.subr.mxu0 0.0
        %3222 = vmatpush2.xpose.msra.mxu0 0.0
        %3223 = vmatprep.subr.mxu0 0.0
        %3224 = vmatpush2.xpose.msra.mxu0 0.0
        %3225 = vmatprep.subr.mxu0 0.0
        %3226 = vmatpush2.xpose.msra.mxu0 0.0
        %3227 = vmatprep.subr.mxu0 0.0
        %3228 = vmatpush2.xpose.msra.mxu0 0.0
        %3229 = vmatprep.subr.mxu0 0.0
        %3230 = vmatpush2.xpose.msra.mxu0 0.0
        %3231 = vmatprep.mubr.f32.mxu0 %v3068
        %3232 = vmatmul.mubr.f32.gmra.mxu0 %v3067
        %v3233 = vpop.f32.mrf.mxu0
        %v3234 = vadd.f32 %v3164, %v3233
        %v3235 = vpop.f32.mrf.mxu0
        %3236 = vdwg.mxu0
        %3237 = vmatprep.subr.mxu0 %v1936
        %3238 = vmatpush1.xpose.msra.mxu0 %v1935
        %3239 = vmatprep.subr.mxu0 %v1928
        %3240 = vmatpush1.xpose.msra.mxu0 %v1927
        %3241 = vmatprep.subr.mxu0 %v1920
        %3242 = vmatpush1.xpose.msra.mxu0 %v1919
        %3243 = vmatprep.subr.mxu0 %v1912
        %3244 = vmatpush1.xpose.msra.mxu0 %v1911
        %3245 = vmatprep.subr.mxu0 %v1904
        %3246 = vmatpush1.xpose.msra.mxu0 %v1903
        %3247 = vmatprep.subr.mxu0 %v1896
        %3248 = vmatpush1.xpose.msra.mxu0 %v1895
        %3249 = vmatprep.subr.mxu0 %v1888
        %3250 = vmatpush1.xpose.msra.mxu0 %v1887
        %3251 = vmatprep.subr.mxu0 %v1880
        %3252 = vmatpush1.xpose.msra.mxu0 %v1879
        %3253 = vmatprep.subr.mxu0 %v1872
        %3254 = vmatpush1.xpose.msra.mxu0 %v1871
        %3255 = vmatprep.subr.mxu0 %v1864
        %3256 = vmatpush1.xpose.msra.mxu0 %v1863
        %3257 = vmatprep.subr.mxu0 %v1856
        %3258 = vmatpush1.xpose.msra.mxu0 %v1855
        %3259 = vmatprep.subr.mxu0 %v1848
        %3260 = vmatpush1.xpose.msra.mxu0 %v1847
        %3261 = vmatprep.subr.mxu0 %v1840
        %3262 = vmatpush1.xpose.msra.mxu0 %v1839
        %3263 = vmatprep.subr.mxu0 %v1832
        %3264 = vmatpush1.xpose.msra.mxu0 %v1831
        %3265 = vmatprep.subr.mxu0 %v1824
        %3266 = vmatpush1.xpose.msra.mxu0 %v1823
        %3267 = vmatprep.subr.mxu0 %v1816
        %3268 = vmatpush1.xpose.msra.mxu0 %v1815
        %3269 = vmatprep.subr.mxu0 0.0
        %3270 = vmatpush2.xpose.msra.mxu0 0.0
        %3271 = vmatprep.subr.mxu0 0.0
        %3272 = vmatpush2.xpose.msra.mxu0 0.0
        %3273 = vmatprep.subr.mxu0 0.0
        %3274 = vmatpush2.xpose.msra.mxu0 0.0
        %3275 = vmatprep.subr.mxu0 0.0
        %3276 = vmatpush2.xpose.msra.mxu0 0.0
        %3277 = vmatprep.subr.mxu0 0.0
        %3278 = vmatpush2.xpose.msra.mxu0 0.0
        %3279 = vmatprep.subr.mxu0 0.0
        %3280 = vmatpush2.xpose.msra.mxu0 0.0
        %3281 = vmatprep.subr.mxu0 0.0
        %3282 = vmatpush2.xpose.msra.mxu0 0.0
        %3283 = vmatprep.subr.mxu0 0.0
        %3284 = vmatpush2.xpose.msra.mxu0 0.0
        %3285 = vmatprep.subr.mxu0 0.0
        %3286 = vmatpush2.xpose.msra.mxu0 0.0
        %3287 = vmatprep.subr.mxu0 0.0
        %3288 = vmatpush2.xpose.msra.mxu0 0.0
        %3289 = vmatprep.subr.mxu0 0.0
        %3290 = vmatpush2.xpose.msra.mxu0 0.0
        %3291 = vmatprep.subr.mxu0 0.0
        %3292 = vmatpush2.xpose.msra.mxu0 0.0
        %3293 = vmatprep.subr.mxu0 0.0
        %3294 = vmatpush2.xpose.msra.mxu0 0.0
        %3295 = vmatprep.subr.mxu0 0.0
        %3296 = vmatpush2.xpose.msra.mxu0 0.0
        %3297 = vmatprep.subr.mxu0 0.0
        %3298 = vmatpush2.xpose.msra.mxu0 0.0
        %3299 = vmatprep.subr.mxu0 0.0
        %3300 = vmatpush2.xpose.msra.mxu0 0.0
        %3301 = vmatprep.mubr.f32.mxu0 %v3070
        %3302 = vmatmul.mubr.f32.gmra.mxu0 %v3069
        %v3303 = vpop.f32.mrf.mxu0
        %v3304 = vadd.f32 %v3234, %v3303
        %v3305 = vpop.f32.mrf.mxu0
        %3306 = vdwg.mxu0
        %3307 = vmatprep.subr.mxu0 %v1938
        %3308 = vmatpush1.xpose.msra.mxu0 %v1937
        %3309 = vmatprep.subr.mxu0 %v1930
        %3310 = vmatpush1.xpose.msra.mxu0 %v1929
        %3311 = vmatprep.subr.mxu0 %v1922
        %3312 = vmatpush1.xpose.msra.mxu0 %v1921
        %3313 = vmatprep.subr.mxu0 %v1914
        %3314 = vmatpush1.xpose.msra.mxu0 %v1913
        %3315 = vmatprep.subr.mxu0 %v1906
        %3316 = vmatpush1.xpose.msra.mxu0 %v1905
        %3317 = vmatprep.subr.mxu0 %v1898
        %3318 = vmatpush1.xpose.msra.mxu0 %v1897
        %3319 = vmatprep.subr.mxu0 %v1890
        %3320 = vmatpush1.xpose.msra.mxu0 %v1889
        %3321 = vmatprep.subr.mxu0 %v1882
        %3322 = vmatpush1.xpose.msra.mxu0 %v1881
        %3323 = vmatprep.subr.mxu0 %v1874
        %3324 = vmatpush1.xpose.msra.mxu0 %v1873
        %3325 = vmatprep.subr.mxu0 %v1866
        %3326 = vmatpush1.xpose.msra.mxu0 %v1865
        %3327 = vmatprep.subr.mxu0 %v1858
        %3328 = vmatpush1.xpose.msra.mxu0 %v1857
        %3329 = vmatprep.subr.mxu0 %v1850
        %3330 = vmatpush1.xpose.msra.mxu0 %v1849
        %3331 = vmatprep.subr.mxu0 %v1842
        %3332 = vmatpush1.xpose.msra.mxu0 %v1841
        %3333 = vmatprep.subr.mxu0 %v1834
        %3334 = vmatpush1.xpose.msra.mxu0 %v1833
        %3335 = vmatprep.subr.mxu0 %v1826
        %3336 = vmatpush1.xpose.msra.mxu0 %v1825
        %3337 = vmatprep.subr.mxu0 %v1818
        %3338 = vmatpush1.xpose.msra.mxu0 %v1817
        %3339 = vmatprep.subr.mxu0 0.0
        %3340 = vmatpush2.xpose.msra.mxu0 0.0
        %3341 = vmatprep.subr.mxu0 0.0
        %3342 = vmatpush2.xpose.msra.mxu0 0.0
        %3343 = vmatprep.subr.mxu0 0.0
        %3344 = vmatpush2.xpose.msra.mxu0 0.0
        %3345 = vmatprep.subr.mxu0 0.0
        %3346 = vmatpush2.xpose.msra.mxu0 0.0
        %3347 = vmatprep.subr.mxu0 0.0
        %3348 = vmatpush2.xpose.msra.mxu0 0.0
        %3349 = vmatprep.subr.mxu0 0.0
        %3350 = vmatpush2.xpose.msra.mxu0 0.0
        %3351 = vmatprep.subr.mxu0 0.0
        %3352 = vmatpush2.xpose.msra.mxu0 0.0
        %3353 = vmatprep.subr.mxu0 0.0
        %3354 = vmatpush2.xpose.msra.mxu0 0.0
        %3355 = vmatprep.subr.mxu0 0.0
        %3356 = vmatpush2.xpose.msra.mxu0 0.0
        %3357 = vmatprep.subr.mxu0 0.0
        %3358 = vmatpush2.xpose.msra.mxu0 0.0
        %3359 = vmatprep.subr.mxu0 0.0
        %3360 = vmatpush2.xpose.msra.mxu0 0.0
        %3361 = vmatprep.subr.mxu0 0.0
        %3362 = vmatpush2.xpose.msra.mxu0 0.0
        %3363 = vmatprep.subr.mxu0 0.0
        %3364 = vmatpush2.xpose.msra.mxu0 0.0
        %3365 = vmatprep.subr.mxu0 0.0
        %3366 = vmatpush2.xpose.msra.mxu0 0.0
        %3367 = vmatprep.subr.mxu0 0.0
        %3368 = vmatpush2.xpose.msra.mxu0 0.0
        %3369 = vmatprep.subr.mxu0 0.0
        %3370 = vmatpush2.xpose.msra.mxu0 0.0
        %3371 = vmatprep.mubr.f32.mxu0 %v3072
        %3372 = vmatmul.mubr.f32.gmra.mxu0 %v3071
        %v3373 = vpop.f32.mrf.mxu0
        %v3374 = vadd.f32 %v3304, %v3373
        %v3375 = vpop.f32.mrf.mxu0
        %3376 = vdwg.mxu0
        %3377 = vmatprep.subr.mxu0 %v2060
        %3378 = vmatpush1.xpose.msra.mxu0 %v2059
        %3379 = vmatprep.subr.mxu0 %v2052
        %3380 = vmatpush1.xpose.msra.mxu0 %v2051
        %3381 = vmatprep.subr.mxu0 %v2044
        %3382 = vmatpush1.xpose.msra.mxu0 %v2043
        %3383 = vmatprep.subr.mxu0 %v2036
        %3384 = vmatpush1.xpose.msra.mxu0 %v2035
        %3385 = vmatprep.subr.mxu0 %v2028
        %3386 = vmatpush1.xpose.msra.mxu0 %v2027
        %3387 = vmatprep.subr.mxu0 %v2020
        %3388 = vmatpush1.xpose.msra.mxu0 %v2019
        %3389 = vmatprep.subr.mxu0 %v2012
        %3390 = vmatpush1.xpose.msra.mxu0 %v2011
        %3391 = vmatprep.subr.mxu0 %v2004
        %3392 = vmatpush1.xpose.msra.mxu0 %v2003
        %3393 = vmatprep.subr.mxu0 %v1996
        %3394 = vmatpush1.xpose.msra.mxu0 %v1995
        %3395 = vmatprep.subr.mxu0 %v1988
        %3396 = vmatpush1.xpose.msra.mxu0 %v1987
        %3397 = vmatprep.subr.mxu0 %v1980
        %3398 = vmatpush1.xpose.msra.mxu0 %v1979
        %3399 = vmatprep.subr.mxu0 %v1972
        %3400 = vmatpush1.xpose.msra.mxu0 %v1971
        %3401 = vmatprep.subr.mxu0 %v1964
        %3402 = vmatpush1.xpose.msra.mxu0 %v1963
        %3403 = vmatprep.subr.mxu0 %v1956
        %3404 = vmatpush1.xpose.msra.mxu0 %v1955
        %3405 = vmatprep.subr.mxu0 %v1948
        %3406 = vmatpush1.xpose.msra.mxu0 %v1947
        %3407 = vmatprep.subr.mxu0 %v1940
        %3408 = vmatpush1.xpose.msra.mxu0 %v1939
        %3409 = vmatprep.subr.mxu0 0.0
        %3410 = vmatpush2.xpose.msra.mxu0 0.0
        %3411 = vmatprep.subr.mxu0 0.0
        %3412 = vmatpush2.xpose.msra.mxu0 0.0
        %3413 = vmatprep.subr.mxu0 0.0
        %3414 = vmatpush2.xpose.msra.mxu0 0.0
        %3415 = vmatprep.subr.mxu0 0.0
        %3416 = vmatpush2.xpose.msra.mxu0 0.0
        %3417 = vmatprep.subr.mxu0 0.0
        %3418 = vmatpush2.xpose.msra.mxu0 0.0
        %3419 = vmatprep.subr.mxu0 0.0
        %3420 = vmatpush2.xpose.msra.mxu0 0.0
        %3421 = vmatprep.subr.mxu0 0.0
        %3422 = vmatpush2.xpose.msra.mxu0 0.0
        %3423 = vmatprep.subr.mxu0 0.0
        %3424 = vmatpush2.xpose.msra.mxu0 0.0
        %3425 = vmatprep.subr.mxu0 0.0
        %3426 = vmatpush2.xpose.msra.mxu0 0.0
        %3427 = vmatprep.subr.mxu0 0.0
        %3428 = vmatpush2.xpose.msra.mxu0 0.0
        %3429 = vmatprep.subr.mxu0 0.0
        %3430 = vmatpush2.xpose.msra.mxu0 0.0
        %3431 = vmatprep.subr.mxu0 0.0
        %3432 = vmatpush2.xpose.msra.mxu0 0.0
        %3433 = vmatprep.subr.mxu0 0.0
        %3434 = vmatpush2.xpose.msra.mxu0 0.0
        %3435 = vmatprep.subr.mxu0 0.0
        %3436 = vmatpush2.xpose.msra.mxu0 0.0
        %3437 = vmatprep.subr.mxu0 0.0
        %3438 = vmatpush2.xpose.msra.mxu0 0.0
        %3439 = vmatprep.subr.mxu0 0.0
        %3440 = vmatpush2.xpose.msra.mxu0 0.0
        %3441 = vmatprep.mubr.f32.mxu0 %v3074
        %3442 = vmatmul.mubr.f32.gmra.mxu0 %v3073
        %v3443 = vpop.f32.mrf.mxu0
        %v3444 = vadd.f32 0.0, %v3443
        %v3445 = vpop.f32.mrf.mxu0
        %3446 = vdwg.mxu0
        %3447 = vmatprep.subr.mxu0 %v2062
        %3448 = vmatpush1.xpose.msra.mxu0 %v2061
        %3449 = vmatprep.subr.mxu0 %v2054
        %3450 = vmatpush1.xpose.msra.mxu0 %v2053
        %3451 = vmatprep.subr.mxu0 %v2046
        %3452 = vmatpush1.xpose.msra.mxu0 %v2045
        %3453 = vmatprep.subr.mxu0 %v2038
        %3454 = vmatpush1.xpose.msra.mxu0 %v2037
        %3455 = vmatprep.subr.mxu0 %v2030
        %3456 = vmatpush1.xpose.msra.mxu0 %v2029
        %3457 = vmatprep.subr.mxu0 %v2022
        %3458 = vmatpush1.xpose.msra.mxu0 %v2021
        %3459 = vmatprep.subr.mxu0 %v2014
        %3460 = vmatpush1.xpose.msra.mxu0 %v2013
        %3461 = vmatprep.subr.mxu0 %v2006
        %3462 = vmatpush1.xpose.msra.mxu0 %v2005
        %3463 = vmatprep.subr.mxu0 %v1998
        %3464 = vmatpush1.xpose.msra.mxu0 %v1997
        %3465 = vmatprep.subr.mxu0 %v1990
        %3466 = vmatpush1.xpose.msra.mxu0 %v1989
        %3467 = vmatprep.subr.mxu0 %v1982
        %3468 = vmatpush1.xpose.msra.mxu0 %v1981
        %3469 = vmatprep.subr.mxu0 %v1974
        %3470 = vmatpush1.xpose.msra.mxu0 %v1973
        %3471 = vmatprep.subr.mxu0 %v1966
        %3472 = vmatpush1.xpose.msra.mxu0 %v1965
        %3473 = vmatprep.subr.mxu0 %v1958
        %3474 = vmatpush1.xpose.msra.mxu0 %v1957
        %3475 = vmatprep.subr.mxu0 %v1950
        %3476 = vmatpush1.xpose.msra.mxu0 %v1949
        %3477 = vmatprep.subr.mxu0 %v1942
        %3478 = vmatpush1.xpose.msra.mxu0 %v1941
        %3479 = vmatprep.subr.mxu0 0.0
        %3480 = vmatpush2.xpose.msra.mxu0 0.0
        %3481 = vmatprep.subr.mxu0 0.0
        %3482 = vmatpush2.xpose.msra.mxu0 0.0
        %3483 = vmatprep.subr.mxu0 0.0
        %3484 = vmatpush2.xpose.msra.mxu0 0.0
        %3485 = vmatprep.subr.mxu0 0.0
        %3486 = vmatpush2.xpose.msra.mxu0 0.0
        %3487 = vmatprep.subr.mxu0 0.0
        %3488 = vmatpush2.xpose.msra.mxu0 0.0
        %3489 = vmatprep.subr.mxu0 0.0
        %3490 = vmatpush2.xpose.msra.mxu0 0.0
        %3491 = vmatprep.subr.mxu0 0.0
        %3492 = vmatpush2.xpose.msra.mxu0 0.0
        %3493 = vmatprep.subr.mxu0 0.0
        %3494 = vmatpush2.xpose.msra.mxu0 0.0
        %3495 = vmatprep.subr.mxu0 0.0
        %3496 = vmatpush2.xpose.msra.mxu0 0.0
        %3497 = vmatprep.subr.mxu0 0.0
        %3498 = vmatpush2.xpose.msra.mxu0 0.0
        %3499 = vmatprep.subr.mxu0 0.0
        %3500 = vmatpush2.xpose.msra.mxu0 0.0
        %3501 = vmatprep.subr.mxu0 0.0
        %3502 = vmatpush2.xpose.msra.mxu0 0.0
        %3503 = vmatprep.subr.mxu0 0.0
        %3504 = vmatpush2.xpose.msra.mxu0 0.0
        %3505 = vmatprep.subr.mxu0 0.0
        %3506 = vmatpush2.xpose.msra.mxu0 0.0
        %3507 = vmatprep.subr.mxu0 0.0
        %3508 = vmatpush2.xpose.msra.mxu0 0.0
        %3509 = vmatprep.subr.mxu0 0.0
        %3510 = vmatpush2.xpose.msra.mxu0 0.0
        %3511 = vmatprep.mubr.f32.mxu0 %v3076
        %3512 = vmatmul.mubr.f32.gmra.mxu0 %v3075
        %v3513 = vpop.f32.mrf.mxu0
        %v3514 = vadd.f32 %v3444, %v3513
        %v3515 = vpop.f32.mrf.mxu0
        %3516 = vdwg.mxu0
        %3517 = vmatprep.subr.mxu0 %v2064
        %3518 = vmatpush1.xpose.msra.mxu0 %v2063
        %3519 = vmatprep.subr.mxu0 %v2056
        %3520 = vmatpush1.xpose.msra.mxu0 %v2055
        %3521 = vmatprep.subr.mxu0 %v2048
        %3522 = vmatpush1.xpose.msra.mxu0 %v2047
        %3523 = vmatprep.subr.mxu0 %v2040
        %3524 = vmatpush1.xpose.msra.mxu0 %v2039
        %3525 = vmatprep.subr.mxu0 %v2032
        %3526 = vmatpush1.xpose.msra.mxu0 %v2031
        %3527 = vmatprep.subr.mxu0 %v2024
        %3528 = vmatpush1.xpose.msra.mxu0 %v2023
        %3529 = vmatprep.subr.mxu0 %v2016
        %3530 = vmatpush1.xpose.msra.mxu0 %v2015
        %3531 = vmatprep.subr.mxu0 %v2008
        %3532 = vmatpush1.xpose.msra.mxu0 %v2007
        %3533 = vmatprep.subr.mxu0 %v2000
        %3534 = vmatpush1.xpose.msra.mxu0 %v1999
        %3535 = vmatprep.subr.mxu0 %v1992
        %3536 = vmatpush1.xpose.msra.mxu0 %v1991
        %3537 = vmatprep.subr.mxu0 %v1984
        %3538 = vmatpush1.xpose.msra.mxu0 %v1983
        %3539 = vmatprep.subr.mxu0 %v1976
        %3540 = vmatpush1.xpose.msra.mxu0 %v1975
        %3541 = vmatprep.subr.mxu0 %v1968
        %3542 = vmatpush1.xpose.msra.mxu0 %v1967
        %3543 = vmatprep.subr.mxu0 %v1960
        %3544 = vmatpush1.xpose.msra.mxu0 %v1959
        %3545 = vmatprep.subr.mxu0 %v1952
        %3546 = vmatpush1.xpose.msra.mxu0 %v1951
        %3547 = vmatprep.subr.mxu0 %v1944
        %3548 = vmatpush1.xpose.msra.mxu0 %v1943
        %3549 = vmatprep.subr.mxu0 0.0
        %3550 = vmatpush2.xpose.msra.mxu0 0.0
        %3551 = vmatprep.subr.mxu0 0.0
        %3552 = vmatpush2.xpose.msra.mxu0 0.0
        %3553 = vmatprep.subr.mxu0 0.0
        %3554 = vmatpush2.xpose.msra.mxu0 0.0
        %3555 = vmatprep.subr.mxu0 0.0
        %3556 = vmatpush2.xpose.msra.mxu0 0.0
        %3557 = vmatprep.subr.mxu0 0.0
        %3558 = vmatpush2.xpose.msra.mxu0 0.0
        %3559 = vmatprep.subr.mxu0 0.0
        %3560 = vmatpush2.xpose.msra.mxu0 0.0
        %3561 = vmatprep.subr.mxu0 0.0
        %3562 = vmatpush2.xpose.msra.mxu0 0.0
        %3563 = vmatprep.subr.mxu0 0.0
        %3564 = vmatpush2.xpose.msra.mxu0 0.0
        %3565 = vmatprep.subr.mxu0 0.0
        %3566 = vmatpush2.xpose.msra.mxu0 0.0
        %3567 = vmatprep.subr.mxu0 0.0
        %3568 = vmatpush2.xpose.msra.mxu0 0.0
        %3569 = vmatprep.subr.mxu0 0.0
        %3570 = vmatpush2.xpose.msra.mxu0 0.0
        %3571 = vmatprep.subr.mxu0 0.0
        %3572 = vmatpush2.xpose.msra.mxu0 0.0
        %3573 = vmatprep.subr.mxu0 0.0
        %3574 = vmatpush2.xpose.msra.mxu0 0.0
        %3575 = vmatprep.subr.mxu0 0.0
        %3576 = vmatpush2.xpose.msra.mxu0 0.0
        %3577 = vmatprep.subr.mxu0 0.0
        %3578 = vmatpush2.xpose.msra.mxu0 0.0
        %3579 = vmatprep.subr.mxu0 0.0
        %3580 = vmatpush2.xpose.msra.mxu0 0.0
        %3581 = vmatprep.mubr.f32.mxu0 %v3078
        %3582 = vmatmul.mubr.f32.gmra.mxu0 %v3077
        %v3583 = vpop.f32.mrf.mxu0
        %v3584 = vadd.f32 %v3514, %v3583
        %v3585 = vpop.f32.mrf.mxu0
        %3586 = vdwg.mxu0
        %3587 = vmatprep.subr.mxu0 %v2066
        %3588 = vmatpush1.xpose.msra.mxu0 %v2065
        %3589 = vmatprep.subr.mxu0 %v2058
        %3590 = vmatpush1.xpose.msra.mxu0 %v2057
        %3591 = vmatprep.subr.mxu0 %v2050
        %3592 = vmatpush1.xpose.msra.mxu0 %v2049
        %3593 = vmatprep.subr.mxu0 %v2042
        %3594 = vmatpush1.xpose.msra.mxu0 %v2041
        %3595 = vmatprep.subr.mxu0 %v2034
        %3596 = vmatpush1.xpose.msra.mxu0 %v2033
        %3597 = vmatprep.subr.mxu0 %v2026
        %3598 = vmatpush1.xpose.msra.mxu0 %v2025
        %3599 = vmatprep.subr.mxu0 %v2018
        %3600 = vmatpush1.xpose.msra.mxu0 %v2017
        %3601 = vmatprep.subr.mxu0 %v2010
        %3602 = vmatpush1.xpose.msra.mxu0 %v2009
        %3603 = vmatprep.subr.mxu0 %v2002
        %3604 = vmatpush1.xpose.msra.mxu0 %v2001
        %3605 = vmatprep.subr.mxu0 %v1994
        %3606 = vmatpush1.xpose.msra.mxu0 %v1993
        %3607 = vmatprep.subr.mxu0 %v1986
        %3608 = vmatpush1.xpose.msra.mxu0 %v1985
        %3609 = vmatprep.subr.mxu0 %v1978
        %3610 = vmatpush1.xpose.msra.mxu0 %v1977
        %3611 = vmatprep.subr.mxu0 %v1970
        %3612 = vmatpush1.xpose.msra.mxu0 %v1969
        %3613 = vmatprep.subr.mxu0 %v1962
        %3614 = vmatpush1.xpose.msra.mxu0 %v1961
        %3615 = vmatprep.subr.mxu0 %v1954
        %3616 = vmatpush1.xpose.msra.mxu0 %v1953
        %3617 = vmatprep.subr.mxu0 %v1946
        %3618 = vmatpush1.xpose.msra.mxu0 %v1945
        %3619 = vmatprep.subr.mxu0 0.0
        %3620 = vmatpush2.xpose.msra.mxu0 0.0
        %3621 = vmatprep.subr.mxu0 0.0
        %3622 = vmatpush2.xpose.msra.mxu0 0.0
        %3623 = vmatprep.subr.mxu0 0.0
        %3624 = vmatpush2.xpose.msra.mxu0 0.0
        %3625 = vmatprep.subr.mxu0 0.0
        %3626 = vmatpush2.xpose.msra.mxu0 0.0
        %3627 = vmatprep.subr.mxu0 0.0
        %3628 = vmatpush2.xpose.msra.mxu0 0.0
        %3629 = vmatprep.subr.mxu0 0.0
        %3630 = vmatpush2.xpose.msra.mxu0 0.0
        %3631 = vmatprep.subr.mxu0 0.0
        %3632 = vmatpush2.xpose.msra.mxu0 0.0
        %3633 = vmatprep.subr.mxu0 0.0
        %3634 = vmatpush2.xpose.msra.mxu0 0.0
        %3635 = vmatprep.subr.mxu0 0.0
        %3636 = vmatpush2.xpose.msra.mxu0 0.0
        %3637 = vmatprep.subr.mxu0 0.0
        %3638 = vmatpush2.xpose.msra.mxu0 0.0
        %3639 = vmatprep.subr.mxu0 0.0
        %3640 = vmatpush2.xpose.msra.mxu0 0.0
        %3641 = vmatprep.subr.mxu0 0.0
        %3642 = vmatpush2.xpose.msra.mxu0 0.0
        %3643 = vmatprep.subr.mxu0 0.0
        %3644 = vmatpush2.xpose.msra.mxu0 0.0
        %3645 = vmatprep.subr.mxu0 0.0
        %3646 = vmatpush2.xpose.msra.mxu0 0.0
        %3647 = vmatprep.subr.mxu0 0.0
        %3648 = vmatpush2.xpose.msra.mxu0 0.0
        %3649 = vmatprep.subr.mxu0 0.0
        %3650 = vmatpush2.xpose.msra.mxu0 0.0
        %3651 = vmatprep.mubr.f32.mxu0 %v3080
        %3652 = vmatmul.mubr.f32.gmra.mxu0 %v3079
        %v3653 = vpop.f32.mrf.mxu0
        %v3654 = vadd.f32 %v3584, %v3653
        %v3655 = vpop.f32.mrf.mxu0
        %3656 = vdwg.mxu0
        %3657 = vmatprep.subr.mxu0 %v2188
        %3658 = vmatpush1.xpose.msra.mxu0 %v2187
        %3659 = vmatprep.subr.mxu0 %v2180
        %3660 = vmatpush1.xpose.msra.mxu0 %v2179
        %3661 = vmatprep.subr.mxu0 %v2172
        %3662 = vmatpush1.xpose.msra.mxu0 %v2171
        %3663 = vmatprep.subr.mxu0 %v2164
        %3664 = vmatpush1.xpose.msra.mxu0 %v2163
        %3665 = vmatprep.subr.mxu0 %v2156
        %3666 = vmatpush1.xpose.msra.mxu0 %v2155
        %3667 = vmatprep.subr.mxu0 %v2148
        %3668 = vmatpush1.xpose.msra.mxu0 %v2147
        %3669 = vmatprep.subr.mxu0 %v2140
        %3670 = vmatpush1.xpose.msra.mxu0 %v2139
        %3671 = vmatprep.subr.mxu0 %v2132
        %3672 = vmatpush1.xpose.msra.mxu0 %v2131
        %3673 = vmatprep.subr.mxu0 %v2124
        %3674 = vmatpush1.xpose.msra.mxu0 %v2123
        %3675 = vmatprep.subr.mxu0 %v2116
        %3676 = vmatpush1.xpose.msra.mxu0 %v2115
        %3677 = vmatprep.subr.mxu0 %v2108
        %3678 = vmatpush1.xpose.msra.mxu0 %v2107
        %3679 = vmatprep.subr.mxu0 %v2100
        %3680 = vmatpush1.xpose.msra.mxu0 %v2099
        %3681 = vmatprep.subr.mxu0 %v2092
        %3682 = vmatpush1.xpose.msra.mxu0 %v2091
        %3683 = vmatprep.subr.mxu0 %v2084
        %3684 = vmatpush1.xpose.msra.mxu0 %v2083
        %3685 = vmatprep.subr.mxu0 %v2076
        %3686 = vmatpush1.xpose.msra.mxu0 %v2075
        %3687 = vmatprep.subr.mxu0 %v2068
        %3688 = vmatpush1.xpose.msra.mxu0 %v2067
        %3689 = vmatprep.subr.mxu0 0.0
        %3690 = vmatpush2.xpose.msra.mxu0 0.0
        %3691 = vmatprep.subr.mxu0 0.0
        %3692 = vmatpush2.xpose.msra.mxu0 0.0
        %3693 = vmatprep.subr.mxu0 0.0
        %3694 = vmatpush2.xpose.msra.mxu0 0.0
        %3695 = vmatprep.subr.mxu0 0.0
        %3696 = vmatpush2.xpose.msra.mxu0 0.0
        %3697 = vmatprep.subr.mxu0 0.0
        %3698 = vmatpush2.xpose.msra.mxu0 0.0
        %3699 = vmatprep.subr.mxu0 0.0
        %3700 = vmatpush2.xpose.msra.mxu0 0.0
        %3701 = vmatprep.subr.mxu0 0.0
        %3702 = vmatpush2.xpose.msra.mxu0 0.0
        %3703 = vmatprep.subr.mxu0 0.0
        %3704 = vmatpush2.xpose.msra.mxu0 0.0
        %3705 = vmatprep.subr.mxu0 0.0
        %3706 = vmatpush2.xpose.msra.mxu0 0.0
        %3707 = vmatprep.subr.mxu0 0.0
        %3708 = vmatpush2.xpose.msra.mxu0 0.0
        %3709 = vmatprep.subr.mxu0 0.0
        %3710 = vmatpush2.xpose.msra.mxu0 0.0
        %3711 = vmatprep.subr.mxu0 0.0
        %3712 = vmatpush2.xpose.msra.mxu0 0.0
        %3713 = vmatprep.subr.mxu0 0.0
        %3714 = vmatpush2.xpose.msra.mxu0 0.0
        %3715 = vmatprep.subr.mxu0 0.0
        %3716 = vmatpush2.xpose.msra.mxu0 0.0
        %3717 = vmatprep.subr.mxu0 0.0
        %3718 = vmatpush2.xpose.msra.mxu0 0.0
        %3719 = vmatprep.subr.mxu0 0.0
        %3720 = vmatpush2.xpose.msra.mxu0 0.0
        %3721 = vmatprep.mubr.f32.mxu0 %v3082
        %3722 = vmatmul.mubr.f32.gmra.mxu0 %v3081
        %v3723 = vpop.f32.mrf.mxu0
        %v3724 = vadd.f32 0.0, %v3723
        %v3725 = vpop.f32.mrf.mxu0
        %3726 = vdwg.mxu0
        %3727 = vmatprep.subr.mxu0 %v2190
        %3728 = vmatpush1.xpose.msra.mxu0 %v2189
        %3729 = vmatprep.subr.mxu0 %v2182
        %3730 = vmatpush1.xpose.msra.mxu0 %v2181
        %3731 = vmatprep.subr.mxu0 %v2174
        %3732 = vmatpush1.xpose.msra.mxu0 %v2173
        %3733 = vmatprep.subr.mxu0 %v2166
        %3734 = vmatpush1.xpose.msra.mxu0 %v2165
        %3735 = vmatprep.subr.mxu0 %v2158
        %3736 = vmatpush1.xpose.msra.mxu0 %v2157
        %3737 = vmatprep.subr.mxu0 %v2150
        %3738 = vmatpush1.xpose.msra.mxu0 %v2149
        %3739 = vmatprep.subr.mxu0 %v2142
        %3740 = vmatpush1.xpose.msra.mxu0 %v2141
        %3741 = vmatprep.subr.mxu0 %v2134
        %3742 = vmatpush1.xpose.msra.mxu0 %v2133
        %3743 = vmatprep.subr.mxu0 %v2126
        %3744 = vmatpush1.xpose.msra.mxu0 %v2125
        %3745 = vmatprep.subr.mxu0 %v2118
        %3746 = vmatpush1.xpose.msra.mxu0 %v2117
        %3747 = vmatprep.subr.mxu0 %v2110
        %3748 = vmatpush1.xpose.msra.mxu0 %v2109
        %3749 = vmatprep.subr.mxu0 %v2102
        %3750 = vmatpush1.xpose.msra.mxu0 %v2101
        %3751 = vmatprep.subr.mxu0 %v2094
        %3752 = vmatpush1.xpose.msra.mxu0 %v2093
        %3753 = vmatprep.subr.mxu0 %v2086
        %3754 = vmatpush1.xpose.msra.mxu0 %v2085
        %3755 = vmatprep.subr.mxu0 %v2078
        %3756 = vmatpush1.xpose.msra.mxu0 %v2077
        %3757 = vmatprep.subr.mxu0 %v2070
        %3758 = vmatpush1.xpose.msra.mxu0 %v2069
        %3759 = vmatprep.subr.mxu0 0.0
        %3760 = vmatpush2.xpose.msra.mxu0 0.0
        %3761 = vmatprep.subr.mxu0 0.0
        %3762 = vmatpush2.xpose.msra.mxu0 0.0
        %3763 = vmatprep.subr.mxu0 0.0
        %3764 = vmatpush2.xpose.msra.mxu0 0.0
        %3765 = vmatprep.subr.mxu0 0.0
        %3766 = vmatpush2.xpose.msra.mxu0 0.0
        %3767 = vmatprep.subr.mxu0 0.0
        %3768 = vmatpush2.xpose.msra.mxu0 0.0
        %3769 = vmatprep.subr.mxu0 0.0
        %3770 = vmatpush2.xpose.msra.mxu0 0.0
        %3771 = vmatprep.subr.mxu0 0.0
        %3772 = vmatpush2.xpose.msra.mxu0 0.0
        %3773 = vmatprep.subr.mxu0 0.0
        %3774 = vmatpush2.xpose.msra.mxu0 0.0
        %3775 = vmatprep.subr.mxu0 0.0
        %3776 = vmatpush2.xpose.msra.mxu0 0.0
        %3777 = vmatprep.subr.mxu0 0.0
        %3778 = vmatpush2.xpose.msra.mxu0 0.0
        %3779 = vmatprep.subr.mxu0 0.0
        %3780 = vmatpush2.xpose.msra.mxu0 0.0
        %3781 = vmatprep.subr.mxu0 0.0
        %3782 = vmatpush2.xpose.msra.mxu0 0.0
        %3783 = vmatprep.subr.mxu0 0.0
        %3784 = vmatpush2.xpose.msra.mxu0 0.0
        %3785 = vmatprep.subr.mxu0 0.0
        %3786 = vmatpush2.xpose.msra.mxu0 0.0
        %3787 = vmatprep.subr.mxu0 0.0
        %3788 = vmatpush2.xpose.msra.mxu0 0.0
        %3789 = vmatprep.subr.mxu0 0.0
        %3790 = vmatpush2.xpose.msra.mxu0 0.0
        %3791 = vmatprep.mubr.f32.mxu0 %v3084
        %3792 = vmatmul.mubr.f32.gmra.mxu0 %v3083
        %v3793 = vpop.f32.mrf.mxu0
        %v3794 = vadd.f32 %v3724, %v3793
        %v3795 = vpop.f32.mrf.mxu0
        %3796 = vdwg.mxu0
        %3797 = vmatprep.subr.mxu0 %v2192
        %3798 = vmatpush1.xpose.msra.mxu0 %v2191
        %3799 = vmatprep.subr.mxu0 %v2184
        %3800 = vmatpush1.xpose.msra.mxu0 %v2183
        %3801 = vmatprep.subr.mxu0 %v2176
        %3802 = vmatpush1.xpose.msra.mxu0 %v2175
        %3803 = vmatprep.subr.mxu0 %v2168
        %3804 = vmatpush1.xpose.msra.mxu0 %v2167
        %3805 = vmatprep.subr.mxu0 %v2160
        %3806 = vmatpush1.xpose.msra.mxu0 %v2159
        %3807 = vmatprep.subr.mxu0 %v2152
        %3808 = vmatpush1.xpose.msra.mxu0 %v2151
        %3809 = vmatprep.subr.mxu0 %v2144
        %3810 = vmatpush1.xpose.msra.mxu0 %v2143
        %3811 = vmatprep.subr.mxu0 %v2136
        %3812 = vmatpush1.xpose.msra.mxu0 %v2135
        %3813 = vmatprep.subr.mxu0 %v2128
        %3814 = vmatpush1.xpose.msra.mxu0 %v2127
        %3815 = vmatprep.subr.mxu0 %v2120
        %3816 = vmatpush1.xpose.msra.mxu0 %v2119
        %3817 = vmatprep.subr.mxu0 %v2112
        %3818 = vmatpush1.xpose.msra.mxu0 %v2111
        %3819 = vmatprep.subr.mxu0 %v2104
        %3820 = vmatpush1.xpose.msra.mxu0 %v2103
        %3821 = vmatprep.subr.mxu0 %v2096
        %3822 = vmatpush1.xpose.msra.mxu0 %v2095
        %3823 = vmatprep.subr.mxu0 %v2088
        %3824 = vmatpush1.xpose.msra.mxu0 %v2087
        %3825 = vmatprep.subr.mxu0 %v2080
        %3826 = vmatpush1.xpose.msra.mxu0 %v2079
        %3827 = vmatprep.subr.mxu0 %v2072
        %3828 = vmatpush1.xpose.msra.mxu0 %v2071
        %3829 = vmatprep.subr.mxu0 0.0
        %3830 = vmatpush2.xpose.msra.mxu0 0.0
        %3831 = vmatprep.subr.mxu0 0.0
        %3832 = vmatpush2.xpose.msra.mxu0 0.0
        %3833 = vmatprep.subr.mxu0 0.0
        %3834 = vmatpush2.xpose.msra.mxu0 0.0
        %3835 = vmatprep.subr.mxu0 0.0
        %3836 = vmatpush2.xpose.msra.mxu0 0.0
        %3837 = vmatprep.subr.mxu0 0.0
        %3838 = vmatpush2.xpose.msra.mxu0 0.0
        %3839 = vmatprep.subr.mxu0 0.0
        %3840 = vmatpush2.xpose.msra.mxu0 0.0
        %3841 = vmatprep.subr.mxu0 0.0
        %3842 = vmatpush2.xpose.msra.mxu0 0.0
        %3843 = vmatprep.subr.mxu0 0.0
        %3844 = vmatpush2.xpose.msra.mxu0 0.0
        %3845 = vmatprep.subr.mxu0 0.0
        %3846 = vmatpush2.xpose.msra.mxu0 0.0
        %3847 = vmatprep.subr.mxu0 0.0
        %3848 = vmatpush2.xpose.msra.mxu0 0.0
        %3849 = vmatprep.subr.mxu0 0.0
        %3850 = vmatpush2.xpose.msra.mxu0 0.0
        %3851 = vmatprep.subr.mxu0 0.0
        %3852 = vmatpush2.xpose.msra.mxu0 0.0
        %3853 = vmatprep.subr.mxu0 0.0
        %3854 = vmatpush2.xpose.msra.mxu0 0.0
        %3855 = vmatprep.subr.mxu0 0.0
        %3856 = vmatpush2.xpose.msra.mxu0 0.0
        %3857 = vmatprep.subr.mxu0 0.0
        %3858 = vmatpush2.xpose.msra.mxu0 0.0
        %3859 = vmatprep.subr.mxu0 0.0
        %3860 = vmatpush2.xpose.msra.mxu0 0.0
        %3861 = vmatprep.mubr.f32.mxu0 %v3086
        %3862 = vmatmul.mubr.f32.gmra.mxu0 %v3085
        %v3863 = vpop.f32.mrf.mxu0
        %v3864 = vadd.f32 %v3794, %v3863
        %v3865 = vpop.f32.mrf.mxu0
        %3866 = vdwg.mxu0
        %3867 = vmatprep.subr.mxu0 %v2194
        %3868 = vmatpush1.xpose.msra.mxu0 %v2193
        %3869 = vmatprep.subr.mxu0 %v2186
        %3870 = vmatpush1.xpose.msra.mxu0 %v2185
        %3871 = vmatprep.subr.mxu0 %v2178
        %3872 = vmatpush1.xpose.msra.mxu0 %v2177
        %3873 = vmatprep.subr.mxu0 %v2170
        %3874 = vmatpush1.xpose.msra.mxu0 %v2169
        %3875 = vmatprep.subr.mxu0 %v2162
        %3876 = vmatpush1.xpose.msra.mxu0 %v2161
        %3877 = vmatprep.subr.mxu0 %v2154
        %3878 = vmatpush1.xpose.msra.mxu0 %v2153
        %3879 = vmatprep.subr.mxu0 %v2146
        %3880 = vmatpush1.xpose.msra.mxu0 %v2145
        %3881 = vmatprep.subr.mxu0 %v2138
        %3882 = vmatpush1.xpose.msra.mxu0 %v2137
        %3883 = vmatprep.subr.mxu0 %v2130
        %3884 = vmatpush1.xpose.msra.mxu0 %v2129
        %3885 = vmatprep.subr.mxu0 %v2122
        %3886 = vmatpush1.xpose.msra.mxu0 %v2121
        %3887 = vmatprep.subr.mxu0 %v2114
        %3888 = vmatpush1.xpose.msra.mxu0 %v2113
        %3889 = vmatprep.subr.mxu0 %v2106
        %3890 = vmatpush1.xpose.msra.mxu0 %v2105
        %3891 = vmatprep.subr.mxu0 %v2098
        %3892 = vmatpush1.xpose.msra.mxu0 %v2097
        %3893 = vmatprep.subr.mxu0 %v2090
        %3894 = vmatpush1.xpose.msra.mxu0 %v2089
        %3895 = vmatprep.subr.mxu0 %v2082
        %3896 = vmatpush1.xpose.msra.mxu0 %v2081
        %3897 = vmatprep.subr.mxu0 %v2074
        %3898 = vmatpush1.xpose.msra.mxu0 %v2073
        %3899 = vmatprep.subr.mxu0 0.0
        %3900 = vmatpush2.xpose.msra.mxu0 0.0
        %3901 = vmatprep.subr.mxu0 0.0
        %3902 = vmatpush2.xpose.msra.mxu0 0.0
        %3903 = vmatprep.subr.mxu0 0.0
        %3904 = vmatpush2.xpose.msra.mxu0 0.0
        %3905 = vmatprep.subr.mxu0 0.0
        %3906 = vmatpush2.xpose.msra.mxu0 0.0
        %3907 = vmatprep.subr.mxu0 0.0
        %3908 = vmatpush2.xpose.msra.mxu0 0.0
        %3909 = vmatprep.subr.mxu0 0.0
        %3910 = vmatpush2.xpose.msra.mxu0 0.0
        %3911 = vmatprep.subr.mxu0 0.0
        %3912 = vmatpush2.xpose.msra.mxu0 0.0
        %3913 = vmatprep.subr.mxu0 0.0
        %3914 = vmatpush2.xpose.msra.mxu0 0.0
        %3915 = vmatprep.subr.mxu0 0.0
        %3916 = vmatpush2.xpose.msra.mxu0 0.0
        %3917 = vmatprep.subr.mxu0 0.0
        %3918 = vmatpush2.xpose.msra.mxu0 0.0
        %3919 = vmatprep.subr.mxu0 0.0
        %3920 = vmatpush2.xpose.msra.mxu0 0.0
        %3921 = vmatprep.subr.mxu0 0.0
        %3922 = vmatpush2.xpose.msra.mxu0 0.0
        %3923 = vmatprep.subr.mxu0 0.0
        %3924 = vmatpush2.xpose.msra.mxu0 0.0
        %3925 = vmatprep.subr.mxu0 0.0
        %3926 = vmatpush2.xpose.msra.mxu0 0.0
        %3927 = vmatprep.subr.mxu0 0.0
        %3928 = vmatpush2.xpose.msra.mxu0 0.0
        %3929 = vmatprep.subr.mxu0 0.0
        %3930 = vmatpush2.xpose.msra.mxu0 0.0
        %3931 = vmatprep.mubr.f32.mxu0 %v3088
        %3932 = vmatmul.mubr.f32.gmra.mxu0 %v3087
        %v3933 = vpop.f32.mrf.mxu0
        %v3934 = vadd.f32 %v3864, %v3933
        %v3935 = vpop.f32.mrf.mxu0
        %3936 = vdwg.mxu0
        %3937 = vmatprep.subr.mxu0 %v2316
        %3938 = vmatpush1.xpose.msra.mxu0 %v2315
        %3939 = vmatprep.subr.mxu0 %v2308
        %3940 = vmatpush1.xpose.msra.mxu0 %v2307
        %3941 = vmatprep.subr.mxu0 %v2300
        %3942 = vmatpush1.xpose.msra.mxu0 %v2299
        %3943 = vmatprep.subr.mxu0 %v2292
        %3944 = vmatpush1.xpose.msra.mxu0 %v2291
        %3945 = vmatprep.subr.mxu0 %v2284
        %3946 = vmatpush1.xpose.msra.mxu0 %v2283
        %3947 = vmatprep.subr.mxu0 %v2276
        %3948 = vmatpush1.xpose.msra.mxu0 %v2275
        %3949 = vmatprep.subr.mxu0 %v2268
        %3950 = vmatpush1.xpose.msra.mxu0 %v2267
        %3951 = vmatprep.subr.mxu0 %v2260
        %3952 = vmatpush1.xpose.msra.mxu0 %v2259
        %3953 = vmatprep.subr.mxu0 %v2252
        %3954 = vmatpush1.xpose.msra.mxu0 %v2251
        %3955 = vmatprep.subr.mxu0 %v2244
        %3956 = vmatpush1.xpose.msra.mxu0 %v2243
        %3957 = vmatprep.subr.mxu0 %v2236
        %3958 = vmatpush1.xpose.msra.mxu0 %v2235
        %3959 = vmatprep.subr.mxu0 %v2228
        %3960 = vmatpush1.xpose.msra.mxu0 %v2227
        %3961 = vmatprep.subr.mxu0 %v2220
        %3962 = vmatpush1.xpose.msra.mxu0 %v2219
        %3963 = vmatprep.subr.mxu0 %v2212
        %3964 = vmatpush1.xpose.msra.mxu0 %v2211
        %3965 = vmatprep.subr.mxu0 %v2204
        %3966 = vmatpush1.xpose.msra.mxu0 %v2203
        %3967 = vmatprep.subr.mxu0 %v2196
        %3968 = vmatpush1.xpose.msra.mxu0 %v2195
        %3969 = vmatprep.subr.mxu0 0.0
        %3970 = vmatpush2.xpose.msra.mxu0 0.0
        %3971 = vmatprep.subr.mxu0 0.0
        %3972 = vmatpush2.xpose.msra.mxu0 0.0
        %3973 = vmatprep.subr.mxu0 0.0
        %3974 = vmatpush2.xpose.msra.mxu0 0.0
        %3975 = vmatprep.subr.mxu0 0.0
        %3976 = vmatpush2.xpose.msra.mxu0 0.0
        %3977 = vmatprep.subr.mxu0 0.0
        %3978 = vmatpush2.xpose.msra.mxu0 0.0
        %3979 = vmatprep.subr.mxu0 0.0
        %3980 = vmatpush2.xpose.msra.mxu0 0.0
        %3981 = vmatprep.subr.mxu0 0.0
        %3982 = vmatpush2.xpose.msra.mxu0 0.0
        %3983 = vmatprep.subr.mxu0 0.0
        %3984 = vmatpush2.xpose.msra.mxu0 0.0
        %3985 = vmatprep.subr.mxu0 0.0
        %3986 = vmatpush2.xpose.msra.mxu0 0.0
        %3987 = vmatprep.subr.mxu0 0.0
        %3988 = vmatpush2.xpose.msra.mxu0 0.0
        %3989 = vmatprep.subr.mxu0 0.0
        %3990 = vmatpush2.xpose.msra.mxu0 0.0
        %3991 = vmatprep.subr.mxu0 0.0
        %3992 = vmatpush2.xpose.msra.mxu0 0.0
        %3993 = vmatprep.subr.mxu0 0.0
        %3994 = vmatpush2.xpose.msra.mxu0 0.0
        %3995 = vmatprep.subr.mxu0 0.0
        %3996 = vmatpush2.xpose.msra.mxu0 0.0
        %3997 = vmatprep.subr.mxu0 0.0
        %3998 = vmatpush2.xpose.msra.mxu0 0.0
        %3999 = vmatprep.subr.mxu0 0.0
        %4000 = vmatpush2.xpose.msra.mxu0 0.0
        %4001 = vmatprep.mubr.f32.mxu0 %v3090
        %4002 = vmatmul.mubr.f32.gmra.mxu0 %v3089
        %v4003 = vpop.f32.mrf.mxu0
        %v4004 = vadd.f32 0.0, %v4003
        %v4005 = vpop.f32.mrf.mxu0
        %4006 = vdwg.mxu0
        %4007 = vmatprep.subr.mxu0 %v2318
        %4008 = vmatpush1.xpose.msra.mxu0 %v2317
        %4009 = vmatprep.subr.mxu0 %v2310
        %4010 = vmatpush1.xpose.msra.mxu0 %v2309
        %4011 = vmatprep.subr.mxu0 %v2302
        %4012 = vmatpush1.xpose.msra.mxu0 %v2301
        %4013 = vmatprep.subr.mxu0 %v2294
        %4014 = vmatpush1.xpose.msra.mxu0 %v2293
        %4015 = vmatprep.subr.mxu0 %v2286
        %4016 = vmatpush1.xpose.msra.mxu0 %v2285
        %4017 = vmatprep.subr.mxu0 %v2278
        %4018 = vmatpush1.xpose.msra.mxu0 %v2277
        %4019 = vmatprep.subr.mxu0 %v2270
        %4020 = vmatpush1.xpose.msra.mxu0 %v2269
        %4021 = vmatprep.subr.mxu0 %v2262
        %4022 = vmatpush1.xpose.msra.mxu0 %v2261
        %4023 = vmatprep.subr.mxu0 %v2254
        %4024 = vmatpush1.xpose.msra.mxu0 %v2253
        %4025 = vmatprep.subr.mxu0 %v2246
        %4026 = vmatpush1.xpose.msra.mxu0 %v2245
        %4027 = vmatprep.subr.mxu0 %v2238
        %4028 = vmatpush1.xpose.msra.mxu0 %v2237
        %4029 = vmatprep.subr.mxu0 %v2230
        %4030 = vmatpush1.xpose.msra.mxu0 %v2229
        %4031 = vmatprep.subr.mxu0 %v2222
        %4032 = vmatpush1.xpose.msra.mxu0 %v2221
        %4033 = vmatprep.subr.mxu0 %v2214
        %4034 = vmatpush1.xpose.msra.mxu0 %v2213
        %4035 = vmatprep.subr.mxu0 %v2206
        %4036 = vmatpush1.xpose.msra.mxu0 %v2205
        %4037 = vmatprep.subr.mxu0 %v2198
        %4038 = vmatpush1.xpose.msra.mxu0 %v2197
        %4039 = vmatprep.subr.mxu0 0.0
        %4040 = vmatpush2.xpose.msra.mxu0 0.0
        %4041 = vmatprep.subr.mxu0 0.0
        %4042 = vmatpush2.xpose.msra.mxu0 0.0
        %4043 = vmatprep.subr.mxu0 0.0
        %4044 = vmatpush2.xpose.msra.mxu0 0.0
        %4045 = vmatprep.subr.mxu0 0.0
        %4046 = vmatpush2.xpose.msra.mxu0 0.0
        %4047 = vmatprep.subr.mxu0 0.0
        %4048 = vmatpush2.xpose.msra.mxu0 0.0
        %4049 = vmatprep.subr.mxu0 0.0
        %4050 = vmatpush2.xpose.msra.mxu0 0.0
        %4051 = vmatprep.subr.mxu0 0.0
        %4052 = vmatpush2.xpose.msra.mxu0 0.0
        %4053 = vmatprep.subr.mxu0 0.0
        %4054 = vmatpush2.xpose.msra.mxu0 0.0
        %4055 = vmatprep.subr.mxu0 0.0
        %4056 = vmatpush2.xpose.msra.mxu0 0.0
        %4057 = vmatprep.subr.mxu0 0.0
        %4058 = vmatpush2.xpose.msra.mxu0 0.0
        %4059 = vmatprep.subr.mxu0 0.0
        %4060 = vmatpush2.xpose.msra.mxu0 0.0
        %4061 = vmatprep.subr.mxu0 0.0
        %4062 = vmatpush2.xpose.msra.mxu0 0.0
        %4063 = vmatprep.subr.mxu0 0.0
        %4064 = vmatpush2.xpose.msra.mxu0 0.0
        %4065 = vmatprep.subr.mxu0 0.0
        %4066 = vmatpush2.xpose.msra.mxu0 0.0
        %4067 = vmatprep.subr.mxu0 0.0
        %4068 = vmatpush2.xpose.msra.mxu0 0.0
        %4069 = vmatprep.subr.mxu0 0.0
        %4070 = vmatpush2.xpose.msra.mxu0 0.0
        %4071 = vmatprep.mubr.f32.mxu0 %v3092
        %4072 = vmatmul.mubr.f32.gmra.mxu0 %v3091
        %v4073 = vpop.f32.mrf.mxu0
        %v4074 = vadd.f32 %v4004, %v4073
        %v4075 = vpop.f32.mrf.mxu0
        %4076 = vdwg.mxu0
        %4077 = vmatprep.subr.mxu0 %v2320
        %4078 = vmatpush1.xpose.msra.mxu0 %v2319
        %4079 = vmatprep.subr.mxu0 %v2312
        %4080 = vmatpush1.xpose.msra.mxu0 %v2311
        %4081 = vmatprep.subr.mxu0 %v2304
        %4082 = vmatpush1.xpose.msra.mxu0 %v2303
        %4083 = vmatprep.subr.mxu0 %v2296
        %4084 = vmatpush1.xpose.msra.mxu0 %v2295
        %4085 = vmatprep.subr.mxu0 %v2288
        %4086 = vmatpush1.xpose.msra.mxu0 %v2287
        %4087 = vmatprep.subr.mxu0 %v2280
        %4088 = vmatpush1.xpose.msra.mxu0 %v2279
        %4089 = vmatprep.subr.mxu0 %v2272
        %4090 = vmatpush1.xpose.msra.mxu0 %v2271
        %4091 = vmatprep.subr.mxu0 %v2264
        %4092 = vmatpush1.xpose.msra.mxu0 %v2263
        %4093 = vmatprep.subr.mxu0 %v2256
        %4094 = vmatpush1.xpose.msra.mxu0 %v2255
        %4095 = vmatprep.subr.mxu0 %v2248
        %4096 = vmatpush1.xpose.msra.mxu0 %v2247
        %4097 = vmatprep.subr.mxu0 %v2240
        %4098 = vmatpush1.xpose.msra.mxu0 %v2239
        %4099 = vmatprep.subr.mxu0 %v2232
        %4100 = vmatpush1.xpose.msra.mxu0 %v2231
        %4101 = vmatprep.subr.mxu0 %v2224
        %4102 = vmatpush1.xpose.msra.mxu0 %v2223
        %4103 = vmatprep.subr.mxu0 %v2216
        %4104 = vmatpush1.xpose.msra.mxu0 %v2215
        %4105 = vmatprep.subr.mxu0 %v2208
        %4106 = vmatpush1.xpose.msra.mxu0 %v2207
        %4107 = vmatprep.subr.mxu0 %v2200
        %4108 = vmatpush1.xpose.msra.mxu0 %v2199
        %4109 = vmatprep.subr.mxu0 0.0
        %4110 = vmatpush2.xpose.msra.mxu0 0.0
        %4111 = vmatprep.subr.mxu0 0.0
        %4112 = vmatpush2.xpose.msra.mxu0 0.0
        %4113 = vmatprep.subr.mxu0 0.0
        %4114 = vmatpush2.xpose.msra.mxu0 0.0
        %4115 = vmatprep.subr.mxu0 0.0
        %4116 = vmatpush2.xpose.msra.mxu0 0.0
        %4117 = vmatprep.subr.mxu0 0.0
        %4118 = vmatpush2.xpose.msra.mxu0 0.0
        %4119 = vmatprep.subr.mxu0 0.0
        %4120 = vmatpush2.xpose.msra.mxu0 0.0
        %4121 = vmatprep.subr.mxu0 0.0
        %4122 = vmatpush2.xpose.msra.mxu0 0.0
        %4123 = vmatprep.subr.mxu0 0.0
        %4124 = vmatpush2.xpose.msra.mxu0 0.0
        %4125 = vmatprep.subr.mxu0 0.0
        %4126 = vmatpush2.xpose.msra.mxu0 0.0
        %4127 = vmatprep.subr.mxu0 0.0
        %4128 = vmatpush2.xpose.msra.mxu0 0.0
        %4129 = vmatprep.subr.mxu0 0.0
        %4130 = vmatpush2.xpose.msra.mxu0 0.0
        %4131 = vmatprep.subr.mxu0 0.0
        %4132 = vmatpush2.xpose.msra.mxu0 0.0
        %4133 = vmatprep.subr.mxu0 0.0
        %4134 = vmatpush2.xpose.msra.mxu0 0.0
        %4135 = vmatprep.subr.mxu0 0.0
        %4136 = vmatpush2.xpose.msra.mxu0 0.0
        %4137 = vmatprep.subr.mxu0 0.0
        %4138 = vmatpush2.xpose.msra.mxu0 0.0
        %4139 = vmatprep.subr.mxu0 0.0
        %4140 = vmatpush2.xpose.msra.mxu0 0.0
        %4141 = vmatprep.mubr.f32.mxu0 %v3094
        %4142 = vmatmul.mubr.f32.gmra.mxu0 %v3093
        %v4143 = vpop.f32.mrf.mxu0
        %v4144 = vadd.f32 %v4074, %v4143
        %v4145 = vpop.f32.mrf.mxu0
        %4146 = vdwg.mxu0
        %4147 = vmatprep.subr.mxu0 %v2322
        %4148 = vmatpush1.xpose.msra.mxu0 %v2321
        %4149 = vmatprep.subr.mxu0 %v2314
        %4150 = vmatpush1.xpose.msra.mxu0 %v2313
        %4151 = vmatprep.subr.mxu0 %v2306
        %4152 = vmatpush1.xpose.msra.mxu0 %v2305
        %4153 = vmatprep.subr.mxu0 %v2298
        %4154 = vmatpush1.xpose.msra.mxu0 %v2297
        %4155 = vmatprep.subr.mxu0 %v2290
        %4156 = vmatpush1.xpose.msra.mxu0 %v2289
        %4157 = vmatprep.subr.mxu0 %v2282
        %4158 = vmatpush1.xpose.msra.mxu0 %v2281
        %4159 = vmatprep.subr.mxu0 %v2274
        %4160 = vmatpush1.xpose.msra.mxu0 %v2273
        %4161 = vmatprep.subr.mxu0 %v2266
        %4162 = vmatpush1.xpose.msra.mxu0 %v2265
        %4163 = vmatprep.subr.mxu0 %v2258
        %4164 = vmatpush1.xpose.msra.mxu0 %v2257
        %4165 = vmatprep.subr.mxu0 %v2250
        %4166 = vmatpush1.xpose.msra.mxu0 %v2249
        %4167 = vmatprep.subr.mxu0 %v2242
        %4168 = vmatpush1.xpose.msra.mxu0 %v2241
        %4169 = vmatprep.subr.mxu0 %v2234
        %4170 = vmatpush1.xpose.msra.mxu0 %v2233
        %4171 = vmatprep.subr.mxu0 %v2226
        %4172 = vmatpush1.xpose.msra.mxu0 %v2225
        %4173 = vmatprep.subr.mxu0 %v2218
        %4174 = vmatpush1.xpose.msra.mxu0 %v2217
        %4175 = vmatprep.subr.mxu0 %v2210
        %4176 = vmatpush1.xpose.msra.mxu0 %v2209
        %4177 = vmatprep.subr.mxu0 %v2202
        %4178 = vmatpush1.xpose.msra.mxu0 %v2201
        %4179 = vmatprep.subr.mxu0 0.0
        %4180 = vmatpush2.xpose.msra.mxu0 0.0
        %4181 = vmatprep.subr.mxu0 0.0
        %4182 = vmatpush2.xpose.msra.mxu0 0.0
        %4183 = vmatprep.subr.mxu0 0.0
        %4184 = vmatpush2.xpose.msra.mxu0 0.0
        %4185 = vmatprep.subr.mxu0 0.0
        %4186 = vmatpush2.xpose.msra.mxu0 0.0
        %4187 = vmatprep.subr.mxu0 0.0
        %4188 = vmatpush2.xpose.msra.mxu0 0.0
        %4189 = vmatprep.subr.mxu0 0.0
        %4190 = vmatpush2.xpose.msra.mxu0 0.0
        %4191 = vmatprep.subr.mxu0 0.0
        %4192 = vmatpush2.xpose.msra.mxu0 0.0
        %4193 = vmatprep.subr.mxu0 0.0
        %4194 = vmatpush2.xpose.msra.mxu0 0.0
        %4195 = vmatprep.subr.mxu0 0.0
        %4196 = vmatpush2.xpose.msra.mxu0 0.0
        %4197 = vmatprep.subr.mxu0 0.0
        %4198 = vmatpush2.xpose.msra.mxu0 0.0
        %4199 = vmatprep.subr.mxu0 0.0
        %4200 = vmatpush2.xpose.msra.mxu0 0.0
        %4201 = vmatprep.subr.mxu0 0.0
        %4202 = vmatpush2.xpose.msra.mxu0 0.0
        %4203 = vmatprep.subr.mxu0 0.0
        %4204 = vmatpush2.xpose.msra.mxu0 0.0
        %4205 = vmatprep.subr.mxu0 0.0
        %4206 = vmatpush2.xpose.msra.mxu0 0.0
        %4207 = vmatprep.subr.mxu0 0.0
        %4208 = vmatpush2.xpose.msra.mxu0 0.0
        %4209 = vmatprep.subr.mxu0 0.0
        %4210 = vmatpush2.xpose.msra.mxu0 0.0
        %4211 = vmatprep.mubr.f32.mxu0 %v3096
        %4212 = vmatmul.mubr.f32.gmra.mxu0 %v3095
        %v4213 = vpop.f32.mrf.mxu0
        %v4214 = vadd.f32 %v4144, %v4213
        %v4215 = vpop.f32.mrf.mxu0
        %4216 = vdwg.mxu0
        %v4217 = vld [vmem:[#allocation2] sm:$0xf]
        %v4222 = vrot.slane %v3654, 7
        %vm4223 = vcmask 1041409
        %v4224 = vsel %vm4223, %v4222, %v3374
        %v4225 = vrot.slane %v3934, 6
        %vm4226 = vcmask 1042434
        %v4227 = vsel %vm4226, %v4225, %v4224
        %v4228 = vrot.slane %v4214, 5
        %vm4229 = vcmask 1043459
        %v4230 = vsel %vm4229, %v4228, %v4227
        %v4232 = vadd.f32 %v4217, %v4230
        %4233 = vst [vmem:[#allocation2] sm:$0xf] %v4232
        %v4234 = vld [vmem:[#allocation3] sm:$0xf]
        %v4235 = vrot.slane %v3374, 1
        %v4236 = vsel %vm4223, %v3654, %v4235
        %v4237 = vrot.slane %v3934, 7
        %v4238 = vsel %vm4226, %v4237, %v4236
        %v4239 = vrot.slane %v4214, 6
        %v4240 = vsel %vm4229, %v4239, %v4238
        %v4242 = vadd.f32 %v4234, %v4240
        %4243 = vst [vmem:[#allocation3] sm:$0xf] %v4242
        %p4244 = scmp.eq.s32.totalorder %s16, 3
        // Predicated region
        $region33: #{tpu_custom_call.1} parent=23 // pred_check
          %p4245 = pneg %p4244
        $region34: #{tpu_custom_call.1} parent=23 // pred_check_branch
          %4247 = sbr.rel (%p4245) target = $region36
        $region35: #{tpu_custom_call.1} parent=23 // pred_region
          %v4248 = vld [vmem:[#allocation2] sm:$0xf]
          %v4249 = vsel %vm2771, %v4248, 0.0
          %4250 = vadd.xlane.f32.xlu0 %v4249
          %v4251 = vpop.xlane.xlu0 %4250
          %vm4252 = vcmp.gt.f32.partialorder %v4248, 0.0
          %v4253 = vmax.f32 %v4248, 1e-30
          %v4254 = vlog2.pop %v4253
          %v4255 = vmul.f32 %v4254, 0.6931472
          %v4256 = vmul.f32 %v4255, 0.2
          %v4257 = vmul.f32 %v4256, 1.442695
          %v4258 = vpow.pop %v4257
          %v4259 = vsel %vm4252, %v4258, 0.0
          %vm4260 = vcmp.gt.f32.partialorder %v4251, 0.0
          %v4261 = vmax.f32 %v4251, 1e-30
          %v4262 = vlog2.pop %v4261
          %v4263 = vmul.f32 %v4262, 0.6931472
          %v4264 = vmul.f32 %v4263, 0.8
          %v4265 = vmul.f32 %v4264, 1.442695
          %v4266 = vpow.pop %v4265
          %v4267 = vsel %vm4260, %v4266, 0.0
          %v4268 = vmul.f32 %v4259, %v4267
          %v4269 = vmax.f32 %v4268, 1.0
          %v4270 = vrcp.pop %v4269
          %v4271 = vmul.f32 1.0, %v4270
          %v4272 = vld [vmem:[#allocation3] sm:$0xf]
          %v4273 = vmul.f32 %v4271, %v4272
          %v4274 = vsel %vm2771, %v4273, 0.0
          %4275 = vadd.xlane.f32.xlu0 %v4274
          %v4276 = vpop.xlane.xlu0 %4275
          %v4277 = vrot.slane %v4276, 4
          %v4278 = vadd.f32 %v4276, %v4277
          %v4279 = vrot.slane %v4278, 2
          %v4280 = vadd.f32 %v4278, %v4279
          %v4281 = vrot.slane %v4280, 1
          %v4282 = vadd.f32 %v4280, %v4281
          %s4283 = vtos %v4282
          %s4284 = ssub.f32 0.0, %s4283
          %s4285 = smul.f32 %s4284, 0.013157895
          %v4286 = vstv %s4285
          %v4287 = vadd.f32 %v4286, 0.0
          %4288 = vst [vmem:[#allocation7] sm:$0x1] %v4287
        $region36: #{tpu_custom_call.1} parent=23 // pred_fallthru
          _
        // Predicated region
        $region37: #{tpu_custom_call.1} parent=23 // pred_check
          %p4289 = pneg %p55
        $region38: #{tpu_custom_call.1} parent=23 // pred_check_branch
          %4291 = sbr.rel (%p4289) target = $region40
        $region39: #{tpu_custom_call.1} parent=23 // pred_region
          %s4293 = ssub.s32 16, 16
          %4294 = vsyncadd [#allocation6], %s4293
          %s4296 = sshll.u32 [#allocation7], 4
          %s4297 = int_to_ptr.vmem [resolvable:$true] %s4296
          %4299 = dma.vmem_to_hbm [thread:$0]  %s4297, 16, %s1, [#allocation6]
        $region40: #{tpu_custom_call.1} parent=23 // pred_fallthru
          _
        // Predicated region
        $region41: #{tpu_custom_call.1} parent=23 // pred_check
          %p4300 = pneg %p55
        $region42: #{tpu_custom_call.1} parent=23 // pred_check_branch
          %4302 = sbr.rel (%p4300) target = $region44
        $region43: #{tpu_custom_call.1} parent=23 // pred_region
          %4303 = dma.done [#allocation6], 16
        $region44: #{tpu_custom_call.1} parent=23 // pred_fallthru
          _
      $region24: #{tpu_custom_call.1} parent=5 // pred_fallthru
        _
      %p4304 = scmp.le.s32.totalorder 2, %s11
      // Predicated region
      $region45: #{tpu_custom_call.1} parent=5 // pred_check
        %p4305 = pneg %p4304
      $region46: #{tpu_custom_call.1} parent=5 // pred_check_branch
        %4307 = sbr.rel (%p4305) target = $region48
      $region47: #{tpu_custom_call.1} parent=5 // pred_region
        %s4308 = ssub.s32 %s11, 2
      $region48: #{tpu_custom_call.1} parent=5 // pred_fallthru
        _
    $region6: #{tpu_custom_call.1} parent=1 // loop_footer
      %s15 = sadd.s32 1, %s11
    $region7: #{tpu_custom_call.1} parent=1 // loop_footer_branch
      %10 = sbr.rel target = $region3
    $region8: #{tpu_custom_call.1} parent=1 // loop_exit
      _
    %4309 = vsyncpa [#allocation5], 1
    %s4310 = scalar_lea.sflag [#allocation5], 1
    %4311 = vsyncpa %s4310, 1
    %4312 = vsyncpa [#allocation6], 1
    %s4313 = scalar_lea.sflag [#allocation6], 1
    %4314 = vsyncpa %s4313, 1

</llo_original>
